<compile_context>
chip_gen: v5e
topology: v5e:2x2
jax: 0.10.0
libtpu: 0.0.40
codegen_flags: <defaults>
</compile_context>

<pallas_src>
import functools
import math

import jax
import jax.numpy as jnp
from jax.experimental import pallas as pl
from jax.experimental.pallas import tpu as pltpu

_VMEM_LIMIT = 64 * 1024 * 1024  # explicit scoped-VMEM cap (fits v5e/v6e/v7x)


def _gelu_tanh(x):
    # tanh-approximation GELU: tanh executes on the EUP slot (VALU stays free).
    return 0.5 * x * (1.0 + jnp.tanh(0.7978845608028654 * (x + 0.044715 * x * x * x)))


# ---------------------------------------------------------------------------
# Kernel A: x + CrossAttention2d(FiLM2d(x, t), cond, mask)      (token-tiled)
# ---------------------------------------------------------------------------
def film_attn_kernel(x_ref, sa_ref, ba_ref, k_ref, v_ref, mask_ref,
                     wq_ref, bq_ref, wo_ref, bo_ref, o_ref, oh_ref,
                     *, n_heads, eps):
    x = x_ref[0].astype(jnp.float32)                  # (Tq, C) residual base
    tq, c = x.shape
    s_pad = k_ref.shape[1]
    dh = c // n_heads
    scale = 1.0 / math.sqrt(dh)

    # FiLM2d: per-pixel channel LayerNorm (f32 stats) + t-conditioned scale/shift.
    mean = jnp.mean(x, axis=-1, keepdims=True)
    var = jnp.mean(jnp.square(x - mean), axis=-1, keepdims=True)
    xn = (x - mean) * jax.lax.rsqrt(var + eps)
    xn = xn * (1.0 + sa_ref[0]) + ba_ref[0]

    # q projection: one big (Tq,C)x(C,C) bf16 matmul, f32 accumulate.
    q = jnp.dot(xn.astype(jnp.bfloat16), wq_ref[...],
                preferred_element_type=jnp.float32) + bq_ref[...]
    q_bf = (q * scale).astype(jnp.bfloat16)           # fold 1/sqrt(dh) once
    k = k_ref[0]                                      # (S_pad, C) bf16
    v = v_ref[0]                                      # (S_pad, C) bf16

    # Hoisted additive-mask broadcast (JAX does not CSE broadcast_in_dim).
    mask_b = jnp.broadcast_to(mask_ref[0], (tq, s_pad))

    for h in range(n_heads):                          # static unroll over heads
        sl = slice(h * dh, (h + 1) * dh)
        s = jax.lax.dot_general(q_bf[:, sl], k[:, sl],
                                (((1,), (1,)), ((), ())),
                                preferred_element_type=jnp.float32)
        s = s + mask_b                                # (Tq, S_pad)
        s = s - jnp.max(s, axis=-1, keepdims=True)
        p = jnp.exp(s)
        inv = pl.reciprocal(jnp.sum(p, axis=-1, keepdims=True), approx=True)
        oh = jnp.dot(p.astype(jnp.bfloat16), v[:, sl],
                     preferred_element_type=jnp.float32) * inv
        oh_ref[:, sl] = oh.astype(oh_ref.dtype)       # concat heads in VMEM scratch

    # Single out-projection over the concatenated heads (K = C, good MXU fill).
    out = jnp.dot(oh_ref[...], wo_ref[...],
                  preferred_element_type=jnp.float32) + bo_ref[...]
    o_ref[0] = (x + out).astype(o_ref.dtype)          # residual, stored bf16


# ---------------------------------------------------------------------------
# Kernel B: depthwise 7x7 conv (padding=3, groups=C), padding fused in-kernel
# ---------------------------------------------------------------------------
def dwconv_kernel(x_ref, w_ref, b_ref, o_ref, xp_ref, *, H, W):
    # Build the zero-padded halo in VMEM scratch (no HBM pad round-trip).
    xp_ref[...] = jnp.zeros(xp_ref.shape, xp_ref.dtype)
    xp_ref[3:3 + H, 3:3 + W, :] = x_ref[0].astype(jnp.float32)

    w = w_ref[...]                                    # (7, 7, C) f32
    C = w.shape[-1]
    acc = jnp.zeros((H, W, C), jnp.float32)
    for j in range(7):
        xpj = xp_ref[:, j:j + W, :]                   # one W-shifted copy per j (7 total)
        for i in range(7):
            acc = acc + xpj[i:i + H] * w[i, j]        # H shift = free major-dim slice
    o_ref[0] = (acc + b_ref[...]).astype(o_ref.dtype)


# ---------------------------------------------------------------------------
# Kernel C: x1 + FFN(FiLM2d(dwconv_out, t))            (token-tiled)
# ---------------------------------------------------------------------------
def film_ffn_kernel(x1_ref, dw_ref, s_ref, b_ref,
                    w1_ref, b1_ref, w2_ref, b2_ref, o_ref, *, eps):
    x1 = x1_ref[0].astype(jnp.float32)                # residual base (Tq, C)
    y = dw_ref[0].astype(jnp.float32)                 # dwconv output  (Tq, C)

    mean = jnp.mean(y, axis=-1, keepdims=True)
    var = jnp.mean(jnp.square(y - mean), axis=-1, keepdims=True)
    yn = (y - mean) * jax.lax.rsqrt(var + eps)
    yn = yn * (1.0 + s_ref[0]) + b_ref[0]

    h = jnp.dot(yn.astype(jnp.bfloat16), w1_ref[...],
                preferred_element_type=jnp.float32) + b1_ref[...]
    h = _gelu_tanh(h)
    f = jnp.dot(h.astype(jnp.bfloat16), w2_ref[...],
                preferred_element_type=jnp.float32) + b2_ref[...]
    # nn.Dropout(p=0.0) is the identity -> omitted.
    o_ref[0] = (x1 + f).astype(o_ref.dtype)


# ---------------------------------------------------------------------------
# pallas_call wrappers
# ---------------------------------------------------------------------------
def _const(shape):
    # Constant block index -> block stays VMEM-resident across all grid steps.
    return pl.BlockSpec(shape, lambda *_: (0,) * len(shape))


def _pick_tile(hw, cap):
    for t in range(min(cap, hw), 7, -1):
        if hw % t == 0 and t % 8 == 0:
            return t
    return hw


def _film_attn(x, sa, ba, k, v, mask, wq, bq, wo, bo, n_heads, eps, tq):
    B, HW, C = x.shape
    S = k.shape[1]
    kern = functools.partial(film_attn_kernel, n_heads=n_heads, eps=eps)
    return pl.pallas_call(
        kern,
        out_shape=jax.ShapeDtypeStruct((B, HW, C), jnp.bfloat16),
        grid=(B, HW // tq),
        in_specs=[
            pl.BlockSpec((1, tq, C), lambda b, i: (b, i, 0)),
            pl.BlockSpec((1, 1, C), lambda b, i: (b, 0, 0)),
            pl.BlockSpec((1, 1, C), lambda b, i: (b, 0, 0)),
            pl.BlockSpec((1, S, C), lambda b, i: (b, 0, 0)),
            pl.BlockSpec((1, S, C), lambda b, i: (b, 0, 0)),
            pl.BlockSpec((1, 1, S), lambda b, i: (b, 0, 0)),
            _const((C, C)), _const((1, C)),
            _const((C, C)), _const((1, C)),
        ],
        out_specs=pl.BlockSpec((1, tq, C), lambda b, i: (b, i, 0)),
        scratch_shapes=[pltpu.VMEM((tq, C), jnp.bfloat16)],
        compiler_params=pltpu.CompilerParams(
            dimension_semantics=("parallel", "parallel"),
            vmem_limit_bytes=_VMEM_LIMIT),
    )(x, sa, ba, k, v, mask, wq, bq, wo, bo)


def _dwconv(x_sp, w, b):
    B, H, W, C = x_sp.shape
    kern = functools.partial(dwconv_kernel, H=H, W=W)
    return pl.pallas_call(
        kern,
        out_shape=jax.ShapeDtypeStruct((B, H, W, C), jnp.bfloat16),
        grid=(B,),
        in_specs=[
            pl.BlockSpec((1, H, W, C), lambda b: (b, 0, 0, 0)),
            _const((7, 7, C)),
            _const((1, C)),
        ],
        out_specs=pl.BlockSpec((1, H, W, C), lambda b: (b, 0, 0, 0)),
        scratch_shapes=[pltpu.VMEM((H + 6, W + 6, C), jnp.float32)],
        compiler_params=pltpu.CompilerParams(
            dimension_semantics=("parallel",),
            vmem_limit_bytes=_VMEM_LIMIT),
    )(x_sp, w, b)


def _film_ffn(x1, dw, sb, bb, w1, b1, w2, b2, eps, tq):
    B, HW, C = x1.shape
    Hd = w1.shape[1]
    kern = functools.partial(film_ffn_kernel, eps=eps)
    return pl.pallas_call(
        kern,
        out_shape=jax.ShapeDtypeStruct((B, HW, C), jnp.float32),
        grid=(B, HW // tq),
        in_specs=[
            pl.BlockSpec((1, tq, C), lambda b, i: (b, i, 0)),
            pl.BlockSpec((1, tq, C), lambda b, i: (b, i, 0)),
            pl.BlockSpec((1, 1, C), lambda b, i: (b, 0, 0)),
            pl.BlockSpec((1, 1, C), lambda b, i: (b, 0, 0)),
            _const((C, Hd)), _const((1, Hd)),
            _const((Hd, C)), _const((1, C)),
        ],
        out_specs=pl.BlockSpec((1, tq, C), lambda b, i: (b, i, 0)),
        compiler_params=pltpu.CompilerParams(
            dimension_semantics=("parallel", "parallel"),
            vmem_limit_bytes=_VMEM_LIMIT),
    )(x1, dw, sb, bb, w1, b1, w2, b2)


# ---------------------------------------------------------------------------
# full forward pass: x + attn(attn_norm(x,t), cond, mask), then FiLMBlock
# ---------------------------------------------------------------------------
def cross_attention_film_block(x_nchw, t, cond, attention_mask, params,
                               *, n_heads, eps=1e-6, tq_max=256):
    B, C, H, W = x_nchw.shape
    HW = H * W
    tq = _pick_tile(HW, tq_max)
    bf = lambda a: a.astype(jnp.bfloat16)

    # NCHW -> (B, HW, C) bf16 (activations carried as bf16 in HBM).
    x = bf(jnp.transpose(x_nchw, (0, 2, 3, 1)).reshape(B, HW, C))

    # FiLM modulation params from t (tiny matmuls -> plain JAX glue).
    ga = t @ params["attn_film_w"] + params["attn_film_b"]       # (B, 2C)
    sa, ba = ga[:, :C].reshape(B, 1, C), ga[:, C:].reshape(B, 1, C)
    gb = t @ params["blk_film_w"] + params["blk_film_b"]
    sb, bb = gb[:, :C].reshape(B, 1, C), gb[:, C:].reshape(B, 1, C)

    # k/v projections of cond: computed once per batch element here (would be
    # recomputed once per token tile inside kernel A otherwise).  Keys padded
    # to a multiple of 128 for lane-dense (Tq, S) score tiles; padded keys are
    # masked with -1e9 (zero k/v rows contribute exactly nothing).
    S = cond.shape[1]
    S_pad = ((S + 127) // 128) * 128
    k = bf(cond @ params["wk"] + params["bk"])
    v = bf(cond @ params["wv"] + params["bv"])
    k = jnp.pad(k, ((0, 0), (0, S_pad - S), (0, 0)))
    v = jnp.pad(v, ((0, 0), (0, S_pad - S), (0, 0)))
    if attention_mask is None:
        keep = jnp.ones((B, S), jnp.float32)
    else:
        keep = attention_mask.astype(jnp.float32)
    keep = jnp.pad(keep, ((0, 0), (0, S_pad - S)))
    add_mask = ((1.0 - keep) * -1e9).reshape(B, 1, S_pad)

    # kernel A: x1 = x + attn(attn_norm(x, t), cond, mask)
    x1 = _film_attn(x, sa, ba, k, v, add_mask,
                    bf(params["wq"]), params["bq"],
                    bf(params["wo"]), params["bo"],
                    n_heads, eps, tq)

    # kernel B: depthwise 7x7 conv (padding handled inside the kernel).
    dw = _dwconv(x1.reshape(B, H, W, C), params["dw_w"], params["dw_b"])
    dw = dw.reshape(B, HW, C)

    # kernel C: out = x1 + ffn(norm(dw, t))
    out = _film_ffn(x1, dw, sb, bb,
                    bf(params["w1"]), params["b1"],
                    bf(params["w2"]), params["b2"],
                    eps, tq)

    return jnp.transpose(out.reshape(B, H, W, C), (0, 3, 1, 2))   # back to NCHW, f32


# ---------------------------------------------------------------------------
# deterministic parameter init (PyTorch-style U(-1/sqrt(fan_in), 1/sqrt(fan_in)))
# ---------------------------------------------------------------------------
def init_params(key, d_model, d_cond, d_t, hidden):
    C = d_model
    keys = iter(jax.random.split(key, 24))

    def u(fan_in, shape):
        lim = 1.0 / math.sqrt(fan_in)
        return jax.random.uniform(next(keys), shape, jnp.float32, -lim, lim)

    return {
        # FiLM2d projections: Linear(d_t, 2*d_model) -> (scale, shift)
        "attn_film_w": u(d_t, (d_t, 2 * C)), "attn_film_b": u(d_t, (2 * C,)),
        "blk_film_w": u(d_t, (d_t, 2 * C)), "blk_film_b": u(d_t, (2 * C,)),
        # CrossAttention2d: q (1x1 conv), k/v (linear from cond), out (1x1 conv)
        "wq": u(C, (C, C)), "bq": u(C, (1, C)),
        "wk": u(d_cond, (d_cond, C)), "bk": u(d_cond, (1, C)),
        "wv": u(d_cond, (d_cond, C)), "bv": u(d_cond, (1, C)),
        "wo": u(C, (C, C)), "bo": u(C, (1, C)),
        # FiLMBlock.dwconv: depthwise 7x7 weight stored as (7,7,C), bias (1,C)
        "dw_w": u(49, (7, 7, C)), "dw_b": u(49, (1, C)),
        # FiLMBlock.ffn: 1x1 conv (C->hidden), GELU, 1x1 conv (hidden->C)
        "w1": u(C, (C, hidden)), "b1": u(C, (1, hidden)),
        "w2": u(hidden, (hidden, C)), "b2": u(hidden, (1, C)),
    }


if __name__ == "__main__":
    key = jax.random.PRNGKey(0)
    B, d_model, H, W = 2, 128, 16, 16          # C=128 keeps the lane dim dense
    d_cond, n_heads, d_t, S = 64, 4, 32, 10
    hidden = 4 * d_model

    kx, kt, kc, kp = jax.random.split(key, 4)
    x = jax.random.normal(kx, (B, d_model, H, W), jnp.float32)    # NCHW like PyTorch
    t = jax.random.normal(kt, (B, d_t), jnp.float32)
    cond = jax.random.normal(kc, (B, S, d_cond), jnp.float32)
    attention_mask = jnp.concatenate(                              # 1 = keep
        [jnp.ones((B, 7), jnp.float32), jnp.zeros((B, S - 7), jnp.float32)], axis=1)

    params = init_params(kp, d_model, d_cond, d_t, hidden)

    out = cross_attention_film_block(x, t, cond, attention_mask, params,
                                     n_heads=n_heads, eps=1e-6, tq_max=128)
    jax.block_until_ready(out)
    assert out.shape == (B, d_model, H, W) and out.dtype == jnp.float32
    print("KERNEL_OK")
</pallas_src>

<mosaic_0001>
module attributes {stable_mosaic.version = 11 : i64} {
  func.func @film_attn_kernel(%arg0: i32, %arg1: i32, %arg2: memref<1x128x128xbf16, #tpu.memory_space<vmem>>, %arg3: memref<1x1x128xf32, #tpu.memory_space<vmem>>, %arg4: memref<1x1x128xf32, #tpu.memory_space<vmem>>, %arg5: memref<1x128x128xbf16, #tpu.memory_space<vmem>>, %arg6: memref<1x128x128xbf16, #tpu.memory_space<vmem>>, %arg7: memref<1x1x128xf32, #tpu.memory_space<vmem>>, %arg8: memref<128x128xbf16, #tpu.memory_space<vmem>>, %arg9: memref<1x128xf32, #tpu.memory_space<vmem>>, %arg10: memref<128x128xbf16, #tpu.memory_space<vmem>>, %arg11: memref<1x128xf32, #tpu.memory_space<vmem>>, %arg12: memref<1x128x128xbf16, #tpu.memory_space<vmem>>, %arg13: memref<128x128xbf16, #tpu.memory_space<vmem>>) attributes {dimension_semantics = [#tpu.dimension_semantics<parallel>, #tpu.dimension_semantics<parallel>], iteration_bounds = array<i64: 2, 2>, scalar_prefetch = 0 : i64, scratch_operands = 1 : i64, tpu.core_type = #tpu.core_type<tc>, window_params = [{transform_indices = @transform_0, window_bounds = array<i64: 1, 128, 128>}, {transform_indices = @transform_1, window_bounds = array<i64: 1, 1, 128>}, {transform_indices = @transform_2, window_bounds = array<i64: 1, 1, 128>}, {transform_indices = @transform_3, window_bounds = array<i64: 1, 128, 128>}, {transform_indices = @transform_4, window_bounds = array<i64: 1, 128, 128>}, {transform_indices = @transform_5, window_bounds = array<i64: 1, 1, 128>}, {pipeline_mode = #tpu.pipeline_mode<synchronous>, transform_indices = @transform_6, window_bounds = array<i64: 128, 128>}, {pipeline_mode = #tpu.pipeline_mode<synchronous>, transform_indices = @transform_7, window_bounds = array<i64: 1, 128>}, {pipeline_mode = #tpu.pipeline_mode<synchronous>, transform_indices = @transform_8, window_bounds = array<i64: 128, 128>}, {pipeline_mode = #tpu.pipeline_mode<synchronous>, transform_indices = @transform_9, window_bounds = array<i64: 1, 128>}, {transform_indices = @transform_10, window_bounds = array<i64: 1, 128, 128>}]} {
    %c0 = arith.constant 0 : index
    %c0_0 = arith.constant 0 : index
    %c0_1 = arith.constant 0 : index
    %0 = vector.load %arg2[%c0, %c0_0, %c0_1] : memref<1x128x128xbf16, #tpu.memory_space<vmem>>, vector<1x128x128xbf16>
    %1 = vector.shape_cast %0 : vector<1x128x128xbf16> to vector<128x128xbf16>
    %2 = arith.extf %1 : vector<128x128xbf16> to vector<128x128xf32>
    %cst = arith.constant dense<0.000000e+00> : vector<128xf32>
    %3 = vector.multi_reduction <add>, %2, %cst [1] : vector<128x128xf32> to vector<128xf32>
    %4 = vector.shape_cast %3 : vector<128xf32> to vector<128x1xf32>
    %cst_2 = arith.constant 1.280000e+02 : f32
    %5 = vector.broadcast %cst_2 : f32 to vector<128x1xf32>
    %6 = arith.divf %4, %5 : vector<128x1xf32>
    %7 = vector.broadcast %6 : vector<128x1xf32> to vector<128x128xf32>
    %8 = arith.subf %2, %7 : vector<128x128xf32>
    %9 = arith.mulf %8, %8 : vector<128x128xf32>
    %cst_3 = arith.constant dense<0.000000e+00> : vector<128xf32>
    %10 = vector.multi_reduction <add>, %9, %cst_3 [1] : vector<128x128xf32> to vector<128xf32>
    %11 = vector.shape_cast %10 : vector<128xf32> to vector<128x1xf32>
    %cst_4 = arith.constant 1.280000e+02 : f32
    %12 = vector.broadcast %cst_4 : f32 to vector<128x1xf32>
    %13 = arith.divf %11, %12 : vector<128x1xf32>
    %14 = vector.broadcast %6 : vector<128x1xf32> to vector<128x128xf32>
    %15 = arith.subf %2, %14 : vector<128x128xf32>
    %cst_5 = arith.constant 9.99999997E-7 : f32
    %16 = vector.broadcast %cst_5 : f32 to vector<128x1xf32>
    %17 = arith.addf %13, %16 : vector<128x1xf32>
    %18 = math.rsqrt %17 : vector<128x1xf32>
    %19 = vector.broadcast %18 : vector<128x1xf32> to vector<128x128xf32>
    %20 = arith.mulf %15, %19 : vector<128x128xf32>
    %c0_6 = arith.constant 0 : index
    %c0_7 = arith.constant 0 : index
    %c0_8 = arith.constant 0 : index
    %21 = vector.load %arg3[%c0_6, %c0_7, %c0_8] : memref<1x1x128xf32, #tpu.memory_space<vmem>>, vector<1x1x128xf32>
    %22 = vector.shape_cast %21 : vector<1x1x128xf32> to vector<1x128xf32>
    %cst_9 = arith.constant 1.000000e+00 : f32
    %23 = vector.broadcast %cst_9 : f32 to vector<1x128xf32>
    %24 = arith.addf %23, %22 : vector<1x128xf32>
    %25 = vector.broadcast %24 : vector<1x128xf32> to vector<128x128xf32>
    %26 = arith.mulf %20, %25 : vector<128x128xf32>
    %c0_10 = arith.constant 0 : index
    %c0_11 = arith.constant 0 : index
    %c0_12 = arith.constant 0 : index
    %27 = vector.load %arg4[%c0_10, %c0_11, %c0_12] : memref<1x1x128xf32, #tpu.memory_space<vmem>>, vector<1x1x128xf32>
    %28 = vector.shape_cast %27 : vector<1x1x128xf32> to vector<1x128xf32>
    %29 = vector.broadcast %28 : vector<1x128xf32> to vector<128x128xf32>
    %30 = arith.addf %26, %29 : vector<128x128xf32>
    %31 = arith.truncf %30 : vector<128x128xf32> to vector<128x128xbf16>
    %c0_13 = arith.constant 0 : index
    %c0_14 = arith.constant 0 : index
    %32 = vector.load %arg8[%c0_13, %c0_14] : memref<128x128xbf16, #tpu.memory_space<vmem>>, vector<128x128xbf16>
    %cst_15 = arith.constant dense<0.000000e+00> : vector<128x128xf32>
    %33 = tpu.matmul %31, %32, %cst_15 {dimension_numbers = #tpu.dot_dimension_numbers<[1], [0], [0], [1], [0, 0, 1, 1], [], []>} : vector<128x128xbf16>, vector<128x128xbf16>, vector<128x128xf32> -> vector<128x128xf32>
    %c0_16 = arith.constant 0 : index
    %c0_17 = arith.constant 0 : index
    %34 = vector.load %arg9[%c0_16, %c0_17] : memref<1x128xf32, #tpu.memory_space<vmem>>, vector<1x128xf32>
    %35 = vector.broadcast %34 : vector<1x128xf32> to vector<128x128xf32>
    %36 = arith.addf %33, %35 : vector<128x128xf32>
    %cst_18 = arith.constant 0.176776692 : f32
    %37 = vector.broadcast %cst_18 : f32 to vector<128x128xf32>
    %38 = arith.mulf %36, %37 : vector<128x128xf32>
    %39 = arith.truncf %38 : vector<128x128xf32> to vector<128x128xbf16>
    %c0_19 = arith.constant 0 : index
    %c0_20 = arith.constant 0 : index
    %c0_21 = arith.constant 0 : index
    %40 = vector.load %arg5[%c0_19, %c0_20, %c0_21] : memref<1x128x128xbf16, #tpu.memory_space<vmem>>, vector<1x128x128xbf16>
    %41 = vector.shape_cast %40 : vector<1x128x128xbf16> to vector<128x128xbf16>
    %c0_22 = arith.constant 0 : index
    %c0_23 = arith.constant 0 : index
    %c0_24 = arith.constant 0 : index
    %42 = vector.load %arg6[%c0_22, %c0_23, %c0_24] : memref<1x128x128xbf16, #tpu.memory_space<vmem>>, vector<1x128x128xbf16>
    %43 = vector.shape_cast %42 : vector<1x128x128xbf16> to vector<128x128xbf16>
    %c0_25 = arith.constant 0 : index
    %c0_26 = arith.constant 0 : index
    %c0_27 = arith.constant 0 : index
    %44 = vector.load %arg7[%c0_25, %c0_26, %c0_27] : memref<1x1x128xf32, #tpu.memory_space<vmem>>, vector<1x1x128xf32>
    %45 = vector.shape_cast %44 : vector<1x1x128xf32> to vector<1x128xf32>
    %46 = vector.shape_cast %45 : vector<1x128xf32> to vector<1x128xf32>
    %47 = vector.broadcast %46 : vector<1x128xf32> to vector<128x128xf32>
    %48 = vector.extract_strided_slice %39 {offsets = [0, 0], sizes = [128, 32], strides = [1, 1]} : vector<128x128xbf16> to vector<128x32xbf16>
    %49 = vector.extract_strided_slice %41 {offsets = [0, 0], sizes = [128, 32], strides = [1, 1]} : vector<128x128xbf16> to vector<128x32xbf16>
    %cst_28 = arith.constant dense<0.000000e+00> : vector<128x128xf32>
    %50 = tpu.matmul %48, %49, %cst_28 {dimension_numbers = #tpu.dot_dimension_numbers<[1], [1], [0], [0], [0, 0, 1, 0], [], []>} : vector<128x32xbf16>, vector<128x32xbf16>, vector<128x128xf32> -> vector<128x128xf32>
    %51 = arith.addf %50, %47 : vector<128x128xf32>
    %cst_29 = arith.constant dense<0xFF800000> : vector<128xf32>
    %52 = vector.multi_reduction <maximumf>, %51, %cst_29 [1] : vector<128x128xf32> to vector<128xf32>
    %53 = vector.shape_cast %52 : vector<128xf32> to vector<128x1xf32>
    %54 = vector.broadcast %53 : vector<128x1xf32> to vector<128x128xf32>
    %55 = arith.subf %51, %54 : vector<128x128xf32>
    %56 = math.exp %55 : vector<128x128xf32>
    %cst_30 = arith.constant dense<0.000000e+00> : vector<128xf32>
    %57 = vector.multi_reduction <add>, %56, %cst_30 [1] : vector<128x128xf32> to vector<128xf32>
    %58 = vector.shape_cast %57 : vector<128xf32> to vector<128x1xf32>
    %59 = tpu.reciprocal %58 {approx = true} : vector<128x1xf32> -> vector<128x1xf32>
    %60 = arith.truncf %56 : vector<128x128xf32> to vector<128x128xbf16>
    %61 = vector.extract_strided_slice %43 {offsets = [0, 0], sizes = [128, 32], strides = [1, 1]} : vector<128x128xbf16> to vector<128x32xbf16>
    %cst_31 = arith.constant dense<0.000000e+00> : vector<128x32xf32>
    %62 = tpu.matmul %60, %61, %cst_31 {dimension_numbers = #tpu.dot_dimension_numbers<[1], [0], [0], [1], [0, 0, 1, 1], [], []>} : vector<128x128xbf16>, vector<128x32xbf16>, vector<128x32xf32> -> vector<128x32xf32>
    %63 = vector.broadcast %59 : vector<128x1xf32> to vector<128x32xf32>
    %64 = arith.mulf %62, %63 : vector<128x32xf32>
    %65 = arith.truncf %64 : vector<128x32xf32> to vector<128x32xbf16>
    %c0_32 = arith.constant 0 : index
    %c0_33 = arith.constant 0 : index
    %66 = vector.load %arg13[%c0_32, %c0_33] : memref<128x128xbf16, #tpu.memory_space<vmem>>, vector<128x32xbf16>
    tpu.vector_store %arg13[%c0_32, %c0_33], %65 {strides = array<i32>} : memref<128x128xbf16, #tpu.memory_space<vmem>>, vector<128x32xbf16>,
    %67 = vector.extract_strided_slice %39 {offsets = [0, 32], sizes = [128, 32], strides = [1, 1]} : vector<128x128xbf16> to vector<128x32xbf16>
    %68 = vector.extract_strided_slice %41 {offsets = [0, 32], sizes = [128, 32], strides = [1, 1]} : vector<128x128xbf16> to vector<128x32xbf16>
    %cst_34 = arith.constant dense<0.000000e+00> : vector<128x128xf32>
    %69 = tpu.matmul %67, %68, %cst_34 {dimension_numbers = #tpu.dot_dimension_numbers<[1], [1], [0], [0], [0, 0, 1, 0], [], []>} : vector<128x32xbf16>, vector<128x32xbf16>, vector<128x128xf32> -> vector<128x128xf32>
    %70 = arith.addf %69, %47 : vector<128x128xf32>
    %cst_35 = arith.constant dense<0xFF800000> : vector<128xf32>
    %71 = vector.multi_reduction <maximumf>, %70, %cst_35 [1] : vector<128x128xf32> to vector<128xf32>
    %72 = vector.shape_cast %71 : vector<128xf32> to vector<128x1xf32>
    %73 = vector.broadcast %72 : vector<128x1xf32> to vector<128x128xf32>
    %74 = arith.subf %70, %73 : vector<128x128xf32>
    %75 = math.exp %74 : vector<128x128xf32>
    %cst_36 = arith.constant dense<0.000000e+00> : vector<128xf32>
    %76 = vector.multi_reduction <add>, %75, %cst_36 [1] : vector<128x128xf32> to vector<128xf32>
    %77 = vector.shape_cast %76 : vector<128xf32> to vector<128x1xf32>
    %78 = tpu.reciprocal %77 {approx = true} : vector<128x1xf32> -> vector<128x1xf32>
    %79 = arith.truncf %75 : vector<128x128xf32> to vector<128x128xbf16>
    %80 = vector.extract_strided_slice %43 {offsets = [0, 32], sizes = [128, 32], strides = [1, 1]} : vector<128x128xbf16> to vector<128x32xbf16>
    %cst_37 = arith.constant dense<0.000000e+00> : vector<128x32xf32>
    %81 = tpu.matmul %79, %80, %cst_37 {dimension_numbers = #tpu.dot_dimension_numbers<[1], [0], [0], [1], [0, 0, 1, 1], [], []>} : vector<128x128xbf16>, vector<128x32xbf16>, vector<128x32xf32> -> vector<128x32xf32>
    %82 = vector.broadcast %78 : vector<128x1xf32> to vector<128x32xf32>
    %83 = arith.mulf %81, %82 : vector<128x32xf32>
    %84 = arith.truncf %83 : vector<128x32xf32> to vector<128x32xbf16>
    %c0_38 = arith.constant 0 : index
    %c32 = arith.constant 32 : index
    %85 = vector.load %arg13[%c0_38, %c32] : memref<128x128xbf16, #tpu.memory_space<vmem>>, vector<128x32xbf16>
    tpu.vector_store %arg13[%c0_38, %c32], %84 {strides = array<i32>} : memref<128x128xbf16, #tpu.memory_space<vmem>>, vector<128x32xbf16>,
    %86 = vector.extract_strided_slice %39 {offsets = [0, 64], sizes = [128, 32], strides = [1, 1]} : vector<128x128xbf16> to vector<128x32xbf16>
    %87 = vector.extract_strided_slice %41 {offsets = [0, 64], sizes = [128, 32], strides = [1, 1]} : vector<128x128xbf16> to vector<128x32xbf16>
    %cst_39 = arith.constant dense<0.000000e+00> : vector<128x128xf32>
    %88 = tpu.matmul %86, %87, %cst_39 {dimension_numbers = #tpu.dot_dimension_numbers<[1], [1], [0], [0], [0, 0, 1, 0], [], []>} : vector<128x32xbf16>, vector<128x32xbf16>, vector<128x128xf32> -> vector<128x128xf32>
    %89 = arith.addf %88, %47 : vector<128x128xf32>
    %cst_40 = arith.constant dense<0xFF800000> : vector<128xf32>
    %90 = vector.multi_reduction <maximumf>, %89, %cst_40 [1] : vector<128x128xf32> to vector<128xf32>
    %91 = vector.shape_cast %90 : vector<128xf32> to vector<128x1xf32>
    %92 = vector.broadcast %91 : vector<128x1xf32> to vector<128x128xf32>
    %93 = arith.subf %89, %92 : vector<128x128xf32>
    %94 = math.exp %93 : vector<128x128xf32>
    %cst_41 = arith.constant dense<0.000000e+00> : vector<128xf32>
    %95 = vector.multi_reduction <add>, %94, %cst_41 [1] : vector<128x128xf32> to vector<128xf32>
    %96 = vector.shape_cast %95 : vector<128xf32> to vector<128x1xf32>
    %97 = tpu.reciprocal %96 {approx = true} : vector<128x1xf32> -> vector<128x1xf32>
    %98 = arith.truncf %94 : vector<128x128xf32> to vector<128x128xbf16>
    %99 = vector.extract_strided_slice %43 {offsets = [0, 64], sizes = [128, 32], strides = [1, 1]} : vector<128x128xbf16> to vector<128x32xbf16>
    %cst_42 = arith.constant dense<0.000000e+00> : vector<128x32xf32>
    %100 = tpu.matmul %98, %99, %cst_42 {dimension_numbers = #tpu.dot_dimension_numbers<[1], [0], [0], [1], [0, 0, 1, 1], [], []>} : vector<128x128xbf16>, vector<128x32xbf16>, vector<128x32xf32> -> vector<128x32xf32>
    %101 = vector.broadcast %97 : vector<128x1xf32> to vector<128x32xf32>
    %102 = arith.mulf %100, %101 : vector<128x32xf32>
    %103 = arith.truncf %102 : vector<128x32xf32> to vector<128x32xbf16>
    %c0_43 = arith.constant 0 : index
    %c64 = arith.constant 64 : index
    %104 = vector.load %arg13[%c0_43, %c64] : memref<128x128xbf16, #tpu.memory_space<vmem>>, vector<128x32xbf16>
    tpu.vector_store %arg13[%c0_43, %c64], %103 {strides = array<i32>} : memref<128x128xbf16, #tpu.memory_space<vmem>>, vector<128x32xbf16>,
    %105 = vector.extract_strided_slice %39 {offsets = [0, 96], sizes = [128, 32], strides = [1, 1]} : vector<128x128xbf16> to vector<128x32xbf16>
    %106 = vector.extract_strided_slice %41 {offsets = [0, 96], sizes = [128, 32], strides = [1, 1]} : vector<128x128xbf16> to vector<128x32xbf16>
    %cst_44 = arith.constant dense<0.000000e+00> : vector<128x128xf32>
    %107 = tpu.matmul %105, %106, %cst_44 {dimension_numbers = #tpu.dot_dimension_numbers<[1], [1], [0], [0], [0, 0, 1, 0], [], []>} : vector<128x32xbf16>, vector<128x32xbf16>, vector<128x128xf32> -> vector<128x128xf32>
    %108 = arith.addf %107, %47 : vector<128x128xf32>
    %cst_45 = arith.constant dense<0xFF800000> : vector<128xf32>
    %109 = vector.multi_reduction <maximumf>, %108, %cst_45 [1] : vector<128x128xf32> to vector<128xf32>
    %110 = vector.shape_cast %109 : vector<128xf32> to vector<128x1xf32>
    %111 = vector.broadcast %110 : vector<128x1xf32> to vector<128x128xf32>
    %112 = arith.subf %108, %111 : vector<128x128xf32>
    %113 = math.exp %112 : vector<128x128xf32>
    %cst_46 = arith.constant dense<0.000000e+00> : vector<128xf32>
    %114 = vector.multi_reduction <add>, %113, %cst_46 [1] : vector<128x128xf32> to vector<128xf32>
    %115 = vector.shape_cast %114 : vector<128xf32> to vector<128x1xf32>
    %116 = tpu.reciprocal %115 {approx = true} : vector<128x1xf32> -> vector<128x1xf32>
    %117 = arith.truncf %113 : vector<128x128xf32> to vector<128x128xbf16>
    %118 = vector.extract_strided_slice %43 {offsets = [0, 96], sizes = [128, 32], strides = [1, 1]} : vector<128x128xbf16> to vector<128x32xbf16>
    %cst_47 = arith.constant dense<0.000000e+00> : vector<128x32xf32>
    %119 = tpu.matmul %117, %118, %cst_47 {dimension_numbers = #tpu.dot_dimension_numbers<[1], [0], [0], [1], [0, 0, 1, 1], [], []>} : vector<128x128xbf16>, vector<128x32xbf16>, vector<128x32xf32> -> vector<128x32xf32>
    %120 = vector.broadcast %116 : vector<128x1xf32> to vector<128x32xf32>
    %121 = arith.mulf %119, %120 : vector<128x32xf32>
    %122 = arith.truncf %121 : vector<128x32xf32> to vector<128x32xbf16>
    %c0_48 = arith.constant 0 : index
    %c96 = arith.constant 96 : index
    %123 = vector.load %arg13[%c0_48, %c96] : memref<128x128xbf16, #tpu.memory_space<vmem>>, vector<128x32xbf16>
    tpu.vector_store %arg13[%c0_48, %c96], %122 {strides = array<i32>} : memref<128x128xbf16, #tpu.memory_space<vmem>>, vector<128x32xbf16>,
    %c0_49 = arith.constant 0 : index
    %c0_50 = arith.constant 0 : index
    %124 = vector.load %arg13[%c0_49, %c0_50] : memref<128x128xbf16, #tpu.memory_space<vmem>>, vector<128x128xbf16>
    %c0_51 = arith.constant 0 : index
    %c0_52 = arith.constant 0 : index
    %125 = vector.load %arg10[%c0_51, %c0_52] : memref<128x128xbf16, #tpu.memory_space<vmem>>, vector<128x128xbf16>
    %cst_53 = arith.constant dense<0.000000e+00> : vector<128x128xf32>
    %126 = tpu.matmul %124, %125, %cst_53 {dimension_numbers = #tpu.dot_dimension_numbers<[1], [0], [0], [1], [0, 0, 1, 1], [], []>} : vector<128x128xbf16>, vector<128x128xbf16>, vector<128x128xf32> -> vector<128x128xf32>
    %c0_54 = arith.constant 0 : index
    %c0_55 = arith.constant 0 : index
    %127 = vector.load %arg11[%c0_54, %c0_55] : memref<1x128xf32, #tpu.memory_space<vmem>>, vector<1x128xf32>
    %128 = vector.broadcast %127 : vector<1x128xf32> to vector<128x128xf32>
    %129 = arith.addf %126, %128 : vector<128x128xf32>
    %130 = arith.addf %2, %129 : vector<128x128xf32>
    %131 = arith.truncf %130 : vector<128x128xf32> to vector<128x128xbf16>
    %c0_56 = arith.constant 0 : index
    %c0_57 = arith.constant 0 : index
    %c0_58 = arith.constant 0 : index
    %132 = vector.load %arg12[%c0_56, %c0_57, %c0_58] : memref<1x128x128xbf16, #tpu.memory_space<vmem>>, vector<1x128x128xbf16>
    %133 = vector.shape_cast %132 : vector<1x128x128xbf16> to vector<128x128xbf16>
    %134 = vector.shape_cast %131 : vector<128x128xbf16> to vector<1x128x128xbf16>
    tpu.vector_store %arg12[%c0_56, %c0_57, %c0_58], %134 {strides = array<i32>} : memref<1x128x128xbf16, #tpu.memory_space<vmem>>, vector<1x128x128xbf16>,
    return
  }
  func.func @transform_0(%arg0: i32, %arg1: i32) -> (i32, i32, i32) {
    %c0_i32 = arith.constant 0 : i32
    %c0_i32_0 = arith.constant 0 : i32
    return %arg0, %arg1, %c0_i32 : i32, i32, i32
  }
  func.func @transform_1(%arg0: i32, %arg1: i32) -> (i32, i32, i32) {
    %c0_i32 = arith.constant 0 : i32
    %c0_i32_0 = arith.constant 0 : i32
    %c0_i32_1 = arith.constant 0 : i32
    return %arg0, %c0_i32, %c0_i32_0 : i32, i32, i32
  }
  func.func @transform_2(%arg0: i32, %arg1: i32) -> (i32, i32, i32) {
    %c0_i32 = arith.constant 0 : i32
    %c0_i32_0 = arith.constant 0 : i32
    %c0_i32_1 = arith.constant 0 : i32
    return %arg0, %c0_i32, %c0_i32_0 : i32, i32, i32
  }
  func.func @transform_3(%arg0: i32, %arg1: i32) -> (i32, i32, i32) {
    %c0_i32 = arith.constant 0 : i32
    %c0_i32_0 = arith.constant 0 : i32
    %c0_i32_1 = arith.constant 0 : i32
    return %arg0, %c0_i32, %c0_i32_0 : i32, i32, i32
  }
  func.func @transform_4(%arg0: i32, %arg1: i32) -> (i32, i32, i32) {
    %c0_i32 = arith.constant 0 : i32
    %c0_i32_0 = arith.constant 0 : i32
    %c0_i32_1 = arith.constant 0 : i32
    return %arg0, %c0_i32, %c0_i32_0 : i32, i32, i32
  }
  func.func @transform_5(%arg0: i32, %arg1: i32) -> (i32, i32, i32) {
    %c0_i32 = arith.constant 0 : i32
    %c0_i32_0 = arith.constant 0 : i32
    %c0_i32_1 = arith.constant 0 : i32
    return %arg0, %c0_i32, %c0_i32_0 : i32, i32, i32
  }
  func.func @transform_6(%arg0: i32, %arg1: i32) -> (i32, i32) {
    %c0_i32 = arith.constant 0 : i32
    %c0_i32_0 = arith.constant 0 : i32
    %c0_i32_1 = arith.constant 0 : i32
    return %c0_i32, %c0_i32_0 : i32, i32
  }
  func.func @transform_7(%arg0: i32, %arg1: i32) -> (i32, i32) {
    %c0_i32 = arith.constant 0 : i32
    %c0_i32_0 = arith.constant 0 : i32
    %c0_i32_1 = arith.constant 0 : i32
    return %c0_i32, %c0_i32_0 : i32, i32
  }
  func.func @transform_8(%arg0: i32, %arg1: i32) -> (i32, i32) {
    %c0_i32 = arith.constant 0 : i32
    %c0_i32_0 = arith.constant 0 : i32
    %c0_i32_1 = arith.constant 0 : i32
    return %c0_i32, %c0_i32_0 : i32, i32
  }
  func.func @transform_9(%arg0: i32, %arg1: i32) -> (i32, i32) {
    %c0_i32 = arith.constant 0 : i32
    %c0_i32_0 = arith.constant 0 : i32
    %c0_i32_1 = arith.constant 0 : i32
    return %c0_i32, %c0_i32_0 : i32, i32
  }
  func.func @transform_10(%arg0: i32, %arg1: i32) -> (i32, i32, i32) {
    %c0_i32 = arith.constant 0 : i32
    %c0_i32_0 = arith.constant 0 : i32
    return %arg0, %arg1, %c0_i32 : i32, i32, i32
  }
}

</mosaic_0001>

<llo_original>
// kernel: tpu_custom_call.1
$region0: #{tpu_custom_call.1}
  #allocation0 [shape = 'u32[]', space=smem, size = 0x4, offset = 0x4, fixed_abs, tag = 'smem constant byte address 0x4 - core index']
  #allocation1 [shape = 'u32[72,128]{1,0:T(1,128)}', space=vmem, size = 0x9000, scoped, tag = 'internal scratch']
  #allocation2 [shape = 'bf16[128,128]{1,0:T(8,128)(2,1)}', space=vmem, size = 0x8000, scoped, tag = 'scratch operand']
  %s0 = inlined_call_operand.hbm [shape: bf16[2,256,128], index: 0, kind: input, shape index: {}]
  %s1 = inlined_call_operand.hbm [shape: f32[2,1,128], index: 1, kind: input, shape index: {}]
  %s2 = inlined_call_operand.hbm [shape: f32[2,1,128], index: 2, kind: input, shape index: {}]
  %s3 = inlined_call_operand.hbm [shape: bf16[2,128,128], index: 3, kind: input, shape index: {}]
  %s4 = inlined_call_operand.hbm [shape: bf16[2,128,128], index: 4, kind: input, shape index: {}]
  %s5 = inlined_call_operand.vmem [shape: f32[2,1,128], index: 5, kind: input, shape index: {}]
  %s6 = inlined_call_operand.hbm [shape: bf16[128,128], index: 6, kind: input, shape index: {}]
  %s7 = inlined_call_operand.vmem [shape: f32[1,128], index: 7, kind: input, shape index: {}]
  %s8 = inlined_call_operand.hbm [shape: bf16[128,128], index: 8, kind: input, shape index: {}]
  %s9 = inlined_call_operand.vmem [shape: f32[1,128], index: 9, kind: input, shape index: {}]
  %s10 = inlined_call_operand.hbm [shape: bf16[2,256,128], index: 10, kind: output, shape index: {}]
  %s11 = sld [smem:[#allocation0]]
  $region101: #{tpu_custom_call.1} parent=0
    _
  %s13 = ssub.s32 1, %s11
  %s14 = scalar_select 0, %s13, %s11
  $region1: #{tpu_custom_call.1} parent=0
    #allocation3 [shape = 'u8[65536]{0}', space=vmem, size = 0x10000, scoped, tag = 'input window, operand 0']
    #allocation4 [shape = 's32[2]{0}', space=sflag, size = 0x8, scoped, tag = 'scoped memory for tpu_custom_call.1']
    #allocation5 [shape = 's32[2]{0}', space=sflag, size = 0x8, scoped, tag = 'scoped memory for tpu_custom_call.1']
    #allocation6 [shape = 'u8[1024]{0}', space=vmem, size = 0x400, scoped, tag = 'input window, operand 1']
    #allocation7 [shape = 's32[2]{0}', space=sflag, size = 0x8, scoped, tag = 'scoped memory for tpu_custom_call.1']
    #allocation8 [shape = 'u8[1024]{0}', space=vmem, size = 0x400, scoped, tag = 'input window, operand 2']
    #allocation9 [shape = 'u8[65536]{0}', space=vmem, size = 0x10000, scoped, tag = 'input window, operand 3']
    #allocation10 [shape = 's32[2]{0}', space=sflag, size = 0x8, scoped, tag = 'scoped memory for tpu_custom_call.1']
    #allocation11 [shape = 'u8[65536]{0}', space=vmem, size = 0x10000, scoped, tag = 'input window, operand 4']
    #allocation12 [shape = 'u8[32768]{0}', space=vmem, size = 0x8000, scoped, tag = 'input window, operand 6, single buffered']
    #allocation13 [shape = 's32[1]{0}', space=sflag, size = 0x4, scoped, tag = 'scoped memory for tpu_custom_call.1']
    #allocation14 [shape = 'u8[32768]{0}', space=vmem, size = 0x8000, scoped, tag = 'input window, operand 8, single buffered']
    #allocation15 [shape = 'u8[65536]{0}', space=vmem, size = 0x10000, scoped, tag = 'output window, operand 0']
    %15 = vsyncpa [#allocation4], 0
    %s16 = scalar_lea.sflag [#allocation4], 1
    %17 = vsyncpa %s16, 0
    %18 = vsyncpa [#allocation7], 0
    %s19 = scalar_lea.sflag [#allocation7], 1
    %20 = vsyncpa %s19, 0
    %21 = vsyncpa [#allocation10], 0
    %s22 = scalar_lea.sflag [#allocation10], 1
    %23 = vsyncpa %s22, 0
    %24 = vsyncpa [#allocation13], 0
    %25 = vsyncpa [#allocation5], 0
    %s26 = scalar_lea.sflag [#allocation5], 1
    %27 = vsyncpa %s26, 0
    loop: start=0, step=1, limit=6
    $region2: #{tpu_custom_call.1} parent=1 // loop_pre_header
      _
    $region3: #{tpu_custom_call.1} parent=1 // loop_header
      %s29 = sphi 0, %s33
      %p30 = scmp.ge.s32.totalorder %s29, 6
      %s36 = sphi 0, %s48
      %s37 = sphi 0, %s44
      %s38 = sphi 0, %s36
      %s39 = sphi 0, %s37
      %s40 = sphi 0, %s38
      %s41 = sphi 0, %s39
      %s53 = sphi 0, %s55
      %s56 = sphi 0, %s53
      %s57 = sphi 0, %s56
      %s73 = sphi 0, %s57
      %s79 = sphi 0, %s81
      %s82 = sphi 0, %s79
      %s83 = sphi 0, %s82
      %s99 = sphi 0, %s83
      %s105 = sphi 0, %s107
      %s108 = sphi 0, %s105
      %s109 = sphi 0, %s108
      %s125 = sphi 0, %s109
      %s131 = sphi 0, %s133
      %s134 = sphi 0, %s131
      %s135 = sphi 0, %s134
      %s151 = sphi 0, %s135
      %s157 = sphi 0, %s159
      %s160 = sphi 0, %s157
      %s161 = sphi 0, %s160
      %s177 = sphi 0, %s161
      %s183 = sphi 0, %s185
      %s186 = sphi 0, %s183
      %s187 = sphi 0, %s186
      %s203 = sphi 0, %s187
      %s207 = sphi 0, %s207
      %s209 = sphi 0, %s207
      %s210 = sphi 0, %s209
      %s224 = sphi 0, %s210
      %s228 = sphi 0, %s228
      %s230 = sphi 0, %s228
      %s231 = sphi 0, %s230
      %s245 = sphi 0, %s231
      %s249 = sphi 0, %s249
      %s251 = sphi 0, %s249
      %s252 = sphi 0, %s251
      %s266 = sphi 0, %s252
      %s270 = sphi 0, %s270
      %s272 = sphi 0, %s270
      %s273 = sphi 0, %s272
      %s287 = sphi 0, %s273
      %s295 = sphi 0, %s297
      %s298 = sphi 0, %s295
      %s299 = sphi 0, %s298
      %s315 = sphi 0, %s299
    $region4: #{tpu_custom_call.1} parent=1 // loop_header_branch
      %32 = sbr.rel (%p30) target = $region8
    $region5: #{tpu_custom_call.1} parent=1 // loop_body
      %s34 = ssub.s32 %s29, 1
      %s35 = ssub.s32 %s29, 2
      %s42 = sadd.s32 1, %s37
      %p43 = scmp.ge.s32.totalorder %s42, 2
      %s44 = scalar_select %p43, 0, %s42
      %s45 = sadd.s32 1, %s36
      %s46 = scalar_select %p43, %s45, %s36
      %p47 = scmp.ge.s32.totalorder %s46, 2
      %s48 = scalar_select %p47, 0, %s46
      %s49 = ssub.s32 %s36, %s48
      %s50 = ssub.s32 %s37, %s44
      %s51 = sor.u32 %s49, %s50
      %p52 = scmp.eq.s32.totalorder %s51, 0
      %s54 = sadd.s32 %s53, 1
      %s55 = scalar_select %p52, %s53, %s54
      %p58 = pneg %p52
      %p59 = scmp.eq.s32.totalorder %s29, 3
      %p60 = por %p58, %p59
      %p61 = scmp.ne.s32.totalorder %s53, %s56
      %p62 = scmp.eq.s32.totalorder %s29, 0
      %p63 = por %p61, %p62
      %p64 = scmp.ne.s32.totalorder %s53, %s56
      %p65 = scmp.eq.s32.totalorder %s34, 3
      %p66 = por %p64, %p65
      %p67 = scmp.ne.s32.totalorder %s56, %s57
      %p68 = scmp.eq.s32.totalorder %s34, 0
      %p69 = por %p67, %p68
      %p70 = scmp.ne.s32.totalorder %s56, %s57
      %p71 = scmp.eq.s32.totalorder %s35, 3
      %p72 = por %p70, %p71
      %p74 = scmp.ne.s32.totalorder %s57, %s73
      %p75 = scmp.eq.s32.totalorder %s35, 0
      %p76 = por %p74, %p75
      %s77 = ssub.s32 %s36, %s48
      %p78 = scmp.eq.s32.totalorder %s77, 0
      %s80 = sadd.s32 %s79, 1
      %s81 = scalar_select %p78, %s79, %s80
      %p84 = pneg %p78
      %p85 = scmp.eq.s32.totalorder %s29, 3
      %p86 = por %p84, %p85
      %p87 = scmp.ne.s32.totalorder %s79, %s82
      %p88 = scmp.eq.s32.totalorder %s29, 0
      %p89 = por %p87, %p88
      %p90 = scmp.ne.s32.totalorder %s79, %s82
      %p91 = scmp.eq.s32.totalorder %s34, 3
      %p92 = por %p90, %p91
      %p93 = scmp.ne.s32.totalorder %s82, %s83
      %p94 = scmp.eq.s32.totalorder %s34, 0
      %p95 = por %p93, %p94
      %p96 = scmp.ne.s32.totalorder %s82, %s83
      %p97 = scmp.eq.s32.totalorder %s35, 3
      %p98 = por %p96, %p97
      %p100 = scmp.ne.s32.totalorder %s83, %s99
      %p101 = scmp.eq.s32.totalorder %s35, 0
      %p102 = por %p100, %p101
      %s103 = ssub.s32 %s36, %s48
      %p104 = scmp.eq.s32.totalorder %s103, 0
      %s106 = sadd.s32 %s105, 1
      %s107 = scalar_select %p104, %s105, %s106
      %p110 = pneg %p104
      %p111 = scmp.eq.s32.totalorder %s29, 3
      %p112 = por %p110, %p111
      %p113 = scmp.ne.s32.totalorder %s105, %s108
      %p114 = scmp.eq.s32.totalorder %s29, 0
      %p115 = por %p113, %p114
      %p116 = scmp.ne.s32.totalorder %s105, %s108
      %p117 = scmp.eq.s32.totalorder %s34, 3
      %p118 = por %p116, %p117
      %p119 = scmp.ne.s32.totalorder %s108, %s109
      %p120 = scmp.eq.s32.totalorder %s34, 0
      %p121 = por %p119, %p120
      %p122 = scmp.ne.s32.totalorder %s108, %s109
      %p123 = scmp.eq.s32.totalorder %s35, 3
      %p124 = por %p122, %p123
      %p126 = scmp.ne.s32.totalorder %s109, %s125
      %p127 = scmp.eq.s32.totalorder %s35, 0
      %p128 = por %p126, %p127
      %s129 = ssub.s32 %s36, %s48
      %p130 = scmp.eq.s32.totalorder %s129, 0
      %s132 = sadd.s32 %s131, 1
      %s133 = scalar_select %p130, %s131, %s132
      %p136 = pneg %p130
      %p137 = scmp.eq.s32.totalorder %s29, 3
      %p138 = por %p136, %p137
      %p139 = scmp.ne.s32.totalorder %s131, %s134
      %p140 = scmp.eq.s32.totalorder %s29, 0
      %p141 = por %p139, %p140
      %p142 = scmp.ne.s32.totalorder %s131, %s134
      %p143 = scmp.eq.s32.totalorder %s34, 3
      %p144 = por %p142, %p143
      %p145 = scmp.ne.s32.totalorder %s134, %s135
      %p146 = scmp.eq.s32.totalorder %s34, 0
      %p147 = por %p145, %p146
      %p148 = scmp.ne.s32.totalorder %s134, %s135
      %p149 = scmp.eq.s32.totalorder %s35, 3
      %p150 = por %p148, %p149
      %p152 = scmp.ne.s32.totalorder %s135, %s151
      %p153 = scmp.eq.s32.totalorder %s35, 0
      %p154 = por %p152, %p153
      %s155 = ssub.s32 %s36, %s48
      %p156 = scmp.eq.s32.totalorder %s155, 0
      %s158 = sadd.s32 %s157, 1
      %s159 = scalar_select %p156, %s157, %s158
      %p162 = pneg %p156
      %p163 = scmp.eq.s32.totalorder %s29, 3
      %p164 = por %p162, %p163
      %p165 = scmp.ne.s32.totalorder %s157, %s160
      %p166 = scmp.eq.s32.totalorder %s29, 0
      %p167 = por %p165, %p166
      %p168 = scmp.ne.s32.totalorder %s157, %s160
      %p169 = scmp.eq.s32.totalorder %s34, 3
      %p170 = por %p168, %p169
      %p171 = scmp.ne.s32.totalorder %s160, %s161
      %p172 = scmp.eq.s32.totalorder %s34, 0
      %p173 = por %p171, %p172
      %p174 = scmp.ne.s32.totalorder %s160, %s161
      %p175 = scmp.eq.s32.totalorder %s35, 3
      %p176 = por %p174, %p175
      %p178 = scmp.ne.s32.totalorder %s161, %s177
      %p179 = scmp.eq.s32.totalorder %s35, 0
      %p180 = por %p178, %p179
      %s181 = ssub.s32 %s36, %s48
      %p182 = scmp.eq.s32.totalorder %s181, 0
      %s184 = sadd.s32 %s183, 1
      %s185 = scalar_select %p182, %s183, %s184
      %p188 = pneg %p182
      %p189 = scmp.eq.s32.totalorder %s29, 3
      %p190 = por %p188, %p189
      %p191 = scmp.ne.s32.totalorder %s183, %s186
      %p192 = scmp.eq.s32.totalorder %s29, 0
      %p193 = por %p191, %p192
      %p194 = scmp.ne.s32.totalorder %s183, %s186
      %p195 = scmp.eq.s32.totalorder %s34, 3
      %p196 = por %p194, %p195
      %p197 = scmp.ne.s32.totalorder %s186, %s187
      %p198 = scmp.eq.s32.totalorder %s34, 0
      %p199 = por %p197, %p198
      %p200 = scmp.ne.s32.totalorder %s186, %s187
      %p201 = scmp.eq.s32.totalorder %s35, 3
      %p202 = por %p200, %p201
      %p204 = scmp.ne.s32.totalorder %s187, %s203
      %p205 = scmp.eq.s32.totalorder %s35, 0
      %p206 = por %p204, %p205
      %s208 = sadd.s32 %s207, 1
      %p211 = scmp.eq.s32.totalorder %s29, 3
      %p212 = scmp.ne.s32.totalorder %s207, %s209
      %p213 = scmp.eq.s32.totalorder %s29, 0
      %p214 = por %p212, %p213
      %p215 = scmp.ne.s32.totalorder %s207, %s209
      %p216 = scmp.eq.s32.totalorder %s34, 3
      %p217 = por %p215, %p216
      %p218 = scmp.ne.s32.totalorder %s209, %s210
      %p219 = scmp.eq.s32.totalorder %s34, 0
      %p220 = por %p218, %p219
      %p221 = scmp.ne.s32.totalorder %s209, %s210
      %p222 = scmp.eq.s32.totalorder %s35, 3
      %p223 = por %p221, %p222
      %p225 = scmp.ne.s32.totalorder %s210, %s224
      %p226 = scmp.eq.s32.totalorder %s35, 0
      %p227 = por %p225, %p226
      %s229 = sadd.s32 %s228, 1
      %p232 = scmp.eq.s32.totalorder %s29, 3
      %p233 = scmp.ne.s32.totalorder %s228, %s230
      %p234 = scmp.eq.s32.totalorder %s29, 0
      %p235 = por %p233, %p234
      %p236 = scmp.ne.s32.totalorder %s228, %s230
      %p237 = scmp.eq.s32.totalorder %s34, 3
      %p238 = por %p236, %p237
      %p239 = scmp.ne.s32.totalorder %s230, %s231
      %p240 = scmp.eq.s32.totalorder %s34, 0
      %p241 = por %p239, %p240
      %p242 = scmp.ne.s32.totalorder %s230, %s231
      %p243 = scmp.eq.s32.totalorder %s35, 3
      %p244 = por %p242, %p243
      %p246 = scmp.ne.s32.totalorder %s231, %s245
      %p247 = scmp.eq.s32.totalorder %s35, 0
      %p248 = por %p246, %p247
      %s250 = sadd.s32 %s249, 1
      %p253 = scmp.eq.s32.totalorder %s29, 3
      %p254 = scmp.ne.s32.totalorder %s249, %s251
      %p255 = scmp.eq.s32.totalorder %s29, 0
      %p256 = por %p254, %p255
      %p257 = scmp.ne.s32.totalorder %s249, %s251
      %p258 = scmp.eq.s32.totalorder %s34, 3
      %p259 = por %p257, %p258
      %p260 = scmp.ne.s32.totalorder %s251, %s252
      %p261 = scmp.eq.s32.totalorder %s34, 0
      %p262 = por %p260, %p261
      %p263 = scmp.ne.s32.totalorder %s251, %s252
      %p264 = scmp.eq.s32.totalorder %s35, 3
      %p265 = por %p263, %p264
      %p267 = scmp.ne.s32.totalorder %s252, %s266
      %p268 = scmp.eq.s32.totalorder %s35, 0
      %p269 = por %p267, %p268
      %s271 = sadd.s32 %s270, 1
      %p274 = scmp.eq.s32.totalorder %s29, 3
      %p275 = scmp.ne.s32.totalorder %s270, %s272
      %p276 = scmp.eq.s32.totalorder %s29, 0
      %p277 = por %p275, %p276
      %p278 = scmp.ne.s32.totalorder %s270, %s272
      %p279 = scmp.eq.s32.totalorder %s34, 3
      %p280 = por %p278, %p279
      %p281 = scmp.ne.s32.totalorder %s272, %s273
      %p282 = scmp.eq.s32.totalorder %s34, 0
      %p283 = por %p281, %p282
      %p284 = scmp.ne.s32.totalorder %s272, %s273
      %p285 = scmp.eq.s32.totalorder %s35, 3
      %p286 = por %p284, %p285
      %p288 = scmp.ne.s32.totalorder %s273, %s287
      %p289 = scmp.eq.s32.totalorder %s35, 0
      %p290 = por %p288, %p289
      %s291 = ssub.s32 %s36, %s48
      %s292 = ssub.s32 %s37, %s44
      %s293 = sor.u32 %s291, %s292
      %p294 = scmp.eq.s32.totalorder %s293, 0
      %s296 = sadd.s32 %s295, 1
      %s297 = scalar_select %p294, %s295, %s296
      %p300 = pneg %p294
      %p301 = scmp.eq.s32.totalorder %s29, 3
      %p302 = por %p300, %p301
      %p303 = scmp.ne.s32.totalorder %s295, %s298
      %p304 = scmp.eq.s32.totalorder %s29, 0
      %p305 = por %p303, %p304
      %p306 = scmp.ne.s32.totalorder %s295, %s298
      %p307 = scmp.eq.s32.totalorder %s34, 3
      %p308 = por %p306, %p307
      %p309 = scmp.ne.s32.totalorder %s298, %s299
      %p310 = scmp.eq.s32.totalorder %s34, 0
      %p311 = por %p309, %p310
      %p312 = scmp.ne.s32.totalorder %s298, %s299
      %p313 = scmp.eq.s32.totalorder %s35, 3
      %p314 = por %p312, %p313
      %p316 = scmp.ne.s32.totalorder %s299, %s315
      %p317 = scmp.eq.s32.totalorder %s35, 0
      %p318 = por %p316, %p317
      %p319 = scmp.le.s32.totalorder 1, %s29
      %p320 = scmp.lt.s32.totalorder %s29, 5
      %p321 = pnand %p319, %p320
      %p322 = pneg %p321
      // Predicated region
      $region9: #{tpu_custom_call.1} parent=5 // pred_check
        _
      $region10: #{tpu_custom_call.1} parent=5 // pred_check_branch
        %324 = sbr.rel (%p321) target = $region12
      $region11: #{tpu_custom_call.1} parent=5 // pred_region
        %s325 = ssub.s32 %s29, 1
        // Predicated region
        $region13: #{tpu_custom_call.1} parent=11 // pred_check
          %p326 = pneg %p220
        $region14: #{tpu_custom_call.1} parent=11 // pred_check_branch
          %328 = sbr.rel (%p326) target = $region16
        $region15: #{tpu_custom_call.1} parent=11 // pred_region
          %330 = vsyncadd [#allocation13], 0
          %s331 = sshll.u32 %s6, 4
          %s332 = int_to_ptr.hbm [resolvable:$true] %s331
          %s333 = sshll.u32 [#allocation12], 4
          %s334 = int_to_ptr.vmem [resolvable:$true] %s333
          %339 = dma.hbm_to_vmem [thread:$0]  %s332, 1024, %s334, [#allocation13], 64, 64, 4
        $region16: #{tpu_custom_call.1} parent=11 // pred_fallthru
          _
        // Predicated region
        $region17: #{tpu_custom_call.1} parent=11 // pred_check
          %p340 = pneg %p241
        $region18: #{tpu_custom_call.1} parent=11 // pred_check_branch
          %342 = sbr.rel (%p340) target = $region20
        $region19: #{tpu_custom_call.1} parent=11 // pred_region
          _
        $region20: #{tpu_custom_call.1} parent=11 // pred_fallthru
          _
        // Predicated region
        $region21: #{tpu_custom_call.1} parent=11 // pred_check
          %p343 = pneg %p262
        $region22: #{tpu_custom_call.1} parent=11 // pred_check_branch
          %345 = sbr.rel (%p343) target = $region24
        $region23: #{tpu_custom_call.1} parent=11 // pred_region
          %347 = vsyncadd [#allocation13], 0
          %s348 = sshll.u32 %s8, 4
          %s349 = int_to_ptr.hbm [resolvable:$true] %s348
          %s350 = sshll.u32 [#allocation14], 4
          %s351 = int_to_ptr.vmem [resolvable:$true] %s350
          %356 = dma.hbm_to_vmem [thread:$0]  %s349, 1024, %s351, [#allocation13], 64, 64, 4
        $region24: #{tpu_custom_call.1} parent=11 // pred_fallthru
          _
        // Predicated region
        $region25: #{tpu_custom_call.1} parent=11 // pred_check
          %p357 = pneg %p283
        $region26: #{tpu_custom_call.1} parent=11 // pred_check_branch
          %359 = sbr.rel (%p357) target = $region28
        $region27: #{tpu_custom_call.1} parent=11 // pred_region
          _
        $region28: #{tpu_custom_call.1} parent=11 // pred_fallthru
          _
      $region12: #{tpu_custom_call.1} parent=5 // pred_fallthru
        _
      %p360 = scmp.lt.s32.totalorder %s29, 4
      // Predicated region
      $region29: #{tpu_custom_call.1} parent=5 // pred_check
        %p361 = pneg %p360
      $region30: #{tpu_custom_call.1} parent=5 // pred_check_branch
        %363 = sbr.rel (%p361) target = $region32
      $region31: #{tpu_custom_call.1} parent=5 // pred_region
        // Predicated region
        $region33: #{tpu_custom_call.1} parent=31 // pred_check
          %p364 = pneg %p63
        $region34: #{tpu_custom_call.1} parent=31 // pred_check_branch
          %366 = sbr.rel (%p364) target = $region36
        $region35: #{tpu_custom_call.1} parent=31 // pred_region
          %s367 = sand.u32 %s53, 1
          %s368 = scalar_lea.sflag [#allocation4], %s367
          %s369 = sand.u32 %s53, 1
          %s370 = smul.addr %s369, 64
          %s371 = scalar_lea.vmem [#allocation3], %s370
          %s372 = smul.u32 16, %s37
          %374 = vsyncadd %s368, 0
          %s375 = smul.addr %s36, 32
          %s376 = sadd.s32 %s372, %s375
          %s377 = smul.addr %s376, 4
          %s378 = scalar_lea.hbm %s0, %s377
          %s379 = sshll.u32 %s378, 4
          %s380 = int_to_ptr.hbm [resolvable:$true] %s379
          %s381 = sshll.u32 %s371, 4
          %s382 = int_to_ptr.vmem [resolvable:$true] %s381
          %387 = dma.hbm_to_vmem [thread:$0]  %s380, 1024, %s382, %s368, 64, 64, 4
        $region36: #{tpu_custom_call.1} parent=31 // pred_fallthru
          _
        // Predicated region
        $region37: #{tpu_custom_call.1} parent=31 // pred_check
          %p388 = pneg %p89
        $region38: #{tpu_custom_call.1} parent=31 // pred_check_branch
          %390 = sbr.rel (%p388) target = $region40
        $region39: #{tpu_custom_call.1} parent=31 // pred_region
          %s391 = sand.u32 %s29, 1
          %s392 = scalar_lea.sflag [#allocation7], %s391
          %s393 = sand.u32 %s79, 1
          %s394 = scalar_lea.vmem [#allocation6], %s393
          %396 = vsyncadd %s392, 0
          %s397 = scalar_lea.hbm %s1, %s36
          %s399 = sshll.u32 %s397, 4
          %s400 = int_to_ptr.hbm [resolvable:$true] %s399
          %s401 = sshll.u32 %s394, 4
          %s402 = int_to_ptr.vmem [resolvable:$true] %s401
          %404 = dma.hbm_to_vmem [thread:$0]  %s400, 16, %s402, %s392
        $region40: #{tpu_custom_call.1} parent=31 // pred_fallthru
          _
        // Predicated region
        $region41: #{tpu_custom_call.1} parent=31 // pred_check
          %p405 = pneg %p115
        $region42: #{tpu_custom_call.1} parent=31 // pred_check_branch
          %407 = sbr.rel (%p405) target = $region44
        $region43: #{tpu_custom_call.1} parent=31 // pred_region
          %s408 = sand.u32 %s29, 1
          %s409 = scalar_lea.sflag [#allocation7], %s408
          %s410 = sand.u32 %s105, 1
          %s411 = scalar_lea.vmem [#allocation8], %s410
          %413 = vsyncadd %s409, 0
          %s414 = scalar_lea.hbm %s2, %s36
          %s416 = sshll.u32 %s414, 4
          %s417 = int_to_ptr.hbm [resolvable:$true] %s416
          %s418 = sshll.u32 %s411, 4
          %s419 = int_to_ptr.vmem [resolvable:$true] %s418
          %421 = dma.hbm_to_vmem [thread:$0]  %s417, 16, %s419, %s409
        $region44: #{tpu_custom_call.1} parent=31 // pred_fallthru
          _
        // Predicated region
        $region45: #{tpu_custom_call.1} parent=31 // pred_check
          %p422 = pneg %p141
        $region46: #{tpu_custom_call.1} parent=31 // pred_check_branch
          %424 = sbr.rel (%p422) target = $region48
        $region47: #{tpu_custom_call.1} parent=31 // pred_region
          %s425 = sand.u32 %s29, 1
          %s426 = scalar_lea.sflag [#allocation10], %s425
          %s427 = sand.u32 %s131, 1
          %s428 = smul.addr %s427, 64
          %s429 = scalar_lea.vmem [#allocation9], %s428
          %431 = vsyncadd %s426, 0
          %s432 = smul.addr %s36, 16
          %s433 = smul.addr %s432, 4
          %s434 = scalar_lea.hbm %s3, %s433
          %s435 = sshll.u32 %s434, 4
          %s436 = int_to_ptr.hbm [resolvable:$true] %s435
          %s437 = sshll.u32 %s429, 4
          %s438 = int_to_ptr.vmem [resolvable:$true] %s437
          %443 = dma.hbm_to_vmem [thread:$0]  %s436, 1024, %s438, %s426, 64, 64, 4
        $region48: #{tpu_custom_call.1} parent=31 // pred_fallthru
          _
        // Predicated region
        $region49: #{tpu_custom_call.1} parent=31 // pred_check
          %p444 = pneg %p167
        $region50: #{tpu_custom_call.1} parent=31 // pred_check_branch
          %446 = sbr.rel (%p444) target = $region52
        $region51: #{tpu_custom_call.1} parent=31 // pred_region
          %s447 = sand.u32 %s29, 1
          %s448 = scalar_lea.sflag [#allocation10], %s447
          %s449 = sand.u32 %s157, 1
          %s450 = smul.addr %s449, 64
          %s451 = scalar_lea.vmem [#allocation11], %s450
          %453 = vsyncadd %s448, 0
          %s454 = smul.addr %s36, 16
          %s455 = smul.addr %s454, 4
          %s456 = scalar_lea.hbm %s4, %s455
          %s457 = sshll.u32 %s456, 4
          %s458 = int_to_ptr.hbm [resolvable:$true] %s457
          %s459 = sshll.u32 %s451, 4
          %s460 = int_to_ptr.vmem [resolvable:$true] %s459
          %465 = dma.hbm_to_vmem [thread:$0]  %s458, 1024, %s460, %s448, 64, 64, 4
        $region52: #{tpu_custom_call.1} parent=31 // pred_fallthru
          _
        // Predicated region
        $region53: #{tpu_custom_call.1} parent=31 // pred_check
          %p466 = pneg %p193
        $region54: #{tpu_custom_call.1} parent=31 // pred_check_branch
          %468 = sbr.rel (%p466) target = $region56
        $region55: #{tpu_custom_call.1} parent=31 // pred_region
          %p469 = scmp.lt.s32.totalorder %s36, 1
          %s470 = scalar_select %p469, %s36, 1
          %s471 = scalar_lea.vmem %s5, %s470
        $region56: #{tpu_custom_call.1} parent=31 // pred_fallthru
          _
      $region32: #{tpu_custom_call.1} parent=5 // pred_fallthru
        _
      %p472 = scmp.le.s32.totalorder 1, %s29
      %p473 = scmp.lt.s32.totalorder %s29, 5
      %p474 = pnand %p472, %p473
      %p475 = pneg %p474
      // Predicated region
      $region57: #{tpu_custom_call.1} parent=5 // pred_check
        _
      $region58: #{tpu_custom_call.1} parent=5 // pred_check_branch
        %477 = sbr.rel (%p474) target = $region60
      $region59: #{tpu_custom_call.1} parent=5 // pred_region
        %s478 = ssub.s32 %s29, 1
        %s479 = sand.u32 %s56, 1
        %s480 = scalar_lea.sflag [#allocation4], %s479
        %s481 = sand.u32 %s56, 1
        %s482 = smul.addr %s481, 64
        %s483 = scalar_lea.vmem [#allocation3], %s482
        // Predicated region
        $region61: #{tpu_custom_call.1} parent=59 // pred_check
          %p484 = pneg %p69
        $region62: #{tpu_custom_call.1} parent=59 // pred_check_branch
          %486 = sbr.rel (%p484) target = $region64
        $region63: #{tpu_custom_call.1} parent=59 // pred_region
          %488 = dma.done %s480, 1024
        $region64: #{tpu_custom_call.1} parent=59 // pred_fallthru
          _
        %s489 = sand.u32 %s34, 1
        %s490 = scalar_lea.sflag [#allocation7], %s489
        %s491 = sand.u32 %s82, 1
        %s492 = scalar_lea.vmem [#allocation6], %s491
        // Predicated region
        $region65: #{tpu_custom_call.1} parent=59 // pred_check
          %p493 = pneg %p95
        $region66: #{tpu_custom_call.1} parent=59 // pred_check_branch
          %495 = sbr.rel (%p493) target = $region68
        $region67: #{tpu_custom_call.1} parent=59 // pred_region
          %497 = dma.done %s490, 16
        $region68: #{tpu_custom_call.1} parent=59 // pred_fallthru
          _
        %s498 = sand.u32 %s34, 1
        %s499 = scalar_lea.sflag [#allocation7], %s498
        %s500 = sand.u32 %s108, 1
        %s501 = scalar_lea.vmem [#allocation8], %s500
        // Predicated region
        $region69: #{tpu_custom_call.1} parent=59 // pred_check
          %p502 = pneg %p121
        $region70: #{tpu_custom_call.1} parent=59 // pred_check_branch
          %504 = sbr.rel (%p502) target = $region72
        $region71: #{tpu_custom_call.1} parent=59 // pred_region
          %506 = dma.done %s499, 16
        $region72: #{tpu_custom_call.1} parent=59 // pred_fallthru
          _
        %s507 = sand.u32 %s34, 1
        %s508 = scalar_lea.sflag [#allocation10], %s507
        %s509 = sand.u32 %s134, 1
        %s510 = smul.addr %s509, 64
        %s511 = scalar_lea.vmem [#allocation9], %s510
        // Predicated region
        $region73: #{tpu_custom_call.1} parent=59 // pred_check
          %p512 = pneg %p147
        $region74: #{tpu_custom_call.1} parent=59 // pred_check_branch
          %514 = sbr.rel (%p512) target = $region76
        $region75: #{tpu_custom_call.1} parent=59 // pred_region
          %516 = dma.done %s508, 1024
        $region76: #{tpu_custom_call.1} parent=59 // pred_fallthru
          _
        %s517 = sand.u32 %s34, 1
        %s518 = scalar_lea.sflag [#allocation10], %s517
        %s519 = sand.u32 %s160, 1
        %s520 = smul.addr %s519, 64
        %s521 = scalar_lea.vmem [#allocation11], %s520
        // Predicated region
        $region77: #{tpu_custom_call.1} parent=59 // pred_check
          %p522 = pneg %p173
        $region78: #{tpu_custom_call.1} parent=59 // pred_check_branch
          %524 = sbr.rel (%p522) target = $region80
        $region79: #{tpu_custom_call.1} parent=59 // pred_region
          %526 = dma.done %s518, 1024
        $region80: #{tpu_custom_call.1} parent=59 // pred_fallthru
          _
        // Predicated region
        $region81: #{tpu_custom_call.1} parent=59 // pred_check
          %p527 = pneg %p220
        $region82: #{tpu_custom_call.1} parent=59 // pred_check_branch
          %529 = sbr.rel (%p527) target = $region84
        $region83: #{tpu_custom_call.1} parent=59 // pred_region
          %531 = dma.done [#allocation13], 1024
        $region84: #{tpu_custom_call.1} parent=59 // pred_fallthru
          _
        // Predicated region
        $region85: #{tpu_custom_call.1} parent=59 // pred_check
          %p532 = pneg %p262
        $region86: #{tpu_custom_call.1} parent=59 // pred_check_branch
          %534 = sbr.rel (%p532) target = $region88
        $region87: #{tpu_custom_call.1} parent=59 // pred_region
          %536 = dma.done [#allocation13], 1024
        $region88: #{tpu_custom_call.1} parent=59 // pred_fallthru
          _
        %s537 = sand.u32 %s56, 1
        %s538 = scalar_lea.sflag [#allocation4], %s537
        %s539 = sand.u32 %s56, 1
        %s540 = smul.addr %s539, 64
        %s541 = scalar_lea.vmem [#allocation3], %s540
        %p542 = pneg %p69
        %p543 = pneg %p66
        %s544 = sand.u32 %s34, 1
        %s545 = scalar_lea.sflag [#allocation7], %s544
        %s546 = sand.u32 %s82, 1
        %s547 = scalar_lea.vmem [#allocation6], %s546
        %p548 = pneg %p95
        %p549 = pneg %p92
        %s550 = sand.u32 %s34, 1
        %s551 = scalar_lea.sflag [#allocation7], %s550
        %s552 = sand.u32 %s108, 1
        %s553 = scalar_lea.vmem [#allocation8], %s552
        %p554 = pneg %p121
        %p555 = pneg %p118
        %s556 = sand.u32 %s34, 1
        %s557 = scalar_lea.sflag [#allocation10], %s556
        %s558 = sand.u32 %s134, 1
        %s559 = smul.addr %s558, 64
        %s560 = scalar_lea.vmem [#allocation9], %s559
        %p561 = pneg %p147
        %p562 = pneg %p144
        %s563 = sand.u32 %s34, 1
        %s564 = scalar_lea.sflag [#allocation10], %s563
        %s565 = sand.u32 %s160, 1
        %s566 = smul.addr %s565, 64
        %s567 = scalar_lea.vmem [#allocation11], %s566
        %p568 = pneg %p173
        %p569 = pneg %p170
        %p570 = scmp.lt.s32.totalorder %s38, 1
        %s571 = scalar_select %p570, %s38, 1
        %s572 = scalar_lea.vmem %s5, %s571
        %p573 = pneg %p199
        %p574 = pneg %p196
        %p575 = pneg %p220
        %p576 = pneg %p217
        %p577 = pneg %p241
        %p578 = pneg %p238
        %p579 = pneg %p262
        %p580 = pneg %p259
        %p581 = pneg %p283
        %p582 = pneg %p280
        %p583 = pneg %p311
        %p584 = pneg %p308
        %s585 = sand.u32 %s298, 1
        %s586 = scalar_lea.sflag [#allocation5], %s585
        %s587 = sand.u32 %s298, 1
        %s588 = smul.addr %s587, 64
        %s589 = scalar_lea.vmem [#allocation15], %s588
        %s590 = smul.u32 16, %s39
        %p591 = scmp.lt.s32.totalorder %s38, 1
        %s592 = scalar_select %p591, %s38, 1
        %s593 = scalar_lea.vmem %s5, %s592
        %s594 = smul.u32 16, %s39
        %v595 = vld [vmem:[%s483] sm:$0xf]
        %v596 = vld [vmem:[%s483 + $0x4] sm:$0xf]
        %v597 = vld [vmem:[%s483 + $0x8] sm:$0xf]
        %v598 = vld [vmem:[%s483 + $0xc] sm:$0xf]
        %v599 = vld [vmem:[%s483 + $0x10] sm:$0xf]
        %v600 = vld [vmem:[%s483 + $0x14] sm:$0xf]
        %v601 = vld [vmem:[%s483 + $0x18] sm:$0xf]
        %v602 = vld [vmem:[%s483 + $0x1c] sm:$0xf]
        %v603 = vld [vmem:[%s483 + $0x20] sm:$0xf]
        %v604 = vld [vmem:[%s483 + $0x24] sm:$0xf]
        %v605 = vld [vmem:[%s483 + $0x28] sm:$0xf]
        %v606 = vld [vmem:[%s483 + $0x2c] sm:$0xf]
        %v607 = vld [vmem:[%s483 + $0x30] sm:$0xf]
        %v608 = vld [vmem:[%s483 + $0x34] sm:$0xf]
        %v609 = vld [vmem:[%s483 + $0x38] sm:$0xf]
        %v610 = vld [vmem:[%s483 + $0x3c] sm:$0xf]
        %v611 = vunpack.c.l.bf16 %v595
        %v612 = vunpack.c.l.bf16 %v596
        %v613 = vunpack.c.l.bf16 %v597
        %v614 = vunpack.c.l.bf16 %v598
        %v615 = vunpack.c.l.bf16 %v599
        %v616 = vunpack.c.l.bf16 %v600
        %v617 = vunpack.c.l.bf16 %v601
        %v618 = vunpack.c.l.bf16 %v602
        %v619 = vunpack.c.l.bf16 %v603
        %v620 = vunpack.c.l.bf16 %v604
        %v621 = vunpack.c.l.bf16 %v605
        %v622 = vunpack.c.l.bf16 %v606
        %v623 = vunpack.c.l.bf16 %v607
        %v624 = vunpack.c.l.bf16 %v608
        %v625 = vunpack.c.l.bf16 %v609
        %v626 = vunpack.c.l.bf16 %v610
        %627 = vadd.xlane.f32.xlu0 %v611
        %v628 = vpop.xlane.xlu0 %627
        %629 = vadd.xlane.f32.xlu0 %v612
        %v630 = vpop.xlane.xlu0 %629
        %631 = vadd.xlane.f32.xlu0 %v613
        %v632 = vpop.xlane.xlu0 %631
        %633 = vadd.xlane.f32.xlu0 %v614
        %v634 = vpop.xlane.xlu0 %633
        %635 = vadd.xlane.f32.xlu0 %v615
        %v636 = vpop.xlane.xlu0 %635
        %637 = vadd.xlane.f32.xlu0 %v616
        %v638 = vpop.xlane.xlu0 %637
        %639 = vadd.xlane.f32.xlu0 %v617
        %v640 = vpop.xlane.xlu0 %639
        %641 = vadd.xlane.f32.xlu0 %v618
        %v642 = vpop.xlane.xlu0 %641
        %643 = vadd.xlane.f32.xlu0 %v619
        %v644 = vpop.xlane.xlu0 %643
        %645 = vadd.xlane.f32.xlu0 %v620
        %v646 = vpop.xlane.xlu0 %645
        %647 = vadd.xlane.f32.xlu0 %v621
        %v648 = vpop.xlane.xlu0 %647
        %649 = vadd.xlane.f32.xlu0 %v622
        %v650 = vpop.xlane.xlu0 %649
        %651 = vadd.xlane.f32.xlu0 %v623
        %v652 = vpop.xlane.xlu0 %651
        %653 = vadd.xlane.f32.xlu0 %v624
        %v654 = vpop.xlane.xlu0 %653
        %655 = vadd.xlane.f32.xlu0 %v625
        %v656 = vpop.xlane.xlu0 %655
        %657 = vadd.xlane.f32.xlu0 %v626
        %v658 = vpop.xlane.xlu0 %657
        %v659 = vrcp.pop 128.0
        %v660 = vmul.f32 128.0, %v659
        %v661 = vsub.f32 1.0, %v660
        %v662 = vmul.f32 %v659, %v661
        %v663 = vadd.f32 %v659, %v662
        %vm664 = vweird.f32 %v659
        %v665 = vsel %vm664, %v659, %v663
        %v666 = vmul.f32 %v628, %v665
        %v667 = vmul.f32 %v630, %v665
        %v668 = vmul.f32 %v632, %v665
        %v669 = vmul.f32 %v634, %v665
        %v670 = vmul.f32 %v636, %v665
        %v671 = vmul.f32 %v638, %v665
        %v672 = vmul.f32 %v640, %v665
        %v673 = vmul.f32 %v642, %v665
        %v674 = vmul.f32 %v644, %v665
        %v675 = vmul.f32 %v646, %v665
        %v676 = vmul.f32 %v648, %v665
        %v677 = vmul.f32 %v650, %v665
        %v678 = vmul.f32 %v652, %v665
        %v679 = vmul.f32 %v654, %v665
        %v680 = vmul.f32 %v656, %v665
        %v681 = vmul.f32 %v658, %v665
        %v682 = vsub.f32 %v611, %v666
        %v683 = vsub.f32 %v612, %v667
        %v684 = vsub.f32 %v613, %v668
        %v685 = vsub.f32 %v614, %v669
        %v686 = vsub.f32 %v615, %v670
        %v687 = vsub.f32 %v616, %v671
        %v688 = vsub.f32 %v617, %v672
        %v689 = vsub.f32 %v618, %v673
        %v690 = vsub.f32 %v619, %v674
        %v691 = vsub.f32 %v620, %v675
        %v692 = vsub.f32 %v621, %v676
        %v693 = vsub.f32 %v622, %v677
        %v694 = vsub.f32 %v623, %v678
        %v695 = vsub.f32 %v624, %v679
        %v696 = vsub.f32 %v625, %v680
        %v697 = vsub.f32 %v626, %v681
        %v698 = vmul.f32 %v682, %v682
        %v699 = vmul.f32 %v683, %v683
        %v700 = vmul.f32 %v684, %v684
        %v701 = vmul.f32 %v685, %v685
        %v702 = vmul.f32 %v686, %v686
        %v703 = vmul.f32 %v687, %v687
        %v704 = vmul.f32 %v688, %v688
        %v705 = vmul.f32 %v689, %v689
        %v706 = vmul.f32 %v690, %v690
        %v707 = vmul.f32 %v691, %v691
        %v708 = vmul.f32 %v692, %v692
        %v709 = vmul.f32 %v693, %v693
        %v710 = vmul.f32 %v694, %v694
        %v711 = vmul.f32 %v695, %v695
        %v712 = vmul.f32 %v696, %v696
        %v713 = vmul.f32 %v697, %v697
        %714 = vadd.xlane.f32.xlu0 %v698
        %v715 = vpop.xlane.xlu0 %714
        %716 = vadd.xlane.f32.xlu0 %v699
        %v717 = vpop.xlane.xlu0 %716
        %718 = vadd.xlane.f32.xlu0 %v700
        %v719 = vpop.xlane.xlu0 %718
        %720 = vadd.xlane.f32.xlu0 %v701
        %v721 = vpop.xlane.xlu0 %720
        %722 = vadd.xlane.f32.xlu0 %v702
        %v723 = vpop.xlane.xlu0 %722
        %724 = vadd.xlane.f32.xlu0 %v703
        %v725 = vpop.xlane.xlu0 %724
        %726 = vadd.xlane.f32.xlu0 %v704
        %v727 = vpop.xlane.xlu0 %726
        %728 = vadd.xlane.f32.xlu0 %v705
        %v729 = vpop.xlane.xlu0 %728
        %730 = vadd.xlane.f32.xlu0 %v706
        %v731 = vpop.xlane.xlu0 %730
        %732 = vadd.xlane.f32.xlu0 %v707
        %v733 = vpop.xlane.xlu0 %732
        %734 = vadd.xlane.f32.xlu0 %v708
        %v735 = vpop.xlane.xlu0 %734
        %736 = vadd.xlane.f32.xlu0 %v709
        %v737 = vpop.xlane.xlu0 %736
        %738 = vadd.xlane.f32.xlu0 %v710
        %v739 = vpop.xlane.xlu0 %738
        %740 = vadd.xlane.f32.xlu0 %v711
        %v741 = vpop.xlane.xlu0 %740
        %742 = vadd.xlane.f32.xlu0 %v712
        %v743 = vpop.xlane.xlu0 %742
        %744 = vadd.xlane.f32.xlu0 %v713
        %v745 = vpop.xlane.xlu0 %744
        %v746 = vmul.f32 %v715, %v665
        %v747 = vmul.f32 %v717, %v665
        %v748 = vmul.f32 %v719, %v665
        %v749 = vmul.f32 %v721, %v665
        %v750 = vmul.f32 %v723, %v665
        %v751 = vmul.f32 %v725, %v665
        %v752 = vmul.f32 %v727, %v665
        %v753 = vmul.f32 %v729, %v665
        %v754 = vmul.f32 %v731, %v665
        %v755 = vmul.f32 %v733, %v665
        %v756 = vmul.f32 %v735, %v665
        %v757 = vmul.f32 %v737, %v665
        %v758 = vmul.f32 %v739, %v665
        %v759 = vmul.f32 %v741, %v665
        %v760 = vmul.f32 %v743, %v665
        %v761 = vmul.f32 %v745, %v665
        %v762 = vadd.f32 %v746, 1e-06
        %v763 = vadd.f32 %v747, 1e-06
        %v764 = vadd.f32 %v748, 1e-06
        %v765 = vadd.f32 %v749, 1e-06
        %v766 = vadd.f32 %v750, 1e-06
        %v767 = vadd.f32 %v751, 1e-06
        %v768 = vadd.f32 %v752, 1e-06
        %v769 = vadd.f32 %v753, 1e-06
        %v770 = vadd.f32 %v754, 1e-06
        %v771 = vadd.f32 %v755, 1e-06
        %v772 = vadd.f32 %v756, 1e-06
        %v773 = vadd.f32 %v757, 1e-06
        %v774 = vadd.f32 %v758, 1e-06
        %v775 = vadd.f32 %v759, 1e-06
        %v776 = vadd.f32 %v760, 1e-06
        %v777 = vadd.f32 %v761, 1e-06
        %v778 = vrsqrt.pop %v762
        %v779 = vmul.f32 %v778, %v762
        %v780 = vmul.f32 %v779, %v778
        %v781 = vmul.f32 0.5, %v780
        %v782 = vsub.f32 1.5, %v781
        %v783 = vmul.f32 %v778, %v782
        %vm784 = vweird.f32 %v762
        %vm785 = vweird.f32 %v778
        %vm786 = vmor %vm784, %vm785
        %v787 = vsel %vm786, %v778, %v783
        %v788 = vrsqrt.pop %v763
        %v789 = vmul.f32 %v788, %v763
        %v790 = vmul.f32 %v789, %v788
        %v791 = vmul.f32 0.5, %v790
        %v792 = vsub.f32 1.5, %v791
        %v793 = vmul.f32 %v788, %v792
        %vm794 = vweird.f32 %v763
        %vm795 = vweird.f32 %v788
        %vm796 = vmor %vm794, %vm795
        %v797 = vsel %vm796, %v788, %v793
        %v798 = vrsqrt.pop %v764
        %v799 = vmul.f32 %v798, %v764
        %v800 = vmul.f32 %v799, %v798
        %v801 = vmul.f32 0.5, %v800
        %v802 = vsub.f32 1.5, %v801
        %v803 = vmul.f32 %v798, %v802
        %vm804 = vweird.f32 %v764
        %vm805 = vweird.f32 %v798
        %vm806 = vmor %vm804, %vm805
        %v807 = vsel %vm806, %v798, %v803
        %v808 = vrsqrt.pop %v765
        %v809 = vmul.f32 %v808, %v765
        %v810 = vmul.f32 %v809, %v808
        %v811 = vmul.f32 0.5, %v810
        %v812 = vsub.f32 1.5, %v811
        %v813 = vmul.f32 %v808, %v812
        %vm814 = vweird.f32 %v765
        %vm815 = vweird.f32 %v808
        %vm816 = vmor %vm814, %vm815
        %v817 = vsel %vm816, %v808, %v813
        %v818 = vrsqrt.pop %v766
        %v819 = vmul.f32 %v818, %v766
        %v820 = vmul.f32 %v819, %v818
        %v821 = vmul.f32 0.5, %v820
        %v822 = vsub.f32 1.5, %v821
        %v823 = vmul.f32 %v818, %v822
        %vm824 = vweird.f32 %v766
        %vm825 = vweird.f32 %v818
        %vm826 = vmor %vm824, %vm825
        %v827 = vsel %vm826, %v818, %v823
        %v828 = vrsqrt.pop %v767
        %v829 = vmul.f32 %v828, %v767
        %v830 = vmul.f32 %v829, %v828
        %v831 = vmul.f32 0.5, %v830
        %v832 = vsub.f32 1.5, %v831
        %v833 = vmul.f32 %v828, %v832
        %vm834 = vweird.f32 %v767
        %vm835 = vweird.f32 %v828
        %vm836 = vmor %vm834, %vm835
        %v837 = vsel %vm836, %v828, %v833
        %v838 = vrsqrt.pop %v768
        %v839 = vmul.f32 %v838, %v768
        %v840 = vmul.f32 %v839, %v838
        %v841 = vmul.f32 0.5, %v840
        %v842 = vsub.f32 1.5, %v841
        %v843 = vmul.f32 %v838, %v842
        %vm844 = vweird.f32 %v768
        %vm845 = vweird.f32 %v838
        %vm846 = vmor %vm844, %vm845
        %v847 = vsel %vm846, %v838, %v843
        %v848 = vrsqrt.pop %v769
        %v849 = vmul.f32 %v848, %v769
        %v850 = vmul.f32 %v849, %v848
        %v851 = vmul.f32 0.5, %v850
        %v852 = vsub.f32 1.5, %v851
        %v853 = vmul.f32 %v848, %v852
        %vm854 = vweird.f32 %v769
        %vm855 = vweird.f32 %v848
        %vm856 = vmor %vm854, %vm855
        %v857 = vsel %vm856, %v848, %v853
        %v858 = vrsqrt.pop %v770
        %v859 = vmul.f32 %v858, %v770
        %v860 = vmul.f32 %v859, %v858
        %v861 = vmul.f32 0.5, %v860
        %v862 = vsub.f32 1.5, %v861
        %v863 = vmul.f32 %v858, %v862
        %vm864 = vweird.f32 %v770
        %vm865 = vweird.f32 %v858
        %vm866 = vmor %vm864, %vm865
        %v867 = vsel %vm866, %v858, %v863
        %v868 = vrsqrt.pop %v771
        %v869 = vmul.f32 %v868, %v771
        %v870 = vmul.f32 %v869, %v868
        %v871 = vmul.f32 0.5, %v870
        %v872 = vsub.f32 1.5, %v871
        %v873 = vmul.f32 %v868, %v872
        %vm874 = vweird.f32 %v771
        %vm875 = vweird.f32 %v868
        %vm876 = vmor %vm874, %vm875
        %v877 = vsel %vm876, %v868, %v873
        %v878 = vrsqrt.pop %v772
        %v879 = vmul.f32 %v878, %v772
        %v880 = vmul.f32 %v879, %v878
        %v881 = vmul.f32 0.5, %v880
        %v882 = vsub.f32 1.5, %v881
        %v883 = vmul.f32 %v878, %v882
        %vm884 = vweird.f32 %v772
        %vm885 = vweird.f32 %v878
        %vm886 = vmor %vm884, %vm885
        %v887 = vsel %vm886, %v878, %v883
        %v888 = vrsqrt.pop %v773
        %v889 = vmul.f32 %v888, %v773
        %v890 = vmul.f32 %v889, %v888
        %v891 = vmul.f32 0.5, %v890
        %v892 = vsub.f32 1.5, %v891
        %v893 = vmul.f32 %v888, %v892
        %vm894 = vweird.f32 %v773
        %vm895 = vweird.f32 %v888
        %vm896 = vmor %vm894, %vm895
        %v897 = vsel %vm896, %v888, %v893
        %v898 = vrsqrt.pop %v774
        %v899 = vmul.f32 %v898, %v774
        %v900 = vmul.f32 %v899, %v898
        %v901 = vmul.f32 0.5, %v900
        %v902 = vsub.f32 1.5, %v901
        %v903 = vmul.f32 %v898, %v902
        %vm904 = vweird.f32 %v774
        %vm905 = vweird.f32 %v898
        %vm906 = vmor %vm904, %vm905
        %v907 = vsel %vm906, %v898, %v903
        %v908 = vrsqrt.pop %v775
        %v909 = vmul.f32 %v908, %v775
        %v910 = vmul.f32 %v909, %v908
        %v911 = vmul.f32 0.5, %v910
        %v912 = vsub.f32 1.5, %v911
        %v913 = vmul.f32 %v908, %v912
        %vm914 = vweird.f32 %v775
        %vm915 = vweird.f32 %v908
        %vm916 = vmor %vm914, %vm915
        %v917 = vsel %vm916, %v908, %v913
        %v918 = vrsqrt.pop %v776
        %v919 = vmul.f32 %v918, %v776
        %v920 = vmul.f32 %v919, %v918
        %v921 = vmul.f32 0.5, %v920
        %v922 = vsub.f32 1.5, %v921
        %v923 = vmul.f32 %v918, %v922
        %vm924 = vweird.f32 %v776
        %vm925 = vweird.f32 %v918
        %vm926 = vmor %vm924, %vm925
        %v927 = vsel %vm926, %v918, %v923
        %v928 = vrsqrt.pop %v777
        %v929 = vmul.f32 %v928, %v777
        %v930 = vmul.f32 %v929, %v928
        %v931 = vmul.f32 0.5, %v930
        %v932 = vsub.f32 1.5, %v931
        %v933 = vmul.f32 %v928, %v932
        %vm934 = vweird.f32 %v777
        %vm935 = vweird.f32 %v928
        %vm936 = vmor %vm934, %vm935
        %v937 = vsel %vm936, %v928, %v933
        %v938 = vmul.f32 %v682, %v787
        %v939 = vmul.f32 %v683, %v797
        %v940 = vmul.f32 %v684, %v807
        %v941 = vmul.f32 %v685, %v817
        %v942 = vmul.f32 %v686, %v827
        %v943 = vmul.f32 %v687, %v837
        %v944 = vmul.f32 %v688, %v847
        %v945 = vmul.f32 %v689, %v857
        %v946 = vmul.f32 %v690, %v867
        %v947 = vmul.f32 %v691, %v877
        %v948 = vmul.f32 %v692, %v887
        %v949 = vmul.f32 %v693, %v897
        %v950 = vmul.f32 %v694, %v907
        %v951 = vmul.f32 %v695, %v917
        %v952 = vmul.f32 %v696, %v927
        %v953 = vmul.f32 %v697, %v937
        %v954 = vld [vmem:[%s492] sm:$0x1]
        %v955 = vadd.f32 %v954, 1.0
        %v957 = vperm.slane %v955, 0
        %v959 = vmul.f32 %v938, %v957
        %v960 = vmul.f32 %v939, %v957
        %v961 = vmul.f32 %v940, %v957
        %v962 = vmul.f32 %v941, %v957
        %v963 = vmul.f32 %v942, %v957
        %v964 = vmul.f32 %v943, %v957
        %v965 = vmul.f32 %v944, %v957
        %v966 = vmul.f32 %v945, %v957
        %v967 = vmul.f32 %v946, %v957
        %v968 = vmul.f32 %v947, %v957
        %v969 = vmul.f32 %v948, %v957
        %v970 = vmul.f32 %v949, %v957
        %v971 = vmul.f32 %v950, %v957
        %v972 = vmul.f32 %v951, %v957
        %v973 = vmul.f32 %v952, %v957
        %v974 = vmul.f32 %v953, %v957
        %v975 = vld [vmem:[%s501] sm:$0x1]
        %v977 = vperm.slane %v975, 0
        %v979 = vadd.f32 %v959, %v977
        %v980 = vadd.f32 %v960, %v977
        %v981 = vadd.f32 %v961, %v977
        %v982 = vadd.f32 %v962, %v977
        %v983 = vadd.f32 %v963, %v977
        %v984 = vadd.f32 %v964, %v977
        %v985 = vadd.f32 %v965, %v977
        %v986 = vadd.f32 %v966, %v977
        %v987 = vadd.f32 %v967, %v977
        %v988 = vadd.f32 %v968, %v977
        %v989 = vadd.f32 %v969, %v977
        %v990 = vadd.f32 %v970, %v977
        %v991 = vadd.f32 %v971, %v977
        %v992 = vadd.f32 %v972, %v977
        %v993 = vadd.f32 %v973, %v977
        %v994 = vadd.f32 %v974, %v977
        %v995 = vpack.c.bf16 %v980, %v979
        %v996 = vpack.c.bf16 %v982, %v981
        %v997 = vpack.c.bf16 %v984, %v983
        %v998 = vpack.c.bf16 %v986, %v985
        %v999 = vpack.c.bf16 %v988, %v987
        %v1000 = vpack.c.bf16 %v990, %v989
        %v1001 = vpack.c.bf16 %v992, %v991
        %v1002 = vpack.c.bf16 %v994, %v993
        %v1003 = vld [vmem:[#allocation12] sm:$0xf]
        %v1004 = vld [vmem:[#allocation12 + $0x4] sm:$0xf]
        %v1005 = vld [vmem:[#allocation12 + $0x8] sm:$0xf]
        %v1006 = vld [vmem:[#allocation12 + $0xc] sm:$0xf]
        %v1007 = vld [vmem:[#allocation12 + $0x10] sm:$0xf]
        %v1008 = vld [vmem:[#allocation12 + $0x14] sm:$0xf]
        %v1009 = vld [vmem:[#allocation12 + $0x18] sm:$0xf]
        %v1010 = vld [vmem:[#allocation12 + $0x1c] sm:$0xf]
        %v1011 = vld [vmem:[#allocation12 + $0x20] sm:$0xf]
        %v1012 = vld [vmem:[#allocation12 + $0x24] sm:$0xf]
        %v1013 = vld [vmem:[#allocation12 + $0x28] sm:$0xf]
        %v1014 = vld [vmem:[#allocation12 + $0x2c] sm:$0xf]
        %v1015 = vld [vmem:[#allocation12 + $0x30] sm:$0xf]
        %v1016 = vld [vmem:[#allocation12 + $0x34] sm:$0xf]
        %v1017 = vld [vmem:[#allocation12 + $0x38] sm:$0xf]
        %v1018 = vld [vmem:[#allocation12 + $0x3c] sm:$0xf]
        %v1019 = vld [vmem:[%s7] sm:$0x1]
        %v1021 = vperm.slane %v1019, 0
        %v1039 = vunpack.c.l.b16 %v1003
        %v1040 = vunpack.c.l.b16 %v1004
        %v1041 = vunpack.c.l.b16 %v1005
        %v1042 = vunpack.c.l.b16 %v1006
        %v1043 = vunpack.c.l.b16 %v1007
        %v1044 = vunpack.c.l.b16 %v1008
        %v1045 = vunpack.c.l.b16 %v1009
        %v1046 = vunpack.c.l.b16 %v1010
        %v1047 = vunpack.c.l.b16 %v1011
        %v1048 = vunpack.c.l.b16 %v1012
        %v1049 = vunpack.c.l.b16 %v1013
        %v1050 = vunpack.c.l.b16 %v1014
        %v1051 = vunpack.c.l.b16 %v1015
        %v1052 = vunpack.c.l.b16 %v1016
        %v1053 = vunpack.c.l.b16 %v1017
        %v1054 = vunpack.c.l.b16 %v1018
        %v1055 = vpack.c.b16 %v1040, %v1039
        %v1056 = vpack.c.b16 %v1042, %v1041
        %v1057 = vpack.c.b16 %v1044, %v1043
        %v1058 = vpack.c.b16 %v1046, %v1045
        %v1059 = vpack.c.b16 %v1048, %v1047
        %v1060 = vpack.c.b16 %v1050, %v1049
        %v1061 = vpack.c.b16 %v1052, %v1051
        %v1062 = vpack.c.b16 %v1054, %v1053
        %1071 = vmatpush.bf16.msra.mxu0 %v1062
        %1072 = vmatpush.bf16.msra.mxu0 %v1061
        %1073 = vmatpush.bf16.msra.mxu0 %v1060
        %1074 = vmatpush.bf16.msra.mxu0 %v1059
        %1075 = vmatpush.bf16.msra.mxu0 %v1058
        %1076 = vmatpush.bf16.msra.mxu0 %v1057
        %1077 = vmatpush.bf16.msra.mxu0 %v1056
        %1078 = vmatpush.bf16.msra.mxu0 %v1055
        %1079 = vmatmul.bf16.gmra.mxu0 %v995
        %v1080 = vpop.f32.mrf.mxu0
        %v1081 = vadd.f32 %v1021, %v1080
        %v1082 = vpop.f32.mrf.mxu0
        %v1083 = vadd.f32 %v1021, %v1082
        %1084 = vmatmul.bf16.gmra.mxu0 %v996
        %v1085 = vpop.f32.mrf.mxu0
        %v1086 = vadd.f32 %v1021, %v1085
        %v1087 = vpop.f32.mrf.mxu0
        %v1088 = vadd.f32 %v1021, %v1087
        %1089 = vmatmul.bf16.gmra.mxu0 %v997
        %v1090 = vpop.f32.mrf.mxu0
        %v1091 = vadd.f32 %v1021, %v1090
        %v1092 = vpop.f32.mrf.mxu0
        %v1093 = vadd.f32 %v1021, %v1092
        %1094 = vmatmul.bf16.gmra.mxu0 %v998
        %v1095 = vpop.f32.mrf.mxu0
        %v1096 = vadd.f32 %v1021, %v1095
        %v1097 = vpop.f32.mrf.mxu0
        %v1098 = vadd.f32 %v1021, %v1097
        %1099 = vmatmul.bf16.gmra.mxu0 %v999
        %v1100 = vpop.f32.mrf.mxu0
        %v1101 = vadd.f32 %v1021, %v1100
        %v1102 = vpop.f32.mrf.mxu0
        %v1103 = vadd.f32 %v1021, %v1102
        %1104 = vmatmul.bf16.gmra.mxu0 %v1000
        %v1105 = vpop.f32.mrf.mxu0
        %v1106 = vadd.f32 %v1021, %v1105
        %v1107 = vpop.f32.mrf.mxu0
        %v1108 = vadd.f32 %v1021, %v1107
        %1109 = vmatmul.bf16.gmra.mxu0 %v1001
        %v1110 = vpop.f32.mrf.mxu0
        %v1111 = vadd.f32 %v1021, %v1110
        %v1112 = vpop.f32.mrf.mxu0
        %v1113 = vadd.f32 %v1021, %v1112
        %1114 = vmatmul.bf16.gmra.mxu0 %v1002
        %v1115 = vpop.f32.mrf.mxu0
        %v1116 = vadd.f32 %v1021, %v1115
        %v1117 = vpop.f32.mrf.mxu0
        %v1118 = vadd.f32 %v1021, %v1117
        %1119 = vdwg.mxu0
        %v1120 = vmul.f32 %v1081, 0.17677669
        %v1121 = vmul.f32 %v1083, 0.17677669
        %v1122 = vmul.f32 %v1086, 0.17677669
        %v1123 = vmul.f32 %v1088, 0.17677669
        %v1124 = vmul.f32 %v1091, 0.17677669
        %v1125 = vmul.f32 %v1093, 0.17677669
        %v1126 = vmul.f32 %v1096, 0.17677669
        %v1127 = vmul.f32 %v1098, 0.17677669
        %v1128 = vmul.f32 %v1101, 0.17677669
        %v1129 = vmul.f32 %v1103, 0.17677669
        %v1130 = vmul.f32 %v1106, 0.17677669
        %v1131 = vmul.f32 %v1108, 0.17677669
        %v1132 = vmul.f32 %v1111, 0.17677669
        %v1133 = vmul.f32 %v1113, 0.17677669
        %v1134 = vmul.f32 %v1116, 0.17677669
        %v1135 = vmul.f32 %v1118, 0.17677669
        %v1136 = vpack.c.bf16 %v1120, %v1120
        %v1137 = vpack.c.bf16 %v1121, %v1121
        %v1138 = vpack.c.bf16 %v1122, %v1122
        %v1139 = vpack.c.bf16 %v1123, %v1123
        %v1140 = vpack.c.bf16 %v1124, %v1124
        %v1141 = vpack.c.bf16 %v1125, %v1125
        %v1142 = vpack.c.bf16 %v1126, %v1126
        %v1143 = vpack.c.bf16 %v1127, %v1127
        %v1144 = vpack.c.bf16 %v1128, %v1128
        %v1145 = vpack.c.bf16 %v1129, %v1129
        %v1146 = vpack.c.bf16 %v1130, %v1130
        %v1147 = vpack.c.bf16 %v1131, %v1131
        %v1148 = vpack.c.bf16 %v1132, %v1132
        %v1149 = vpack.c.bf16 %v1133, %v1133
        %v1150 = vpack.c.bf16 %v1134, %v1134
        %v1151 = vpack.c.bf16 %v1135, %v1135
        %v1152 = vld [vmem:[%s511] sm:$0xf]
        %v1153 = vld [vmem:[%s511 + $0x4] sm:$0xf]
        %v1154 = vld [vmem:[%s511 + $0x8] sm:$0xf]
        %v1155 = vld [vmem:[%s511 + $0xc] sm:$0xf]
        %v1156 = vld [vmem:[%s511 + $0x10] sm:$0xf]
        %v1157 = vld [vmem:[%s511 + $0x14] sm:$0xf]
        %v1158 = vld [vmem:[%s511 + $0x18] sm:$0xf]
        %v1159 = vld [vmem:[%s511 + $0x1c] sm:$0xf]
        %v1160 = vld [vmem:[%s511 + $0x20] sm:$0xf]
        %v1161 = vld [vmem:[%s511 + $0x24] sm:$0xf]
        %v1162 = vld [vmem:[%s511 + $0x28] sm:$0xf]
        %v1163 = vld [vmem:[%s511 + $0x2c] sm:$0xf]
        %v1164 = vld [vmem:[%s511 + $0x30] sm:$0xf]
        %v1165 = vld [vmem:[%s511 + $0x34] sm:$0xf]
        %v1166 = vld [vmem:[%s511 + $0x38] sm:$0xf]
        %v1167 = vld [vmem:[%s511 + $0x3c] sm:$0xf]
        %v1168 = vld [vmem:[%s521] sm:$0xf]
        %v1169 = vld [vmem:[%s521 + $0x4] sm:$0xf]
        %v1170 = vld [vmem:[%s521 + $0x8] sm:$0xf]
        %v1171 = vld [vmem:[%s521 + $0xc] sm:$0xf]
        %v1172 = vld [vmem:[%s521 + $0x10] sm:$0xf]
        %v1173 = vld [vmem:[%s521 + $0x14] sm:$0xf]
        %v1174 = vld [vmem:[%s521 + $0x18] sm:$0xf]
        %v1175 = vld [vmem:[%s521 + $0x1c] sm:$0xf]
        %v1176 = vld [vmem:[%s521 + $0x20] sm:$0xf]
        %v1177 = vld [vmem:[%s521 + $0x24] sm:$0xf]
        %v1178 = vld [vmem:[%s521 + $0x28] sm:$0xf]
        %v1179 = vld [vmem:[%s521 + $0x2c] sm:$0xf]
        %v1180 = vld [vmem:[%s521 + $0x30] sm:$0xf]
        %v1181 = vld [vmem:[%s521 + $0x34] sm:$0xf]
        %v1182 = vld [vmem:[%s521 + $0x38] sm:$0xf]
        %v1183 = vld [vmem:[%s521 + $0x3c] sm:$0xf]
        %v1184 = vld [vmem:[%s593] sm:$0x1]
        %v1186 = vperm.slane %v1184, 0
        %v1204 = vunpack.c.l.b16 %v1136
        %v1205 = vunpack.c.l.b16 %v1137
        %v1206 = vunpack.c.l.b16 %v1138
        %v1207 = vunpack.c.l.b16 %v1139
        %v1208 = vunpack.c.l.b16 %v1140
        %v1209 = vunpack.c.l.b16 %v1141
        %v1210 = vunpack.c.l.b16 %v1142
        %v1211 = vunpack.c.l.b16 %v1143
        %v1212 = vunpack.c.l.b16 %v1144
        %v1213 = vunpack.c.l.b16 %v1145
        %v1214 = vunpack.c.l.b16 %v1146
        %v1215 = vunpack.c.l.b16 %v1147
        %v1216 = vunpack.c.l.b16 %v1148
        %v1217 = vunpack.c.l.b16 %v1149
        %v1218 = vunpack.c.l.b16 %v1150
        %v1219 = vunpack.c.l.b16 %v1151
        %v1220 = vpack.c.b16 %v1205, %v1204
        %v1221 = vpack.c.b16 %v1207, %v1206
        %v1222 = vpack.c.b16 %v1209, %v1208
        %v1223 = vpack.c.b16 %v1211, %v1210
        %v1224 = vpack.c.b16 %v1213, %v1212
        %v1225 = vpack.c.b16 %v1215, %v1214
        %v1226 = vpack.c.b16 %v1217, %v1216
        %v1227 = vpack.c.b16 %v1219, %v1218
        %v1244 = vunpack.c.l.b16 %v1152
        %v1245 = vunpack.c.l.b16 %v1153
        %v1246 = vunpack.c.l.b16 %v1154
        %v1247 = vunpack.c.l.b16 %v1155
        %v1248 = vunpack.c.l.b16 %v1156
        %v1249 = vunpack.c.l.b16 %v1157
        %v1250 = vunpack.c.l.b16 %v1158
        %v1251 = vunpack.c.l.b16 %v1159
        %v1252 = vunpack.c.l.b16 %v1160
        %v1253 = vunpack.c.l.b16 %v1161
        %v1254 = vunpack.c.l.b16 %v1162
        %v1255 = vunpack.c.l.b16 %v1163
        %v1256 = vunpack.c.l.b16 %v1164
        %v1257 = vunpack.c.l.b16 %v1165
        %v1258 = vunpack.c.l.b16 %v1166
        %v1259 = vunpack.c.l.b16 %v1167
        %v1260 = vpack.c.b16 %v1245, %v1244
        %v1261 = vpack.c.b16 %v1247, %v1246
        %v1262 = vpack.c.b16 %v1249, %v1248
        %v1263 = vpack.c.b16 %v1251, %v1250
        %v1264 = vpack.c.b16 %v1253, %v1252
        %v1265 = vpack.c.b16 %v1255, %v1254
        %v1266 = vpack.c.b16 %v1257, %v1256
        %v1267 = vpack.c.b16 %v1259, %v1258
        %vm1268 = vcmask 261120
        %v1270 = vsel %vm1268, %v1220, 0
        %v1273 = vsel %vm1268, %v1221, 0
        %v1276 = vsel %vm1268, %v1222, 0
        %v1279 = vsel %vm1268, %v1223, 0
        %v1282 = vsel %vm1268, %v1224, 0
        %v1285 = vsel %vm1268, %v1225, 0
        %v1288 = vsel %vm1268, %v1226, 0
        %v1291 = vsel %vm1268, %v1227, 0
        %v1294 = vsel %vm1268, %v1260, 0
        %v1297 = vsel %vm1268, %v1261, 0
        %v1300 = vsel %vm1268, %v1262, 0
        %v1303 = vsel %vm1268, %v1263, 0
        %v1306 = vsel %vm1268, %v1264, 0
        %v1309 = vsel %vm1268, %v1265, 0
        %v1312 = vsel %vm1268, %v1266, 0
        %v1315 = vsel %vm1268, %v1267, 0
        %1317 = vmatpush.bf16.xpose.msra.mxu0 %v1315
        %1318 = vmatpush.bf16.xpose.msra.mxu0 %v1312
        %1319 = vmatpush.bf16.xpose.msra.mxu0 %v1309
        %1320 = vmatpush.bf16.xpose.msra.mxu0 %v1306
        %1321 = vmatpush.bf16.xpose.msra.mxu0 %v1303
        %1322 = vmatpush.bf16.xpose.msra.mxu0 %v1300
        %1323 = vmatpush.bf16.xpose.msra.mxu0 %v1297
        %1324 = vmatpush.bf16.xpose.msra.mxu0 %v1294
        %1325 = vmatmul.bf16.gmra.mxu0 %v1270
        %v1326 = vpop.f32.mrf.mxu0
        %v1327 = vadd.f32 %v1186, %v1326
        %v1328 = vpop.f32.mrf.mxu0
        %v1329 = vadd.f32 %v1186, %v1328
        %1330 = vmatmul.bf16.gmra.mxu0 %v1273
        %v1331 = vpop.f32.mrf.mxu0
        %v1332 = vadd.f32 %v1186, %v1331
        %v1333 = vpop.f32.mrf.mxu0
        %v1334 = vadd.f32 %v1186, %v1333
        %1335 = vmatmul.bf16.gmra.mxu0 %v1276
        %v1336 = vpop.f32.mrf.mxu0
        %v1337 = vadd.f32 %v1186, %v1336
        %v1338 = vpop.f32.mrf.mxu0
        %v1339 = vadd.f32 %v1186, %v1338
        %1340 = vmatmul.bf16.gmra.mxu0 %v1279
        %v1341 = vpop.f32.mrf.mxu0
        %v1342 = vadd.f32 %v1186, %v1341
        %v1343 = vpop.f32.mrf.mxu0
        %v1344 = vadd.f32 %v1186, %v1343
        %1345 = vmatmul.bf16.gmra.mxu0 %v1282
        %v1346 = vpop.f32.mrf.mxu0
        %v1347 = vadd.f32 %v1186, %v1346
        %v1348 = vpop.f32.mrf.mxu0
        %v1349 = vadd.f32 %v1186, %v1348
        %1350 = vmatmul.bf16.gmra.mxu0 %v1285
        %v1351 = vpop.f32.mrf.mxu0
        %v1352 = vadd.f32 %v1186, %v1351
        %v1353 = vpop.f32.mrf.mxu0
        %v1354 = vadd.f32 %v1186, %v1353
        %1355 = vmatmul.bf16.gmra.mxu0 %v1288
        %v1356 = vpop.f32.mrf.mxu0
        %v1357 = vadd.f32 %v1186, %v1356
        %v1358 = vpop.f32.mrf.mxu0
        %v1359 = vadd.f32 %v1186, %v1358
        %1360 = vmatmul.bf16.gmra.mxu0 %v1291
        %v1361 = vpop.f32.mrf.mxu0
        %v1362 = vadd.f32 %v1186, %v1361
        %v1363 = vpop.f32.mrf.mxu0
        %v1364 = vadd.f32 %v1186, %v1363
        %1365 = vdwg.mxu0
        %1366 = vmax.xlane.f32.xlu0 %v1327
        %v1367 = vpop.xlane.xlu0 %1366
        %1368 = vmax.xlane.f32.xlu0 %v1329
        %v1369 = vpop.xlane.xlu0 %1368
        %1370 = vmax.xlane.f32.xlu0 %v1332
        %v1371 = vpop.xlane.xlu0 %1370
        %1372 = vmax.xlane.f32.xlu0 %v1334
        %v1373 = vpop.xlane.xlu0 %1372
        %1374 = vmax.xlane.f32.xlu0 %v1337
        %v1375 = vpop.xlane.xlu0 %1374
        %1376 = vmax.xlane.f32.xlu0 %v1339
        %v1377 = vpop.xlane.xlu0 %1376
        %1378 = vmax.xlane.f32.xlu0 %v1342
        %v1379 = vpop.xlane.xlu0 %1378
        %1380 = vmax.xlane.f32.xlu0 %v1344
        %v1381 = vpop.xlane.xlu0 %1380
        %1382 = vmax.xlane.f32.xlu0 %v1347
        %v1383 = vpop.xlane.xlu0 %1382
        %1384 = vmax.xlane.f32.xlu0 %v1349
        %v1385 = vpop.xlane.xlu0 %1384
        %1386 = vmax.xlane.f32.xlu0 %v1352
        %v1387 = vpop.xlane.xlu0 %1386
        %1388 = vmax.xlane.f32.xlu0 %v1354
        %v1389 = vpop.xlane.xlu0 %1388
        %1390 = vmax.xlane.f32.xlu0 %v1357
        %v1391 = vpop.xlane.xlu0 %1390
        %1392 = vmax.xlane.f32.xlu0 %v1359
        %v1393 = vpop.xlane.xlu0 %1392
        %1394 = vmax.xlane.f32.xlu0 %v1362
        %v1395 = vpop.xlane.xlu0 %1394
        %1396 = vmax.xlane.f32.xlu0 %v1364
        %v1397 = vpop.xlane.xlu0 %1396
        %v1398 = vsub.f32 %v1327, %v1367
        %v1399 = vsub.f32 %v1329, %v1369
        %v1400 = vsub.f32 %v1332, %v1371
        %v1401 = vsub.f32 %v1334, %v1373
        %v1402 = vsub.f32 %v1337, %v1375
        %v1403 = vsub.f32 %v1339, %v1377
        %v1404 = vsub.f32 %v1342, %v1379
        %v1405 = vsub.f32 %v1344, %v1381
        %v1406 = vsub.f32 %v1347, %v1383
        %v1407 = vsub.f32 %v1349, %v1385
        %v1408 = vsub.f32 %v1352, %v1387
        %v1409 = vsub.f32 %v1354, %v1389
        %v1410 = vsub.f32 %v1357, %v1391
        %v1411 = vsub.f32 %v1359, %v1393
        %v1412 = vsub.f32 %v1362, %v1395
        %v1413 = vsub.f32 %v1364, %v1397
        %v1414 = vmul.f32 %v1398, 1.442695
        %v1415 = vpow.pop %v1414
        %v1416 = vmul.f32 %v1399, 1.442695
        %v1417 = vpow.pop %v1416
        %v1418 = vmul.f32 %v1400, 1.442695
        %v1419 = vpow.pop %v1418
        %v1420 = vmul.f32 %v1401, 1.442695
        %v1421 = vpow.pop %v1420
        %v1422 = vmul.f32 %v1402, 1.442695
        %v1423 = vpow.pop %v1422
        %v1424 = vmul.f32 %v1403, 1.442695
        %v1425 = vpow.pop %v1424
        %v1426 = vmul.f32 %v1404, 1.442695
        %v1427 = vpow.pop %v1426
        %v1428 = vmul.f32 %v1405, 1.442695
        %v1429 = vpow.pop %v1428
        %v1430 = vmul.f32 %v1406, 1.442695
        %v1431 = vpow.pop %v1430
        %v1432 = vmul.f32 %v1407, 1.442695
        %v1433 = vpow.pop %v1432
        %v1434 = vmul.f32 %v1408, 1.442695
        %v1435 = vpow.pop %v1434
        %v1436 = vmul.f32 %v1409, 1.442695
        %v1437 = vpow.pop %v1436
        %v1438 = vmul.f32 %v1410, 1.442695
        %v1439 = vpow.pop %v1438
        %v1440 = vmul.f32 %v1411, 1.442695
        %v1441 = vpow.pop %v1440
        %v1442 = vmul.f32 %v1412, 1.442695
        %v1443 = vpow.pop %v1442
        %v1444 = vmul.f32 %v1413, 1.442695
        %v1445 = vpow.pop %v1444
        %1446 = vadd.xlane.f32.xlu0 %v1415
        %v1447 = vpop.xlane.xlu0 %1446
        %1448 = vadd.xlane.f32.xlu0 %v1417
        %v1449 = vpop.xlane.xlu0 %1448
        %1450 = vadd.xlane.f32.xlu0 %v1419
        %v1451 = vpop.xlane.xlu0 %1450
        %1452 = vadd.xlane.f32.xlu0 %v1421
        %v1453 = vpop.xlane.xlu0 %1452
        %1454 = vadd.xlane.f32.xlu0 %v1423
        %v1455 = vpop.xlane.xlu0 %1454
        %1456 = vadd.xlane.f32.xlu0 %v1425
        %v1457 = vpop.xlane.xlu0 %1456
        %1458 = vadd.xlane.f32.xlu0 %v1427
        %v1459 = vpop.xlane.xlu0 %1458
        %1460 = vadd.xlane.f32.xlu0 %v1429
        %v1461 = vpop.xlane.xlu0 %1460
        %1462 = vadd.xlane.f32.xlu0 %v1431
        %v1463 = vpop.xlane.xlu0 %1462
        %1464 = vadd.xlane.f32.xlu0 %v1433
        %v1465 = vpop.xlane.xlu0 %1464
        %1466 = vadd.xlane.f32.xlu0 %v1435
        %v1467 = vpop.xlane.xlu0 %1466
        %1468 = vadd.xlane.f32.xlu0 %v1437
        %v1469 = vpop.xlane.xlu0 %1468
        %1470 = vadd.xlane.f32.xlu0 %v1439
        %v1471 = vpop.xlane.xlu0 %1470
        %1472 = vadd.xlane.f32.xlu0 %v1441
        %v1473 = vpop.xlane.xlu0 %1472
        %1474 = vadd.xlane.f32.xlu0 %v1443
        %v1475 = vpop.xlane.xlu0 %1474
        %1476 = vadd.xlane.f32.xlu0 %v1445
        %v1477 = vpop.xlane.xlu0 %1476
        %v1478 = vrcp.pop %v1447
        %v1479 = vrcp.pop %v1449
        %v1480 = vrcp.pop %v1451
        %v1481 = vrcp.pop %v1453
        %v1482 = vrcp.pop %v1455
        %v1483 = vrcp.pop %v1457
        %v1484 = vrcp.pop %v1459
        %v1485 = vrcp.pop %v1461
        %v1486 = vrcp.pop %v1463
        %v1487 = vrcp.pop %v1465
        %v1488 = vrcp.pop %v1467
        %v1489 = vrcp.pop %v1469
        %v1490 = vrcp.pop %v1471
        %v1491 = vrcp.pop %v1473
        %v1492 = vrcp.pop %v1475
        %v1493 = vrcp.pop %v1477
        %v1494 = vpack.c.bf16 %v1417, %v1415
        %v1495 = vpack.c.bf16 %v1421, %v1419
        %v1496 = vpack.c.bf16 %v1425, %v1423
        %v1497 = vpack.c.bf16 %v1429, %v1427
        %v1498 = vpack.c.bf16 %v1433, %v1431
        %v1499 = vpack.c.bf16 %v1437, %v1435
        %v1500 = vpack.c.bf16 %v1441, %v1439
        %v1501 = vpack.c.bf16 %v1445, %v1443
        %v1518 = vunpack.c.l.b16 %v1168
        %v1519 = vunpack.c.l.b16 %v1169
        %v1520 = vunpack.c.l.b16 %v1170
        %v1521 = vunpack.c.l.b16 %v1171
        %v1522 = vunpack.c.l.b16 %v1172
        %v1523 = vunpack.c.l.b16 %v1173
        %v1524 = vunpack.c.l.b16 %v1174
        %v1525 = vunpack.c.l.b16 %v1175
        %v1526 = vunpack.c.l.b16 %v1176
        %v1527 = vunpack.c.l.b16 %v1177
        %v1528 = vunpack.c.l.b16 %v1178
        %v1529 = vunpack.c.l.b16 %v1179
        %v1530 = vunpack.c.l.b16 %v1180
        %v1531 = vunpack.c.l.b16 %v1181
        %v1532 = vunpack.c.l.b16 %v1182
        %v1533 = vunpack.c.l.b16 %v1183
        %v1534 = vpack.c.b16 %v1519, %v1518
        %v1535 = vpack.c.b16 %v1521, %v1520
        %v1536 = vpack.c.b16 %v1523, %v1522
        %v1537 = vpack.c.b16 %v1525, %v1524
        %v1538 = vpack.c.b16 %v1527, %v1526
        %v1539 = vpack.c.b16 %v1529, %v1528
        %v1540 = vpack.c.b16 %v1531, %v1530
        %v1541 = vpack.c.b16 %v1533, %v1532
        %1550 = vmatpush.bf16.msra.mxu0 %v1541
        %1551 = vmatpush.bf16.msra.mxu0 %v1540
        %1552 = vmatpush.bf16.msra.mxu0 %v1539
        %1553 = vmatpush.bf16.msra.mxu0 %v1538
        %1554 = vmatpush.bf16.msra.mxu0 %v1537
        %1555 = vmatpush.bf16.msra.mxu0 %v1536
        %1556 = vmatpush.bf16.msra.mxu0 %v1535
        %1557 = vmatpush.bf16.msra.mxu0 %v1534
        %1558 = vmatmul.bf16.gmra.mxu0 %v1494
        %v1559 = vpop.f32.mrf.mxu0
        %v1560 = vadd.f32 0.0, %v1559
        %v1561 = vpop.f32.mrf.mxu0
        %v1562 = vadd.f32 0.0, %v1561
        %1563 = vmatmul.bf16.gmra.mxu0 %v1495
        %v1564 = vpop.f32.mrf.mxu0
        %v1565 = vadd.f32 0.0, %v1564
        %v1566 = vpop.f32.mrf.mxu0
        %v1567 = vadd.f32 0.0, %v1566
        %1568 = vmatmul.bf16.gmra.mxu0 %v1496
        %v1569 = vpop.f32.mrf.mxu0
        %v1570 = vadd.f32 0.0, %v1569
        %v1571 = vpop.f32.mrf.mxu0
        %v1572 = vadd.f32 0.0, %v1571
        %1573 = vmatmul.bf16.gmra.mxu0 %v1497
        %v1574 = vpop.f32.mrf.mxu0
        %v1575 = vadd.f32 0.0, %v1574
        %v1576 = vpop.f32.mrf.mxu0
        %v1577 = vadd.f32 0.0, %v1576
        %1578 = vmatmul.bf16.gmra.mxu0 %v1498
        %v1579 = vpop.f32.mrf.mxu0
        %v1580 = vadd.f32 0.0, %v1579
        %v1581 = vpop.f32.mrf.mxu0
        %v1582 = vadd.f32 0.0, %v1581
        %1583 = vmatmul.bf16.gmra.mxu0 %v1499
        %v1584 = vpop.f32.mrf.mxu0
        %v1585 = vadd.f32 0.0, %v1584
        %v1586 = vpop.f32.mrf.mxu0
        %v1587 = vadd.f32 0.0, %v1586
        %1588 = vmatmul.bf16.gmra.mxu0 %v1500
        %v1589 = vpop.f32.mrf.mxu0
        %v1590 = vadd.f32 0.0, %v1589
        %v1591 = vpop.f32.mrf.mxu0
        %v1592 = vadd.f32 0.0, %v1591
        %1593 = vmatmul.bf16.gmra.mxu0 %v1501
        %v1594 = vpop.f32.mrf.mxu0
        %v1595 = vadd.f32 0.0, %v1594
        %v1596 = vpop.f32.mrf.mxu0
        %v1597 = vadd.f32 0.0, %v1596
        %1598 = vdwg.mxu0
        %v1599 = vmul.f32 %v1560, %v1478
        %v1600 = vmul.f32 %v1562, %v1479
        %v1601 = vmul.f32 %v1565, %v1480
        %v1602 = vmul.f32 %v1567, %v1481
        %v1603 = vmul.f32 %v1570, %v1482
        %v1604 = vmul.f32 %v1572, %v1483
        %v1605 = vmul.f32 %v1575, %v1484
        %v1606 = vmul.f32 %v1577, %v1485
        %v1607 = vmul.f32 %v1580, %v1486
        %v1608 = vmul.f32 %v1582, %v1487
        %v1609 = vmul.f32 %v1585, %v1488
        %v1610 = vmul.f32 %v1587, %v1489
        %v1611 = vmul.f32 %v1590, %v1490
        %v1612 = vmul.f32 %v1592, %v1491
        %v1613 = vmul.f32 %v1595, %v1492
        %v1614 = vmul.f32 %v1597, %v1493
        %v1615 = vpack.c.bf16 %v1599, %v1599
        %v1616 = vpack.c.bf16 %v1600, %v1600
        %v1617 = vpack.c.bf16 %v1601, %v1601
        %v1618 = vpack.c.bf16 %v1602, %v1602
        %v1619 = vpack.c.bf16 %v1603, %v1603
        %v1620 = vpack.c.bf16 %v1604, %v1604
        %v1621 = vpack.c.bf16 %v1605, %v1605
        %v1622 = vpack.c.bf16 %v1606, %v1606
        %v1623 = vpack.c.bf16 %v1607, %v1607
        %v1624 = vpack.c.bf16 %v1608, %v1608
        %v1625 = vpack.c.bf16 %v1609, %v1609
        %v1626 = vpack.c.bf16 %v1610, %v1610
        %v1627 = vpack.c.bf16 %v1611, %v1611
        %v1628 = vpack.c.bf16 %v1612, %v1612
        %v1629 = vpack.c.bf16 %v1613, %v1613
        %v1630 = vpack.c.bf16 %v1614, %v1614
        %vm1631 = vcmask 257024
        %1632 = vst.msk [vmem:[#allocation2] sm:$0xf] %vm1631, %v1615
        %1633 = vst.msk [vmem:[#allocation2 + $0x4] sm:$0xf] %vm1631, %v1616
        %1634 = vst.msk [vmem:[#allocation2 + $0x8] sm:$0xf] %vm1631, %v1617
        %1635 = vst.msk [vmem:[#allocation2 + $0xc] sm:$0xf] %vm1631, %v1618
        %1636 = vst.msk [vmem:[#allocation2 + $0x10] sm:$0xf] %vm1631, %v1619
        %1637 = vst.msk [vmem:[#allocation2 + $0x14] sm:$0xf] %vm1631, %v1620
        %1638 = vst.msk [vmem:[#allocation2 + $0x18] sm:$0xf] %vm1631, %v1621
        %1639 = vst.msk [vmem:[#allocation2 + $0x1c] sm:$0xf] %vm1631, %v1622
        %1640 = vst.msk [vmem:[#allocation2 + $0x20] sm:$0xf] %vm1631, %v1623
        %1641 = vst.msk [vmem:[#allocation2 + $0x24] sm:$0xf] %vm1631, %v1624
        %1642 = vst.msk [vmem:[#allocation2 + $0x28] sm:$0xf] %vm1631, %v1625
        %1643 = vst.msk [vmem:[#allocation2 + $0x2c] sm:$0xf] %vm1631, %v1626
        %1644 = vst.msk [vmem:[#allocation2 + $0x30] sm:$0xf] %vm1631, %v1627
        %1645 = vst.msk [vmem:[#allocation2 + $0x34] sm:$0xf] %vm1631, %v1628
        %1646 = vst.msk [vmem:[#allocation2 + $0x38] sm:$0xf] %vm1631, %v1629
        %1647 = vst.msk [vmem:[#allocation2 + $0x3c] sm:$0xf] %vm1631, %v1630
        %1648 = vrot.lane.b32.xlu0 %v1220, 96
        %v1649 = vpop.permute.xlu0 %1648
        %1650 = vrot.lane.b32.xlu0 %v1221, 96
        %v1651 = vpop.permute.xlu0 %1650
        %1652 = vrot.lane.b32.xlu0 %v1222, 96
        %v1653 = vpop.permute.xlu0 %1652
        %1654 = vrot.lane.b32.xlu0 %v1223, 96
        %v1655 = vpop.permute.xlu0 %1654
        %1656 = vrot.lane.b32.xlu0 %v1224, 96
        %v1657 = vpop.permute.xlu0 %1656
        %1658 = vrot.lane.b32.xlu0 %v1225, 96
        %v1659 = vpop.permute.xlu0 %1658
        %1660 = vrot.lane.b32.xlu0 %v1226, 96
        %v1661 = vpop.permute.xlu0 %1660
        %1662 = vrot.lane.b32.xlu0 %v1227, 96
        %v1663 = vpop.permute.xlu0 %1662
        %1664 = vrot.lane.b32.xlu0 %v1260, 96
        %v1665 = vpop.permute.xlu0 %1664
        %1666 = vrot.lane.b32.xlu0 %v1261, 96
        %v1667 = vpop.permute.xlu0 %1666
        %1668 = vrot.lane.b32.xlu0 %v1262, 96
        %v1669 = vpop.permute.xlu0 %1668
        %1670 = vrot.lane.b32.xlu0 %v1263, 96
        %v1671 = vpop.permute.xlu0 %1670
        %1672 = vrot.lane.b32.xlu0 %v1264, 96
        %v1673 = vpop.permute.xlu0 %1672
        %1674 = vrot.lane.b32.xlu0 %v1265, 96
        %v1675 = vpop.permute.xlu0 %1674
        %1676 = vrot.lane.b32.xlu0 %v1266, 96
        %v1677 = vpop.permute.xlu0 %1676
        %1678 = vrot.lane.b32.xlu0 %v1267, 96
        %v1679 = vpop.permute.xlu0 %1678
        %v1681 = vsel %vm1268, %v1649, 0
        %v1684 = vsel %vm1268, %v1651, 0
        %v1687 = vsel %vm1268, %v1653, 0
        %v1690 = vsel %vm1268, %v1655, 0
        %v1693 = vsel %vm1268, %v1657, 0
        %v1696 = vsel %vm1268, %v1659, 0
        %v1699 = vsel %vm1268, %v1661, 0
        %v1702 = vsel %vm1268, %v1663, 0
        %v1705 = vsel %vm1268, %v1665, 0
        %v1708 = vsel %vm1268, %v1667, 0
        %v1711 = vsel %vm1268, %v1669, 0
        %v1714 = vsel %vm1268, %v1671, 0
        %v1717 = vsel %vm1268, %v1673, 0
        %v1720 = vsel %vm1268, %v1675, 0
        %v1723 = vsel %vm1268, %v1677, 0
        %v1726 = vsel %vm1268, %v1679, 0
        %1728 = vmatpush.bf16.xpose.msra.mxu0 %v1726
        %1729 = vmatpush.bf16.xpose.msra.mxu0 %v1723
        %1730 = vmatpush.bf16.xpose.msra.mxu0 %v1720
        %1731 = vmatpush.bf16.xpose.msra.mxu0 %v1717
        %1732 = vmatpush.bf16.xpose.msra.mxu0 %v1714
        %1733 = vmatpush.bf16.xpose.msra.mxu0 %v1711
        %1734 = vmatpush.bf16.xpose.msra.mxu0 %v1708
        %1735 = vmatpush.bf16.xpose.msra.mxu0 %v1705
        %1736 = vmatmul.bf16.gmra.mxu0 %v1681
        %v1737 = vpop.f32.mrf.mxu0
        %v1738 = vadd.f32 %v1186, %v1737
        %v1739 = vpop.f32.mrf.mxu0
        %v1740 = vadd.f32 %v1186, %v1739
        %1741 = vmatmul.bf16.gmra.mxu0 %v1684
        %v1742 = vpop.f32.mrf.mxu0
        %v1743 = vadd.f32 %v1186, %v1742
        %v1744 = vpop.f32.mrf.mxu0
        %v1745 = vadd.f32 %v1186, %v1744
        %1746 = vmatmul.bf16.gmra.mxu0 %v1687
        %v1747 = vpop.f32.mrf.mxu0
        %v1748 = vadd.f32 %v1186, %v1747
        %v1749 = vpop.f32.mrf.mxu0
        %v1750 = vadd.f32 %v1186, %v1749
        %1751 = vmatmul.bf16.gmra.mxu0 %v1690
        %v1752 = vpop.f32.mrf.mxu0
        %v1753 = vadd.f32 %v1186, %v1752
        %v1754 = vpop.f32.mrf.mxu0
        %v1755 = vadd.f32 %v1186, %v1754
        %1756 = vmatmul.bf16.gmra.mxu0 %v1693
        %v1757 = vpop.f32.mrf.mxu0
        %v1758 = vadd.f32 %v1186, %v1757
        %v1759 = vpop.f32.mrf.mxu0
        %v1760 = vadd.f32 %v1186, %v1759
        %1761 = vmatmul.bf16.gmra.mxu0 %v1696
        %v1762 = vpop.f32.mrf.mxu0
        %v1763 = vadd.f32 %v1186, %v1762
        %v1764 = vpop.f32.mrf.mxu0
        %v1765 = vadd.f32 %v1186, %v1764
        %1766 = vmatmul.bf16.gmra.mxu0 %v1699
        %v1767 = vpop.f32.mrf.mxu0
        %v1768 = vadd.f32 %v1186, %v1767
        %v1769 = vpop.f32.mrf.mxu0
        %v1770 = vadd.f32 %v1186, %v1769
        %1771 = vmatmul.bf16.gmra.mxu0 %v1702
        %v1772 = vpop.f32.mrf.mxu0
        %v1773 = vadd.f32 %v1186, %v1772
        %v1774 = vpop.f32.mrf.mxu0
        %v1775 = vadd.f32 %v1186, %v1774
        %1776 = vdwg.mxu0
        %1777 = vmax.xlane.f32.xlu0 %v1738
        %v1778 = vpop.xlane.xlu0 %1777
        %1779 = vmax.xlane.f32.xlu0 %v1740
        %v1780 = vpop.xlane.xlu0 %1779
        %1781 = vmax.xlane.f32.xlu0 %v1743
        %v1782 = vpop.xlane.xlu0 %1781
        %1783 = vmax.xlane.f32.xlu0 %v1745
        %v1784 = vpop.xlane.xlu0 %1783
        %1785 = vmax.xlane.f32.xlu0 %v1748
        %v1786 = vpop.xlane.xlu0 %1785
        %1787 = vmax.xlane.f32.xlu0 %v1750
        %v1788 = vpop.xlane.xlu0 %1787
        %1789 = vmax.xlane.f32.xlu0 %v1753
        %v1790 = vpop.xlane.xlu0 %1789
        %1791 = vmax.xlane.f32.xlu0 %v1755
        %v1792 = vpop.xlane.xlu0 %1791
        %1793 = vmax.xlane.f32.xlu0 %v1758
        %v1794 = vpop.xlane.xlu0 %1793
        %1795 = vmax.xlane.f32.xlu0 %v1760
        %v1796 = vpop.xlane.xlu0 %1795
        %1797 = vmax.xlane.f32.xlu0 %v1763
        %v1798 = vpop.xlane.xlu0 %1797
        %1799 = vmax.xlane.f32.xlu0 %v1765
        %v1800 = vpop.xlane.xlu0 %1799
        %1801 = vmax.xlane.f32.xlu0 %v1768
        %v1802 = vpop.xlane.xlu0 %1801
        %1803 = vmax.xlane.f32.xlu0 %v1770
        %v1804 = vpop.xlane.xlu0 %1803
        %1805 = vmax.xlane.f32.xlu0 %v1773
        %v1806 = vpop.xlane.xlu0 %1805
        %1807 = vmax.xlane.f32.xlu0 %v1775
        %v1808 = vpop.xlane.xlu0 %1807
        %v1809 = vsub.f32 %v1738, %v1778
        %v1810 = vsub.f32 %v1740, %v1780
        %v1811 = vsub.f32 %v1743, %v1782
        %v1812 = vsub.f32 %v1745, %v1784
        %v1813 = vsub.f32 %v1748, %v1786
        %v1814 = vsub.f32 %v1750, %v1788
        %v1815 = vsub.f32 %v1753, %v1790
        %v1816 = vsub.f32 %v1755, %v1792
        %v1817 = vsub.f32 %v1758, %v1794
        %v1818 = vsub.f32 %v1760, %v1796
        %v1819 = vsub.f32 %v1763, %v1798
        %v1820 = vsub.f32 %v1765, %v1800
        %v1821 = vsub.f32 %v1768, %v1802
        %v1822 = vsub.f32 %v1770, %v1804
        %v1823 = vsub.f32 %v1773, %v1806
        %v1824 = vsub.f32 %v1775, %v1808
        %v1825 = vmul.f32 %v1809, 1.442695
        %v1826 = vpow.pop %v1825
        %v1827 = vmul.f32 %v1810, 1.442695
        %v1828 = vpow.pop %v1827
        %v1829 = vmul.f32 %v1811, 1.442695
        %v1830 = vpow.pop %v1829
        %v1831 = vmul.f32 %v1812, 1.442695
        %v1832 = vpow.pop %v1831
        %v1833 = vmul.f32 %v1813, 1.442695
        %v1834 = vpow.pop %v1833
        %v1835 = vmul.f32 %v1814, 1.442695
        %v1836 = vpow.pop %v1835
        %v1837 = vmul.f32 %v1815, 1.442695
        %v1838 = vpow.pop %v1837
        %v1839 = vmul.f32 %v1816, 1.442695
        %v1840 = vpow.pop %v1839
        %v1841 = vmul.f32 %v1817, 1.442695
        %v1842 = vpow.pop %v1841
        %v1843 = vmul.f32 %v1818, 1.442695
        %v1844 = vpow.pop %v1843
        %v1845 = vmul.f32 %v1819, 1.442695
        %v1846 = vpow.pop %v1845
        %v1847 = vmul.f32 %v1820, 1.442695
        %v1848 = vpow.pop %v1847
        %v1849 = vmul.f32 %v1821, 1.442695
        %v1850 = vpow.pop %v1849
        %v1851 = vmul.f32 %v1822, 1.442695
        %v1852 = vpow.pop %v1851
        %v1853 = vmul.f32 %v1823, 1.442695
        %v1854 = vpow.pop %v1853
        %v1855 = vmul.f32 %v1824, 1.442695
        %v1856 = vpow.pop %v1855
        %1857 = vadd.xlane.f32.xlu0 %v1826
        %v1858 = vpop.xlane.xlu0 %1857
        %1859 = vadd.xlane.f32.xlu0 %v1828
        %v1860 = vpop.xlane.xlu0 %1859
        %1861 = vadd.xlane.f32.xlu0 %v1830
        %v1862 = vpop.xlane.xlu0 %1861
        %1863 = vadd.xlane.f32.xlu0 %v1832
        %v1864 = vpop.xlane.xlu0 %1863
        %1865 = vadd.xlane.f32.xlu0 %v1834
        %v1866 = vpop.xlane.xlu0 %1865
        %1867 = vadd.xlane.f32.xlu0 %v1836
        %v1868 = vpop.xlane.xlu0 %1867
        %1869 = vadd.xlane.f32.xlu0 %v1838
        %v1870 = vpop.xlane.xlu0 %1869
        %1871 = vadd.xlane.f32.xlu0 %v1840
        %v1872 = vpop.xlane.xlu0 %1871
        %1873 = vadd.xlane.f32.xlu0 %v1842
        %v1874 = vpop.xlane.xlu0 %1873
        %1875 = vadd.xlane.f32.xlu0 %v1844
        %v1876 = vpop.xlane.xlu0 %1875
        %1877 = vadd.xlane.f32.xlu0 %v1846
        %v1878 = vpop.xlane.xlu0 %1877
        %1879 = vadd.xlane.f32.xlu0 %v1848
        %v1880 = vpop.xlane.xlu0 %1879
        %1881 = vadd.xlane.f32.xlu0 %v1850
        %v1882 = vpop.xlane.xlu0 %1881
        %1883 = vadd.xlane.f32.xlu0 %v1852
        %v1884 = vpop.xlane.xlu0 %1883
        %1885 = vadd.xlane.f32.xlu0 %v1854
        %v1886 = vpop.xlane.xlu0 %1885
        %1887 = vadd.xlane.f32.xlu0 %v1856
        %v1888 = vpop.xlane.xlu0 %1887
        %v1889 = vrcp.pop %v1858
        %v1890 = vrcp.pop %v1860
        %v1891 = vrcp.pop %v1862
        %v1892 = vrcp.pop %v1864
        %v1893 = vrcp.pop %v1866
        %v1894 = vrcp.pop %v1868
        %v1895 = vrcp.pop %v1870
        %v1896 = vrcp.pop %v1872
        %v1897 = vrcp.pop %v1874
        %v1898 = vrcp.pop %v1876
        %v1899 = vrcp.pop %v1878
        %v1900 = vrcp.pop %v1880
        %v1901 = vrcp.pop %v1882
        %v1902 = vrcp.pop %v1884
        %v1903 = vrcp.pop %v1886
        %v1904 = vrcp.pop %v1888
        %v1905 = vpack.c.bf16 %v1828, %v1826
        %v1906 = vpack.c.bf16 %v1832, %v1830
        %v1907 = vpack.c.bf16 %v1836, %v1834
        %v1908 = vpack.c.bf16 %v1840, %v1838
        %v1909 = vpack.c.bf16 %v1844, %v1842
        %v1910 = vpack.c.bf16 %v1848, %v1846
        %v1911 = vpack.c.bf16 %v1852, %v1850
        %v1912 = vpack.c.bf16 %v1856, %v1854
        %1913 = vrot.lane.b32.xlu0 %v1534, 96
        %v1914 = vpop.permute.xlu0 %1913
        %1915 = vrot.lane.b32.xlu0 %v1535, 96
        %v1916 = vpop.permute.xlu0 %1915
        %1917 = vrot.lane.b32.xlu0 %v1536, 96
        %v1918 = vpop.permute.xlu0 %1917
        %1919 = vrot.lane.b32.xlu0 %v1537, 96
        %v1920 = vpop.permute.xlu0 %1919
        %1921 = vrot.lane.b32.xlu0 %v1538, 96
        %v1922 = vpop.permute.xlu0 %1921
        %1923 = vrot.lane.b32.xlu0 %v1539, 96
        %v1924 = vpop.permute.xlu0 %1923
        %1925 = vrot.lane.b32.xlu0 %v1540, 96
        %v1926 = vpop.permute.xlu0 %1925
        %1927 = vrot.lane.b32.xlu0 %v1541, 96
        %v1928 = vpop.permute.xlu0 %1927
        %1937 = vmatpush.bf16.msra.mxu0 %v1928
        %1938 = vmatpush.bf16.msra.mxu0 %v1926
        %1939 = vmatpush.bf16.msra.mxu0 %v1924
        %1940 = vmatpush.bf16.msra.mxu0 %v1922
        %1941 = vmatpush.bf16.msra.mxu0 %v1920
        %1942 = vmatpush.bf16.msra.mxu0 %v1918
        %1943 = vmatpush.bf16.msra.mxu0 %v1916
        %1944 = vmatpush.bf16.msra.mxu0 %v1914
        %1945 = vmatmul.bf16.gmra.mxu0 %v1905
        %v1946 = vpop.f32.mrf.mxu0
        %v1947 = vadd.f32 0.0, %v1946
        %v1948 = vpop.f32.mrf.mxu0
        %v1949 = vadd.f32 0.0, %v1948
        %1950 = vmatmul.bf16.gmra.mxu0 %v1906
        %v1951 = vpop.f32.mrf.mxu0
        %v1952 = vadd.f32 0.0, %v1951
        %v1953 = vpop.f32.mrf.mxu0
        %v1954 = vadd.f32 0.0, %v1953
        %1955 = vmatmul.bf16.gmra.mxu0 %v1907
        %v1956 = vpop.f32.mrf.mxu0
        %v1957 = vadd.f32 0.0, %v1956
        %v1958 = vpop.f32.mrf.mxu0
        %v1959 = vadd.f32 0.0, %v1958
        %1960 = vmatmul.bf16.gmra.mxu0 %v1908
        %v1961 = vpop.f32.mrf.mxu0
        %v1962 = vadd.f32 0.0, %v1961
        %v1963 = vpop.f32.mrf.mxu0
        %v1964 = vadd.f32 0.0, %v1963
        %1965 = vmatmul.bf16.gmra.mxu0 %v1909
        %v1966 = vpop.f32.mrf.mxu0
        %v1967 = vadd.f32 0.0, %v1966
        %v1968 = vpop.f32.mrf.mxu0
        %v1969 = vadd.f32 0.0, %v1968
        %1970 = vmatmul.bf16.gmra.mxu0 %v1910
        %v1971 = vpop.f32.mrf.mxu0
        %v1972 = vadd.f32 0.0, %v1971
        %v1973 = vpop.f32.mrf.mxu0
        %v1974 = vadd.f32 0.0, %v1973
        %1975 = vmatmul.bf16.gmra.mxu0 %v1911
        %v1976 = vpop.f32.mrf.mxu0
        %v1977 = vadd.f32 0.0, %v1976
        %v1978 = vpop.f32.mrf.mxu0
        %v1979 = vadd.f32 0.0, %v1978
        %1980 = vmatmul.bf16.gmra.mxu0 %v1912
        %v1981 = vpop.f32.mrf.mxu0
        %v1982 = vadd.f32 0.0, %v1981
        %v1983 = vpop.f32.mrf.mxu0
        %v1984 = vadd.f32 0.0, %v1983
        %1985 = vdwg.mxu0
        %v1986 = vmul.f32 %v1947, %v1889
        %v1987 = vmul.f32 %v1949, %v1890
        %v1988 = vmul.f32 %v1952, %v1891
        %v1989 = vmul.f32 %v1954, %v1892
        %v1990 = vmul.f32 %v1957, %v1893
        %v1991 = vmul.f32 %v1959, %v1894
        %v1992 = vmul.f32 %v1962, %v1895
        %v1993 = vmul.f32 %v1964, %v1896
        %v1994 = vmul.f32 %v1967, %v1897
        %v1995 = vmul.f32 %v1969, %v1898
        %v1996 = vmul.f32 %v1972, %v1899
        %v1997 = vmul.f32 %v1974, %v1900
        %v1998 = vmul.f32 %v1977, %v1901
        %v1999 = vmul.f32 %v1979, %v1902
        %v2000 = vmul.f32 %v1982, %v1903
        %v2001 = vmul.f32 %v1984, %v1904
        %v2002 = vpack.c.bf16 %v1986, %v1986
        %v2003 = vpack.c.bf16 %v1987, %v1987
        %v2004 = vpack.c.bf16 %v1988, %v1988
        %v2005 = vpack.c.bf16 %v1989, %v1989
        %v2006 = vpack.c.bf16 %v1990, %v1990
        %v2007 = vpack.c.bf16 %v1991, %v1991
        %v2008 = vpack.c.bf16 %v1992, %v1992
        %v2009 = vpack.c.bf16 %v1993, %v1993
        %v2010 = vpack.c.bf16 %v1994, %v1994
        %v2011 = vpack.c.bf16 %v1995, %v1995
        %v2012 = vpack.c.bf16 %v1996, %v1996
        %v2013 = vpack.c.bf16 %v1997, %v1997
        %v2014 = vpack.c.bf16 %v1998, %v1998
        %v2015 = vpack.c.bf16 %v1999, %v1999
        %v2016 = vpack.c.bf16 %v2000, %v2000
        %v2017 = vpack.c.bf16 %v2001, %v2001
        %2034 = vrot.lane.b32.xlu0 %v2002, 32
        %v2035 = vpop.permute.xlu0 %2034
        %2036 = vrot.lane.b32.xlu0 %v2003, 32
        %v2037 = vpop.permute.xlu0 %2036
        %2038 = vrot.lane.b32.xlu0 %v2004, 32
        %v2039 = vpop.permute.xlu0 %2038
        %2040 = vrot.lane.b32.xlu0 %v2005, 32
        %v2041 = vpop.permute.xlu0 %2040
        %2042 = vrot.lane.b32.xlu0 %v2006, 32
        %v2043 = vpop.permute.xlu0 %2042
        %2044 = vrot.lane.b32.xlu0 %v2007, 32
        %v2045 = vpop.permute.xlu0 %2044
        %2046 = vrot.lane.b32.xlu0 %v2008, 32
        %v2047 = vpop.permute.xlu0 %2046
        %2048 = vrot.lane.b32.xlu0 %v2009, 32
        %v2049 = vpop.permute.xlu0 %2048
        %2050 = vrot.lane.b32.xlu0 %v2010, 32
        %v2051 = vpop.permute.xlu0 %2050
        %2052 = vrot.lane.b32.xlu0 %v2011, 32
        %v2053 = vpop.permute.xlu0 %2052
        %2054 = vrot.lane.b32.xlu0 %v2012, 32
        %v2055 = vpop.permute.xlu0 %2054
        %2056 = vrot.lane.b32.xlu0 %v2013, 32
        %v2057 = vpop.permute.xlu0 %2056
        %2058 = vrot.lane.b32.xlu0 %v2014, 32
        %v2059 = vpop.permute.xlu0 %2058
        %2060 = vrot.lane.b32.xlu0 %v2015, 32
        %v2061 = vpop.permute.xlu0 %2060
        %2062 = vrot.lane.b32.xlu0 %v2016, 32
        %v2063 = vpop.permute.xlu0 %2062
        %2064 = vrot.lane.b32.xlu0 %v2017, 32
        %v2065 = vpop.permute.xlu0 %2064
        %vm2082 = vcmask 519424
        %2083 = vst.msk [vmem:[#allocation2] sm:$0xf] %vm2082, %v2035
        %2084 = vst.msk [vmem:[#allocation2 + $0x4] sm:$0xf] %vm2082, %v2037
        %2085 = vst.msk [vmem:[#allocation2 + $0x8] sm:$0xf] %vm2082, %v2039
        %2086 = vst.msk [vmem:[#allocation2 + $0xc] sm:$0xf] %vm2082, %v2041
        %2087 = vst.msk [vmem:[#allocation2 + $0x10] sm:$0xf] %vm2082, %v2043
        %2088 = vst.msk [vmem:[#allocation2 + $0x14] sm:$0xf] %vm2082, %v2045
        %2089 = vst.msk [vmem:[#allocation2 + $0x18] sm:$0xf] %vm2082, %v2047
        %2090 = vst.msk [vmem:[#allocation2 + $0x1c] sm:$0xf] %vm2082, %v2049
        %2091 = vst.msk [vmem:[#allocation2 + $0x20] sm:$0xf] %vm2082, %v2051
        %2092 = vst.msk [vmem:[#allocation2 + $0x24] sm:$0xf] %vm2082, %v2053
        %2093 = vst.msk [vmem:[#allocation2 + $0x28] sm:$0xf] %vm2082, %v2055
        %2094 = vst.msk [vmem:[#allocation2 + $0x2c] sm:$0xf] %vm2082, %v2057
        %2095 = vst.msk [vmem:[#allocation2 + $0x30] sm:$0xf] %vm2082, %v2059
        %2096 = vst.msk [vmem:[#allocation2 + $0x34] sm:$0xf] %vm2082, %v2061
        %2097 = vst.msk [vmem:[#allocation2 + $0x38] sm:$0xf] %vm2082, %v2063
        %2098 = vst.msk [vmem:[#allocation2 + $0x3c] sm:$0xf] %vm2082, %v2065
        %2099 = vrot.lane.b32.xlu0 %v1220, 64
        %v2100 = vpop.permute.xlu0 %2099
        %2101 = vrot.lane.b32.xlu0 %v1221, 64
        %v2102 = vpop.permute.xlu0 %2101
        %2103 = vrot.lane.b32.xlu0 %v1222, 64
        %v2104 = vpop.permute.xlu0 %2103
        %2105 = vrot.lane.b32.xlu0 %v1223, 64
        %v2106 = vpop.permute.xlu0 %2105
        %2107 = vrot.lane.b32.xlu0 %v1224, 64
        %v2108 = vpop.permute.xlu0 %2107
        %2109 = vrot.lane.b32.xlu0 %v1225, 64
        %v2110 = vpop.permute.xlu0 %2109
        %2111 = vrot.lane.b32.xlu0 %v1226, 64
        %v2112 = vpop.permute.xlu0 %2111
        %2113 = vrot.lane.b32.xlu0 %v1227, 64
        %v2114 = vpop.permute.xlu0 %2113
        %2115 = vrot.lane.b32.xlu0 %v1260, 64
        %v2116 = vpop.permute.xlu0 %2115
        %2117 = vrot.lane.b32.xlu0 %v1261, 64
        %v2118 = vpop.permute.xlu0 %2117
        %2119 = vrot.lane.b32.xlu0 %v1262, 64
        %v2120 = vpop.permute.xlu0 %2119
        %2121 = vrot.lane.b32.xlu0 %v1263, 64
        %v2122 = vpop.permute.xlu0 %2121
        %2123 = vrot.lane.b32.xlu0 %v1264, 64
        %v2124 = vpop.permute.xlu0 %2123
        %2125 = vrot.lane.b32.xlu0 %v1265, 64
        %v2126 = vpop.permute.xlu0 %2125
        %2127 = vrot.lane.b32.xlu0 %v1266, 64
        %v2128 = vpop.permute.xlu0 %2127
        %2129 = vrot.lane.b32.xlu0 %v1267, 64
        %v2130 = vpop.permute.xlu0 %2129
        %v2132 = vsel %vm1268, %v2100, 0
        %v2135 = vsel %vm1268, %v2102, 0
        %v2138 = vsel %vm1268, %v2104, 0
        %v2141 = vsel %vm1268, %v2106, 0
        %v2144 = vsel %vm1268, %v2108, 0
        %v2147 = vsel %vm1268, %v2110, 0
        %v2150 = vsel %vm1268, %v2112, 0
        %v2153 = vsel %vm1268, %v2114, 0
        %v2156 = vsel %vm1268, %v2116, 0
        %v2159 = vsel %vm1268, %v2118, 0
        %v2162 = vsel %vm1268, %v2120, 0
        %v2165 = vsel %vm1268, %v2122, 0
        %v2168 = vsel %vm1268, %v2124, 0
        %v2171 = vsel %vm1268, %v2126, 0
        %v2174 = vsel %vm1268, %v2128, 0
        %v2177 = vsel %vm1268, %v2130, 0
        %2179 = vmatpush.bf16.xpose.msra.mxu0 %v2177
        %2180 = vmatpush.bf16.xpose.msra.mxu0 %v2174
        %2181 = vmatpush.bf16.xpose.msra.mxu0 %v2171
        %2182 = vmatpush.bf16.xpose.msra.mxu0 %v2168
        %2183 = vmatpush.bf16.xpose.msra.mxu0 %v2165
        %2184 = vmatpush.bf16.xpose.msra.mxu0 %v2162
        %2185 = vmatpush.bf16.xpose.msra.mxu0 %v2159
        %2186 = vmatpush.bf16.xpose.msra.mxu0 %v2156
        %2187 = vmatmul.bf16.gmra.mxu0 %v2132
        %v2188 = vpop.f32.mrf.mxu0
        %v2189 = vadd.f32 %v1186, %v2188
        %v2190 = vpop.f32.mrf.mxu0
        %v2191 = vadd.f32 %v1186, %v2190
        %2192 = vmatmul.bf16.gmra.mxu0 %v2135
        %v2193 = vpop.f32.mrf.mxu0
        %v2194 = vadd.f32 %v1186, %v2193
        %v2195 = vpop.f32.mrf.mxu0
        %v2196 = vadd.f32 %v1186, %v2195
        %2197 = vmatmul.bf16.gmra.mxu0 %v2138
        %v2198 = vpop.f32.mrf.mxu0
        %v2199 = vadd.f32 %v1186, %v2198
        %v2200 = vpop.f32.mrf.mxu0
        %v2201 = vadd.f32 %v1186, %v2200
        %2202 = vmatmul.bf16.gmra.mxu0 %v2141
        %v2203 = vpop.f32.mrf.mxu0
        %v2204 = vadd.f32 %v1186, %v2203
        %v2205 = vpop.f32.mrf.mxu0
        %v2206 = vadd.f32 %v1186, %v2205
        %2207 = vmatmul.bf16.gmra.mxu0 %v2144
        %v2208 = vpop.f32.mrf.mxu0
        %v2209 = vadd.f32 %v1186, %v2208
        %v2210 = vpop.f32.mrf.mxu0
        %v2211 = vadd.f32 %v1186, %v2210
        %2212 = vmatmul.bf16.gmra.mxu0 %v2147
        %v2213 = vpop.f32.mrf.mxu0
        %v2214 = vadd.f32 %v1186, %v2213
        %v2215 = vpop.f32.mrf.mxu0
        %v2216 = vadd.f32 %v1186, %v2215
        %2217 = vmatmul.bf16.gmra.mxu0 %v2150
        %v2218 = vpop.f32.mrf.mxu0
        %v2219 = vadd.f32 %v1186, %v2218
        %v2220 = vpop.f32.mrf.mxu0
        %v2221 = vadd.f32 %v1186, %v2220
        %2222 = vmatmul.bf16.gmra.mxu0 %v2153
        %v2223 = vpop.f32.mrf.mxu0
        %v2224 = vadd.f32 %v1186, %v2223
        %v2225 = vpop.f32.mrf.mxu0
        %v2226 = vadd.f32 %v1186, %v2225
        %2227 = vdwg.mxu0
        %2228 = vmax.xlane.f32.xlu0 %v2189
        %v2229 = vpop.xlane.xlu0 %2228
        %2230 = vmax.xlane.f32.xlu0 %v2191
        %v2231 = vpop.xlane.xlu0 %2230
        %2232 = vmax.xlane.f32.xlu0 %v2194
        %v2233 = vpop.xlane.xlu0 %2232
        %2234 = vmax.xlane.f32.xlu0 %v2196
        %v2235 = vpop.xlane.xlu0 %2234
        %2236 = vmax.xlane.f32.xlu0 %v2199
        %v2237 = vpop.xlane.xlu0 %2236
        %2238 = vmax.xlane.f32.xlu0 %v2201
        %v2239 = vpop.xlane.xlu0 %2238
        %2240 = vmax.xlane.f32.xlu0 %v2204
        %v2241 = vpop.xlane.xlu0 %2240
        %2242 = vmax.xlane.f32.xlu0 %v2206
        %v2243 = vpop.xlane.xlu0 %2242
        %2244 = vmax.xlane.f32.xlu0 %v2209
        %v2245 = vpop.xlane.xlu0 %2244
        %2246 = vmax.xlane.f32.xlu0 %v2211
        %v2247 = vpop.xlane.xlu0 %2246
        %2248 = vmax.xlane.f32.xlu0 %v2214
        %v2249 = vpop.xlane.xlu0 %2248
        %2250 = vmax.xlane.f32.xlu0 %v2216
        %v2251 = vpop.xlane.xlu0 %2250
        %2252 = vmax.xlane.f32.xlu0 %v2219
        %v2253 = vpop.xlane.xlu0 %2252
        %2254 = vmax.xlane.f32.xlu0 %v2221
        %v2255 = vpop.xlane.xlu0 %2254
        %2256 = vmax.xlane.f32.xlu0 %v2224
        %v2257 = vpop.xlane.xlu0 %2256
        %2258 = vmax.xlane.f32.xlu0 %v2226
        %v2259 = vpop.xlane.xlu0 %2258
        %v2260 = vsub.f32 %v2189, %v2229
        %v2261 = vsub.f32 %v2191, %v2231
        %v2262 = vsub.f32 %v2194, %v2233
        %v2263 = vsub.f32 %v2196, %v2235
        %v2264 = vsub.f32 %v2199, %v2237
        %v2265 = vsub.f32 %v2201, %v2239
        %v2266 = vsub.f32 %v2204, %v2241
        %v2267 = vsub.f32 %v2206, %v2243
        %v2268 = vsub.f32 %v2209, %v2245
        %v2269 = vsub.f32 %v2211, %v2247
        %v2270 = vsub.f32 %v2214, %v2249
        %v2271 = vsub.f32 %v2216, %v2251
        %v2272 = vsub.f32 %v2219, %v2253
        %v2273 = vsub.f32 %v2221, %v2255
        %v2274 = vsub.f32 %v2224, %v2257
        %v2275 = vsub.f32 %v2226, %v2259
        %v2276 = vmul.f32 %v2260, 1.442695
        %v2277 = vpow.pop %v2276
        %v2278 = vmul.f32 %v2261, 1.442695
        %v2279 = vpow.pop %v2278
        %v2280 = vmul.f32 %v2262, 1.442695
        %v2281 = vpow.pop %v2280
        %v2282 = vmul.f32 %v2263, 1.442695
        %v2283 = vpow.pop %v2282
        %v2284 = vmul.f32 %v2264, 1.442695
        %v2285 = vpow.pop %v2284
        %v2286 = vmul.f32 %v2265, 1.442695
        %v2287 = vpow.pop %v2286
        %v2288 = vmul.f32 %v2266, 1.442695
        %v2289 = vpow.pop %v2288
        %v2290 = vmul.f32 %v2267, 1.442695
        %v2291 = vpow.pop %v2290
        %v2292 = vmul.f32 %v2268, 1.442695
        %v2293 = vpow.pop %v2292
        %v2294 = vmul.f32 %v2269, 1.442695
        %v2295 = vpow.pop %v2294
        %v2296 = vmul.f32 %v2270, 1.442695
        %v2297 = vpow.pop %v2296
        %v2298 = vmul.f32 %v2271, 1.442695
        %v2299 = vpow.pop %v2298
        %v2300 = vmul.f32 %v2272, 1.442695
        %v2301 = vpow.pop %v2300
        %v2302 = vmul.f32 %v2273, 1.442695
        %v2303 = vpow.pop %v2302
        %v2304 = vmul.f32 %v2274, 1.442695
        %v2305 = vpow.pop %v2304
        %v2306 = vmul.f32 %v2275, 1.442695
        %v2307 = vpow.pop %v2306
        %2308 = vadd.xlane.f32.xlu0 %v2277
        %v2309 = vpop.xlane.xlu0 %2308
        %2310 = vadd.xlane.f32.xlu0 %v2279
        %v2311 = vpop.xlane.xlu0 %2310
        %2312 = vadd.xlane.f32.xlu0 %v2281
        %v2313 = vpop.xlane.xlu0 %2312
        %2314 = vadd.xlane.f32.xlu0 %v2283
        %v2315 = vpop.xlane.xlu0 %2314
        %2316 = vadd.xlane.f32.xlu0 %v2285
        %v2317 = vpop.xlane.xlu0 %2316
        %2318 = vadd.xlane.f32.xlu0 %v2287
        %v2319 = vpop.xlane.xlu0 %2318
        %2320 = vadd.xlane.f32.xlu0 %v2289
        %v2321 = vpop.xlane.xlu0 %2320
        %2322 = vadd.xlane.f32.xlu0 %v2291
        %v2323 = vpop.xlane.xlu0 %2322
        %2324 = vadd.xlane.f32.xlu0 %v2293
        %v2325 = vpop.xlane.xlu0 %2324
        %2326 = vadd.xlane.f32.xlu0 %v2295
        %v2327 = vpop.xlane.xlu0 %2326
        %2328 = vadd.xlane.f32.xlu0 %v2297
        %v2329 = vpop.xlane.xlu0 %2328
        %2330 = vadd.xlane.f32.xlu0 %v2299
        %v2331 = vpop.xlane.xlu0 %2330
        %2332 = vadd.xlane.f32.xlu0 %v2301
        %v2333 = vpop.xlane.xlu0 %2332
        %2334 = vadd.xlane.f32.xlu0 %v2303
        %v2335 = vpop.xlane.xlu0 %2334
        %2336 = vadd.xlane.f32.xlu0 %v2305
        %v2337 = vpop.xlane.xlu0 %2336
        %2338 = vadd.xlane.f32.xlu0 %v2307
        %v2339 = vpop.xlane.xlu0 %2338
        %v2340 = vrcp.pop %v2309
        %v2341 = vrcp.pop %v2311
        %v2342 = vrcp.pop %v2313
        %v2343 = vrcp.pop %v2315
        %v2344 = vrcp.pop %v2317
        %v2345 = vrcp.pop %v2319
        %v2346 = vrcp.pop %v2321
        %v2347 = vrcp.pop %v2323
        %v2348 = vrcp.pop %v2325
        %v2349 = vrcp.pop %v2327
        %v2350 = vrcp.pop %v2329
        %v2351 = vrcp.pop %v2331
        %v2352 = vrcp.pop %v2333
        %v2353 = vrcp.pop %v2335
        %v2354 = vrcp.pop %v2337
        %v2355 = vrcp.pop %v2339
        %v2356 = vpack.c.bf16 %v2279, %v2277
        %v2357 = vpack.c.bf16 %v2283, %v2281
        %v2358 = vpack.c.bf16 %v2287, %v2285
        %v2359 = vpack.c.bf16 %v2291, %v2289
        %v2360 = vpack.c.bf16 %v2295, %v2293
        %v2361 = vpack.c.bf16 %v2299, %v2297
        %v2362 = vpack.c.bf16 %v2303, %v2301
        %v2363 = vpack.c.bf16 %v2307, %v2305
        %2364 = vrot.lane.b32.xlu0 %v1534, 64
        %v2365 = vpop.permute.xlu0 %2364
        %2366 = vrot.lane.b32.xlu0 %v1535, 64
        %v2367 = vpop.permute.xlu0 %2366
        %2368 = vrot.lane.b32.xlu0 %v1536, 64
        %v2369 = vpop.permute.xlu0 %2368
        %2370 = vrot.lane.b32.xlu0 %v1537, 64
        %v2371 = vpop.permute.xlu0 %2370
        %2372 = vrot.lane.b32.xlu0 %v1538, 64
        %v2373 = vpop.permute.xlu0 %2372
        %2374 = vrot.lane.b32.xlu0 %v1539, 64
        %v2375 = vpop.permute.xlu0 %2374
        %2376 = vrot.lane.b32.xlu0 %v1540, 64
        %v2377 = vpop.permute.xlu0 %2376
        %2378 = vrot.lane.b32.xlu0 %v1541, 64
        %v2379 = vpop.permute.xlu0 %2378
        %2388 = vmatpush.bf16.msra.mxu0 %v2379
        %2389 = vmatpush.bf16.msra.mxu0 %v2377
        %2390 = vmatpush.bf16.msra.mxu0 %v2375
        %2391 = vmatpush.bf16.msra.mxu0 %v2373
        %2392 = vmatpush.bf16.msra.mxu0 %v2371
        %2393 = vmatpush.bf16.msra.mxu0 %v2369
        %2394 = vmatpush.bf16.msra.mxu0 %v2367
        %2395 = vmatpush.bf16.msra.mxu0 %v2365
        %2396 = vmatmul.bf16.gmra.mxu0 %v2356
        %v2397 = vpop.f32.mrf.mxu0
        %v2398 = vadd.f32 0.0, %v2397
        %v2399 = vpop.f32.mrf.mxu0
        %v2400 = vadd.f32 0.0, %v2399
        %2401 = vmatmul.bf16.gmra.mxu0 %v2357
        %v2402 = vpop.f32.mrf.mxu0
        %v2403 = vadd.f32 0.0, %v2402
        %v2404 = vpop.f32.mrf.mxu0
        %v2405 = vadd.f32 0.0, %v2404
        %2406 = vmatmul.bf16.gmra.mxu0 %v2358
        %v2407 = vpop.f32.mrf.mxu0
        %v2408 = vadd.f32 0.0, %v2407
        %v2409 = vpop.f32.mrf.mxu0
        %v2410 = vadd.f32 0.0, %v2409
        %2411 = vmatmul.bf16.gmra.mxu0 %v2359
        %v2412 = vpop.f32.mrf.mxu0
        %v2413 = vadd.f32 0.0, %v2412
        %v2414 = vpop.f32.mrf.mxu0
        %v2415 = vadd.f32 0.0, %v2414
        %2416 = vmatmul.bf16.gmra.mxu0 %v2360
        %v2417 = vpop.f32.mrf.mxu0
        %v2418 = vadd.f32 0.0, %v2417
        %v2419 = vpop.f32.mrf.mxu0
        %v2420 = vadd.f32 0.0, %v2419
        %2421 = vmatmul.bf16.gmra.mxu0 %v2361
        %v2422 = vpop.f32.mrf.mxu0
        %v2423 = vadd.f32 0.0, %v2422
        %v2424 = vpop.f32.mrf.mxu0
        %v2425 = vadd.f32 0.0, %v2424
        %2426 = vmatmul.bf16.gmra.mxu0 %v2362
        %v2427 = vpop.f32.mrf.mxu0
        %v2428 = vadd.f32 0.0, %v2427
        %v2429 = vpop.f32.mrf.mxu0
        %v2430 = vadd.f32 0.0, %v2429
        %2431 = vmatmul.bf16.gmra.mxu0 %v2363
        %v2432 = vpop.f32.mrf.mxu0
        %v2433 = vadd.f32 0.0, %v2432
        %v2434 = vpop.f32.mrf.mxu0
        %v2435 = vadd.f32 0.0, %v2434
        %2436 = vdwg.mxu0
        %v2437 = vmul.f32 %v2398, %v2340
        %v2438 = vmul.f32 %v2400, %v2341
        %v2439 = vmul.f32 %v2403, %v2342
        %v2440 = vmul.f32 %v2405, %v2343
        %v2441 = vmul.f32 %v2408, %v2344
        %v2442 = vmul.f32 %v2410, %v2345
        %v2443 = vmul.f32 %v2413, %v2346
        %v2444 = vmul.f32 %v2415, %v2347
        %v2445 = vmul.f32 %v2418, %v2348
        %v2446 = vmul.f32 %v2420, %v2349
        %v2447 = vmul.f32 %v2423, %v2350
        %v2448 = vmul.f32 %v2425, %v2351
        %v2449 = vmul.f32 %v2428, %v2352
        %v2450 = vmul.f32 %v2430, %v2353
        %v2451 = vmul.f32 %v2433, %v2354
        %v2452 = vmul.f32 %v2435, %v2355
        %v2453 = vpack.c.bf16 %v2437, %v2437
        %v2454 = vpack.c.bf16 %v2438, %v2438
        %v2455 = vpack.c.bf16 %v2439, %v2439
        %v2456 = vpack.c.bf16 %v2440, %v2440
        %v2457 = vpack.c.bf16 %v2441, %v2441
        %v2458 = vpack.c.bf16 %v2442, %v2442
        %v2459 = vpack.c.bf16 %v2443, %v2443
        %v2460 = vpack.c.bf16 %v2444, %v2444
        %v2461 = vpack.c.bf16 %v2445, %v2445
        %v2462 = vpack.c.bf16 %v2446, %v2446
        %v2463 = vpack.c.bf16 %v2447, %v2447
        %v2464 = vpack.c.bf16 %v2448, %v2448
        %v2465 = vpack.c.bf16 %v2449, %v2449
        %v2466 = vpack.c.bf16 %v2450, %v2450
        %v2467 = vpack.c.bf16 %v2451, %v2451
        %v2468 = vpack.c.bf16 %v2452, %v2452
        %2485 = vrot.lane.b32.xlu0 %v2453, 64
        %v2486 = vpop.permute.xlu0 %2485
        %2487 = vrot.lane.b32.xlu0 %v2454, 64
        %v2488 = vpop.permute.xlu0 %2487
        %2489 = vrot.lane.b32.xlu0 %v2455, 64
        %v2490 = vpop.permute.xlu0 %2489
        %2491 = vrot.lane.b32.xlu0 %v2456, 64
        %v2492 = vpop.permute.xlu0 %2491
        %2493 = vrot.lane.b32.xlu0 %v2457, 64
        %v2494 = vpop.permute.xlu0 %2493
        %2495 = vrot.lane.b32.xlu0 %v2458, 64
        %v2496 = vpop.permute.xlu0 %2495
        %2497 = vrot.lane.b32.xlu0 %v2459, 64
        %v2498 = vpop.permute.xlu0 %2497
        %2499 = vrot.lane.b32.xlu0 %v2460, 64
        %v2500 = vpop.permute.xlu0 %2499
        %2501 = vrot.lane.b32.xlu0 %v2461, 64
        %v2502 = vpop.permute.xlu0 %2501
        %2503 = vrot.lane.b32.xlu0 %v2462, 64
        %v2504 = vpop.permute.xlu0 %2503
        %2505 = vrot.lane.b32.xlu0 %v2463, 64
        %v2506 = vpop.permute.xlu0 %2505
        %2507 = vrot.lane.b32.xlu0 %v2464, 64
        %v2508 = vpop.permute.xlu0 %2507
        %2509 = vrot.lane.b32.xlu0 %v2465, 64
        %v2510 = vpop.permute.xlu0 %2509
        %2511 = vrot.lane.b32.xlu0 %v2466, 64
        %v2512 = vpop.permute.xlu0 %2511
        %2513 = vrot.lane.b32.xlu0 %v2467, 64
        %v2514 = vpop.permute.xlu0 %2513
        %2515 = vrot.lane.b32.xlu0 %v2468, 64
        %v2516 = vpop.permute.xlu0 %2515
        %vm2533 = vcmask 781824
        %2534 = vst.msk [vmem:[#allocation2] sm:$0xf] %vm2533, %v2486
        %2535 = vst.msk [vmem:[#allocation2 + $0x4] sm:$0xf] %vm2533, %v2488
        %2536 = vst.msk [vmem:[#allocation2 + $0x8] sm:$0xf] %vm2533, %v2490
        %2537 = vst.msk [vmem:[#allocation2 + $0xc] sm:$0xf] %vm2533, %v2492
        %2538 = vst.msk [vmem:[#allocation2 + $0x10] sm:$0xf] %vm2533, %v2494
        %2539 = vst.msk [vmem:[#allocation2 + $0x14] sm:$0xf] %vm2533, %v2496
        %2540 = vst.msk [vmem:[#allocation2 + $0x18] sm:$0xf] %vm2533, %v2498
        %2541 = vst.msk [vmem:[#allocation2 + $0x1c] sm:$0xf] %vm2533, %v2500
        %2542 = vst.msk [vmem:[#allocation2 + $0x20] sm:$0xf] %vm2533, %v2502
        %2543 = vst.msk [vmem:[#allocation2 + $0x24] sm:$0xf] %vm2533, %v2504
        %2544 = vst.msk [vmem:[#allocation2 + $0x28] sm:$0xf] %vm2533, %v2506
        %2545 = vst.msk [vmem:[#allocation2 + $0x2c] sm:$0xf] %vm2533, %v2508
        %2546 = vst.msk [vmem:[#allocation2 + $0x30] sm:$0xf] %vm2533, %v2510
        %2547 = vst.msk [vmem:[#allocation2 + $0x34] sm:$0xf] %vm2533, %v2512
        %2548 = vst.msk [vmem:[#allocation2 + $0x38] sm:$0xf] %vm2533, %v2514
        %2549 = vst.msk [vmem:[#allocation2 + $0x3c] sm:$0xf] %vm2533, %v2516
        %2550 = vrot.lane.b32.xlu0 %v1220, 32
        %v2551 = vpop.permute.xlu0 %2550
        %2552 = vrot.lane.b32.xlu0 %v1221, 32
        %v2553 = vpop.permute.xlu0 %2552
        %2554 = vrot.lane.b32.xlu0 %v1222, 32
        %v2555 = vpop.permute.xlu0 %2554
        %2556 = vrot.lane.b32.xlu0 %v1223, 32
        %v2557 = vpop.permute.xlu0 %2556
        %2558 = vrot.lane.b32.xlu0 %v1224, 32
        %v2559 = vpop.permute.xlu0 %2558
        %2560 = vrot.lane.b32.xlu0 %v1225, 32
        %v2561 = vpop.permute.xlu0 %2560
        %2562 = vrot.lane.b32.xlu0 %v1226, 32
        %v2563 = vpop.permute.xlu0 %2562
        %2564 = vrot.lane.b32.xlu0 %v1227, 32
        %v2565 = vpop.permute.xlu0 %2564
        %2566 = vrot.lane.b32.xlu0 %v1260, 32
        %v2567 = vpop.permute.xlu0 %2566
        %2568 = vrot.lane.b32.xlu0 %v1261, 32
        %v2569 = vpop.permute.xlu0 %2568
        %2570 = vrot.lane.b32.xlu0 %v1262, 32
        %v2571 = vpop.permute.xlu0 %2570
        %2572 = vrot.lane.b32.xlu0 %v1263, 32
        %v2573 = vpop.permute.xlu0 %2572
        %2574 = vrot.lane.b32.xlu0 %v1264, 32
        %v2575 = vpop.permute.xlu0 %2574
        %2576 = vrot.lane.b32.xlu0 %v1265, 32
        %v2577 = vpop.permute.xlu0 %2576
        %2578 = vrot.lane.b32.xlu0 %v1266, 32
        %v2579 = vpop.permute.xlu0 %2578
        %2580 = vrot.lane.b32.xlu0 %v1267, 32
        %v2581 = vpop.permute.xlu0 %2580
        %v2583 = vsel %vm1268, %v2551, 0
        %v2586 = vsel %vm1268, %v2553, 0
        %v2589 = vsel %vm1268, %v2555, 0
        %v2592 = vsel %vm1268, %v2557, 0
        %v2595 = vsel %vm1268, %v2559, 0
        %v2598 = vsel %vm1268, %v2561, 0
        %v2601 = vsel %vm1268, %v2563, 0
        %v2604 = vsel %vm1268, %v2565, 0
        %v2607 = vsel %vm1268, %v2567, 0
        %v2610 = vsel %vm1268, %v2569, 0
        %v2613 = vsel %vm1268, %v2571, 0
        %v2616 = vsel %vm1268, %v2573, 0
        %v2619 = vsel %vm1268, %v2575, 0
        %v2622 = vsel %vm1268, %v2577, 0
        %v2625 = vsel %vm1268, %v2579, 0
        %v2628 = vsel %vm1268, %v2581, 0
        %2630 = vmatpush.bf16.xpose.msra.mxu0 %v2628
        %2631 = vmatpush.bf16.xpose.msra.mxu0 %v2625
        %2632 = vmatpush.bf16.xpose.msra.mxu0 %v2622
        %2633 = vmatpush.bf16.xpose.msra.mxu0 %v2619
        %2634 = vmatpush.bf16.xpose.msra.mxu0 %v2616
        %2635 = vmatpush.bf16.xpose.msra.mxu0 %v2613
        %2636 = vmatpush.bf16.xpose.msra.mxu0 %v2610
        %2637 = vmatpush.bf16.xpose.msra.mxu0 %v2607
        %2638 = vmatmul.bf16.gmra.mxu0 %v2583
        %v2639 = vpop.f32.mrf.mxu0
        %v2640 = vadd.f32 %v1186, %v2639
        %v2641 = vpop.f32.mrf.mxu0
        %v2642 = vadd.f32 %v1186, %v2641
        %2643 = vmatmul.bf16.gmra.mxu0 %v2586
        %v2644 = vpop.f32.mrf.mxu0
        %v2645 = vadd.f32 %v1186, %v2644
        %v2646 = vpop.f32.mrf.mxu0
        %v2647 = vadd.f32 %v1186, %v2646
        %2648 = vmatmul.bf16.gmra.mxu0 %v2589
        %v2649 = vpop.f32.mrf.mxu0
        %v2650 = vadd.f32 %v1186, %v2649
        %v2651 = vpop.f32.mrf.mxu0
        %v2652 = vadd.f32 %v1186, %v2651
        %2653 = vmatmul.bf16.gmra.mxu0 %v2592
        %v2654 = vpop.f32.mrf.mxu0
        %v2655 = vadd.f32 %v1186, %v2654
        %v2656 = vpop.f32.mrf.mxu0
        %v2657 = vadd.f32 %v1186, %v2656
        %2658 = vmatmul.bf16.gmra.mxu0 %v2595
        %v2659 = vpop.f32.mrf.mxu0
        %v2660 = vadd.f32 %v1186, %v2659
        %v2661 = vpop.f32.mrf.mxu0
        %v2662 = vadd.f32 %v1186, %v2661
        %2663 = vmatmul.bf16.gmra.mxu0 %v2598
        %v2664 = vpop.f32.mrf.mxu0
        %v2665 = vadd.f32 %v1186, %v2664
        %v2666 = vpop.f32.mrf.mxu0
        %v2667 = vadd.f32 %v1186, %v2666
        %2668 = vmatmul.bf16.gmra.mxu0 %v2601
        %v2669 = vpop.f32.mrf.mxu0
        %v2670 = vadd.f32 %v1186, %v2669
        %v2671 = vpop.f32.mrf.mxu0
        %v2672 = vadd.f32 %v1186, %v2671
        %2673 = vmatmul.bf16.gmra.mxu0 %v2604
        %v2674 = vpop.f32.mrf.mxu0
        %v2675 = vadd.f32 %v1186, %v2674
        %v2676 = vpop.f32.mrf.mxu0
        %v2677 = vadd.f32 %v1186, %v2676
        %2678 = vdwg.mxu0
        %2679 = vmax.xlane.f32.xlu0 %v2640
        %v2680 = vpop.xlane.xlu0 %2679
        %2681 = vmax.xlane.f32.xlu0 %v2642
        %v2682 = vpop.xlane.xlu0 %2681
        %2683 = vmax.xlane.f32.xlu0 %v2645
        %v2684 = vpop.xlane.xlu0 %2683
        %2685 = vmax.xlane.f32.xlu0 %v2647
        %v2686 = vpop.xlane.xlu0 %2685
        %2687 = vmax.xlane.f32.xlu0 %v2650
        %v2688 = vpop.xlane.xlu0 %2687
        %2689 = vmax.xlane.f32.xlu0 %v2652
        %v2690 = vpop.xlane.xlu0 %2689
        %2691 = vmax.xlane.f32.xlu0 %v2655
        %v2692 = vpop.xlane.xlu0 %2691
        %2693 = vmax.xlane.f32.xlu0 %v2657
        %v2694 = vpop.xlane.xlu0 %2693
        %2695 = vmax.xlane.f32.xlu0 %v2660
        %v2696 = vpop.xlane.xlu0 %2695
        %2697 = vmax.xlane.f32.xlu0 %v2662
        %v2698 = vpop.xlane.xlu0 %2697
        %2699 = vmax.xlane.f32.xlu0 %v2665
        %v2700 = vpop.xlane.xlu0 %2699
        %2701 = vmax.xlane.f32.xlu0 %v2667
        %v2702 = vpop.xlane.xlu0 %2701
        %2703 = vmax.xlane.f32.xlu0 %v2670
        %v2704 = vpop.xlane.xlu0 %2703
        %2705 = vmax.xlane.f32.xlu0 %v2672
        %v2706 = vpop.xlane.xlu0 %2705
        %2707 = vmax.xlane.f32.xlu0 %v2675
        %v2708 = vpop.xlane.xlu0 %2707
        %2709 = vmax.xlane.f32.xlu0 %v2677
        %v2710 = vpop.xlane.xlu0 %2709
        %v2711 = vsub.f32 %v2640, %v2680
        %v2712 = vsub.f32 %v2642, %v2682
        %v2713 = vsub.f32 %v2645, %v2684
        %v2714 = vsub.f32 %v2647, %v2686
        %v2715 = vsub.f32 %v2650, %v2688
        %v2716 = vsub.f32 %v2652, %v2690
        %v2717 = vsub.f32 %v2655, %v2692
        %v2718 = vsub.f32 %v2657, %v2694
        %v2719 = vsub.f32 %v2660, %v2696
        %v2720 = vsub.f32 %v2662, %v2698
        %v2721 = vsub.f32 %v2665, %v2700
        %v2722 = vsub.f32 %v2667, %v2702
        %v2723 = vsub.f32 %v2670, %v2704
        %v2724 = vsub.f32 %v2672, %v2706
        %v2725 = vsub.f32 %v2675, %v2708
        %v2726 = vsub.f32 %v2677, %v2710
        %v2727 = vmul.f32 %v2711, 1.442695
        %v2728 = vpow.pop %v2727
        %v2729 = vmul.f32 %v2712, 1.442695
        %v2730 = vpow.pop %v2729
        %v2731 = vmul.f32 %v2713, 1.442695
        %v2732 = vpow.pop %v2731
        %v2733 = vmul.f32 %v2714, 1.442695
        %v2734 = vpow.pop %v2733
        %v2735 = vmul.f32 %v2715, 1.442695
        %v2736 = vpow.pop %v2735
        %v2737 = vmul.f32 %v2716, 1.442695
        %v2738 = vpow.pop %v2737
        %v2739 = vmul.f32 %v2717, 1.442695
        %v2740 = vpow.pop %v2739
        %v2741 = vmul.f32 %v2718, 1.442695
        %v2742 = vpow.pop %v2741
        %v2743 = vmul.f32 %v2719, 1.442695
        %v2744 = vpow.pop %v2743
        %v2745 = vmul.f32 %v2720, 1.442695
        %v2746 = vpow.pop %v2745
        %v2747 = vmul.f32 %v2721, 1.442695
        %v2748 = vpow.pop %v2747
        %v2749 = vmul.f32 %v2722, 1.442695
        %v2750 = vpow.pop %v2749
        %v2751 = vmul.f32 %v2723, 1.442695
        %v2752 = vpow.pop %v2751
        %v2753 = vmul.f32 %v2724, 1.442695
        %v2754 = vpow.pop %v2753
        %v2755 = vmul.f32 %v2725, 1.442695
        %v2756 = vpow.pop %v2755
        %v2757 = vmul.f32 %v2726, 1.442695
        %v2758 = vpow.pop %v2757
        %2759 = vadd.xlane.f32.xlu0 %v2728
        %v2760 = vpop.xlane.xlu0 %2759
        %2761 = vadd.xlane.f32.xlu0 %v2730
        %v2762 = vpop.xlane.xlu0 %2761
        %2763 = vadd.xlane.f32.xlu0 %v2732
        %v2764 = vpop.xlane.xlu0 %2763
        %2765 = vadd.xlane.f32.xlu0 %v2734
        %v2766 = vpop.xlane.xlu0 %2765
        %2767 = vadd.xlane.f32.xlu0 %v2736
        %v2768 = vpop.xlane.xlu0 %2767
        %2769 = vadd.xlane.f32.xlu0 %v2738
        %v2770 = vpop.xlane.xlu0 %2769
        %2771 = vadd.xlane.f32.xlu0 %v2740
        %v2772 = vpop.xlane.xlu0 %2771
        %2773 = vadd.xlane.f32.xlu0 %v2742
        %v2774 = vpop.xlane.xlu0 %2773
        %2775 = vadd.xlane.f32.xlu0 %v2744
        %v2776 = vpop.xlane.xlu0 %2775
        %2777 = vadd.xlane.f32.xlu0 %v2746
        %v2778 = vpop.xlane.xlu0 %2777
        %2779 = vadd.xlane.f32.xlu0 %v2748
        %v2780 = vpop.xlane.xlu0 %2779
        %2781 = vadd.xlane.f32.xlu0 %v2750
        %v2782 = vpop.xlane.xlu0 %2781
        %2783 = vadd.xlane.f32.xlu0 %v2752
        %v2784 = vpop.xlane.xlu0 %2783
        %2785 = vadd.xlane.f32.xlu0 %v2754
        %v2786 = vpop.xlane.xlu0 %2785
        %2787 = vadd.xlane.f32.xlu0 %v2756
        %v2788 = vpop.xlane.xlu0 %2787
        %2789 = vadd.xlane.f32.xlu0 %v2758
        %v2790 = vpop.xlane.xlu0 %2789
        %v2791 = vrcp.pop %v2760
        %v2792 = vrcp.pop %v2762
        %v2793 = vrcp.pop %v2764
        %v2794 = vrcp.pop %v2766
        %v2795 = vrcp.pop %v2768
        %v2796 = vrcp.pop %v2770
        %v2797 = vrcp.pop %v2772
        %v2798 = vrcp.pop %v2774
        %v2799 = vrcp.pop %v2776
        %v2800 = vrcp.pop %v2778
        %v2801 = vrcp.pop %v2780
        %v2802 = vrcp.pop %v2782
        %v2803 = vrcp.pop %v2784
        %v2804 = vrcp.pop %v2786
        %v2805 = vrcp.pop %v2788
        %v2806 = vrcp.pop %v2790
        %v2807 = vpack.c.bf16 %v2730, %v2728
        %v2808 = vpack.c.bf16 %v2734, %v2732
        %v2809 = vpack.c.bf16 %v2738, %v2736
        %v2810 = vpack.c.bf16 %v2742, %v2740
        %v2811 = vpack.c.bf16 %v2746, %v2744
        %v2812 = vpack.c.bf16 %v2750, %v2748
        %v2813 = vpack.c.bf16 %v2754, %v2752
        %v2814 = vpack.c.bf16 %v2758, %v2756
        %2815 = vrot.lane.b32.xlu0 %v1534, 32
        %v2816 = vpop.permute.xlu0 %2815
        %2817 = vrot.lane.b32.xlu0 %v1535, 32
        %v2818 = vpop.permute.xlu0 %2817
        %2819 = vrot.lane.b32.xlu0 %v1536, 32
        %v2820 = vpop.permute.xlu0 %2819
        %2821 = vrot.lane.b32.xlu0 %v1537, 32
        %v2822 = vpop.permute.xlu0 %2821
        %2823 = vrot.lane.b32.xlu0 %v1538, 32
        %v2824 = vpop.permute.xlu0 %2823
        %2825 = vrot.lane.b32.xlu0 %v1539, 32
        %v2826 = vpop.permute.xlu0 %2825
        %2827 = vrot.lane.b32.xlu0 %v1540, 32
        %v2828 = vpop.permute.xlu0 %2827
        %2829 = vrot.lane.b32.xlu0 %v1541, 32
        %v2830 = vpop.permute.xlu0 %2829
        %2839 = vmatpush.bf16.msra.mxu0 %v2830
        %2840 = vmatpush.bf16.msra.mxu0 %v2828
        %2841 = vmatpush.bf16.msra.mxu0 %v2826
        %2842 = vmatpush.bf16.msra.mxu0 %v2824
        %2843 = vmatpush.bf16.msra.mxu0 %v2822
        %2844 = vmatpush.bf16.msra.mxu0 %v2820
        %2845 = vmatpush.bf16.msra.mxu0 %v2818
        %2846 = vmatpush.bf16.msra.mxu0 %v2816
        %2847 = vmatmul.bf16.gmra.mxu0 %v2807
        %v2848 = vpop.f32.mrf.mxu0
        %v2849 = vadd.f32 0.0, %v2848
        %v2850 = vpop.f32.mrf.mxu0
        %v2851 = vadd.f32 0.0, %v2850
        %2852 = vmatmul.bf16.gmra.mxu0 %v2808
        %v2853 = vpop.f32.mrf.mxu0
        %v2854 = vadd.f32 0.0, %v2853
        %v2855 = vpop.f32.mrf.mxu0
        %v2856 = vadd.f32 0.0, %v2855
        %2857 = vmatmul.bf16.gmra.mxu0 %v2809
        %v2858 = vpop.f32.mrf.mxu0
        %v2859 = vadd.f32 0.0, %v2858
        %v2860 = vpop.f32.mrf.mxu0
        %v2861 = vadd.f32 0.0, %v2860
        %2862 = vmatmul.bf16.gmra.mxu0 %v2810
        %v2863 = vpop.f32.mrf.mxu0
        %v2864 = vadd.f32 0.0, %v2863
        %v2865 = vpop.f32.mrf.mxu0
        %v2866 = vadd.f32 0.0, %v2865
        %2867 = vmatmul.bf16.gmra.mxu0 %v2811
        %v2868 = vpop.f32.mrf.mxu0
        %v2869 = vadd.f32 0.0, %v2868
        %v2870 = vpop.f32.mrf.mxu0
        %v2871 = vadd.f32 0.0, %v2870
        %2872 = vmatmul.bf16.gmra.mxu0 %v2812
        %v2873 = vpop.f32.mrf.mxu0
        %v2874 = vadd.f32 0.0, %v2873
        %v2875 = vpop.f32.mrf.mxu0
        %v2876 = vadd.f32 0.0, %v2875
        %2877 = vmatmul.bf16.gmra.mxu0 %v2813
        %v2878 = vpop.f32.mrf.mxu0
        %v2879 = vadd.f32 0.0, %v2878
        %v2880 = vpop.f32.mrf.mxu0
        %v2881 = vadd.f32 0.0, %v2880
        %2882 = vmatmul.bf16.gmra.mxu0 %v2814
        %v2883 = vpop.f32.mrf.mxu0
        %v2884 = vadd.f32 0.0, %v2883
        %v2885 = vpop.f32.mrf.mxu0
        %v2886 = vadd.f32 0.0, %v2885
        %2887 = vdwg.mxu0
        %v2888 = vmul.f32 %v2849, %v2791
        %v2889 = vmul.f32 %v2851, %v2792
        %v2890 = vmul.f32 %v2854, %v2793
        %v2891 = vmul.f32 %v2856, %v2794
        %v2892 = vmul.f32 %v2859, %v2795
        %v2893 = vmul.f32 %v2861, %v2796
        %v2894 = vmul.f32 %v2864, %v2797
        %v2895 = vmul.f32 %v2866, %v2798
        %v2896 = vmul.f32 %v2869, %v2799
        %v2897 = vmul.f32 %v2871, %v2800
        %v2898 = vmul.f32 %v2874, %v2801
        %v2899 = vmul.f32 %v2876, %v2802
        %v2900 = vmul.f32 %v2879, %v2803
        %v2901 = vmul.f32 %v2881, %v2804
        %v2902 = vmul.f32 %v2884, %v2805
        %v2903 = vmul.f32 %v2886, %v2806
        %v2904 = vpack.c.bf16 %v2888, %v2888
        %v2905 = vpack.c.bf16 %v2889, %v2889
        %v2906 = vpack.c.bf16 %v2890, %v2890
        %v2907 = vpack.c.bf16 %v2891, %v2891
        %v2908 = vpack.c.bf16 %v2892, %v2892
        %v2909 = vpack.c.bf16 %v2893, %v2893
        %v2910 = vpack.c.bf16 %v2894, %v2894
        %v2911 = vpack.c.bf16 %v2895, %v2895
        %v2912 = vpack.c.bf16 %v2896, %v2896
        %v2913 = vpack.c.bf16 %v2897, %v2897
        %v2914 = vpack.c.bf16 %v2898, %v2898
        %v2915 = vpack.c.bf16 %v2899, %v2899
        %v2916 = vpack.c.bf16 %v2900, %v2900
        %v2917 = vpack.c.bf16 %v2901, %v2901
        %v2918 = vpack.c.bf16 %v2902, %v2902
        %v2919 = vpack.c.bf16 %v2903, %v2903
        %2936 = vrot.lane.b32.xlu0 %v2904, 96
        %v2937 = vpop.permute.xlu0 %2936
        %2938 = vrot.lane.b32.xlu0 %v2905, 96
        %v2939 = vpop.permute.xlu0 %2938
        %2940 = vrot.lane.b32.xlu0 %v2906, 96
        %v2941 = vpop.permute.xlu0 %2940
        %2942 = vrot.lane.b32.xlu0 %v2907, 96
        %v2943 = vpop.permute.xlu0 %2942
        %2944 = vrot.lane.b32.xlu0 %v2908, 96
        %v2945 = vpop.permute.xlu0 %2944
        %2946 = vrot.lane.b32.xlu0 %v2909, 96
        %v2947 = vpop.permute.xlu0 %2946
        %2948 = vrot.lane.b32.xlu0 %v2910, 96
        %v2949 = vpop.permute.xlu0 %2948
        %2950 = vrot.lane.b32.xlu0 %v2911, 96
        %v2951 = vpop.permute.xlu0 %2950
        %2952 = vrot.lane.b32.xlu0 %v2912, 96
        %v2953 = vpop.permute.xlu0 %2952
        %2954 = vrot.lane.b32.xlu0 %v2913, 96
        %v2955 = vpop.permute.xlu0 %2954
        %2956 = vrot.lane.b32.xlu0 %v2914, 96
        %v2957 = vpop.permute.xlu0 %2956
        %2958 = vrot.lane.b32.xlu0 %v2915, 96
        %v2959 = vpop.permute.xlu0 %2958
        %2960 = vrot.lane.b32.xlu0 %v2916, 96
        %v2961 = vpop.permute.xlu0 %2960
        %2962 = vrot.lane.b32.xlu0 %v2917, 96
        %v2963 = vpop.permute.xlu0 %2962
        %2964 = vrot.lane.b32.xlu0 %v2918, 96
        %v2965 = vpop.permute.xlu0 %2964
        %2966 = vrot.lane.b32.xlu0 %v2919, 96
        %v2967 = vpop.permute.xlu0 %2966
        %vm2984 = vcmask 1044224
        %2985 = vst.msk [vmem:[#allocation2] sm:$0xf] %vm2984, %v2937
        %2986 = vst.msk [vmem:[#allocation2 + $0x4] sm:$0xf] %vm2984, %v2939
        %2987 = vst.msk [vmem:[#allocation2 + $0x8] sm:$0xf] %vm2984, %v2941
        %2988 = vst.msk [vmem:[#allocation2 + $0xc] sm:$0xf] %vm2984, %v2943
        %2989 = vst.msk [vmem:[#allocation2 + $0x10] sm:$0xf] %vm2984, %v2945
        %2990 = vst.msk [vmem:[#allocation2 + $0x14] sm:$0xf] %vm2984, %v2947
        %2991 = vst.msk [vmem:[#allocation2 + $0x18] sm:$0xf] %vm2984, %v2949
        %2992 = vst.msk [vmem:[#allocation2 + $0x1c] sm:$0xf] %vm2984, %v2951
        %2993 = vst.msk [vmem:[#allocation2 + $0x20] sm:$0xf] %vm2984, %v2953
        %2994 = vst.msk [vmem:[#allocation2 + $0x24] sm:$0xf] %vm2984, %v2955
        %2995 = vst.msk [vmem:[#allocation2 + $0x28] sm:$0xf] %vm2984, %v2957
        %2996 = vst.msk [vmem:[#allocation2 + $0x2c] sm:$0xf] %vm2984, %v2959
        %2997 = vst.msk [vmem:[#allocation2 + $0x30] sm:$0xf] %vm2984, %v2961
        %2998 = vst.msk [vmem:[#allocation2 + $0x34] sm:$0xf] %vm2984, %v2963
        %2999 = vst.msk [vmem:[#allocation2 + $0x38] sm:$0xf] %vm2984, %v2965
        %3000 = vst.msk [vmem:[#allocation2 + $0x3c] sm:$0xf] %vm2984, %v2967
        %v3001 = vld [vmem:[#allocation2] sm:$0xf]
        %v3002 = vld [vmem:[#allocation2 + $0x4] sm:$0xf]
        %v3003 = vld [vmem:[#allocation2 + $0x8] sm:$0xf]
        %v3004 = vld [vmem:[#allocation2 + $0xc] sm:$0xf]
        %v3005 = vld [vmem:[#allocation2 + $0x10] sm:$0xf]
        %v3006 = vld [vmem:[#allocation2 + $0x14] sm:$0xf]
        %v3007 = vld [vmem:[#allocation2 + $0x18] sm:$0xf]
        %v3008 = vld [vmem:[#allocation2 + $0x1c] sm:$0xf]
        %v3009 = vld [vmem:[#allocation2 + $0x20] sm:$0xf]
        %v3010 = vld [vmem:[#allocation2 + $0x24] sm:$0xf]
        %v3011 = vld [vmem:[#allocation2 + $0x28] sm:$0xf]
        %v3012 = vld [vmem:[#allocation2 + $0x2c] sm:$0xf]
        %v3013 = vld [vmem:[#allocation2 + $0x30] sm:$0xf]
        %v3014 = vld [vmem:[#allocation2 + $0x34] sm:$0xf]
        %v3015 = vld [vmem:[#allocation2 + $0x38] sm:$0xf]
        %v3016 = vld [vmem:[#allocation2 + $0x3c] sm:$0xf]
        %v3017 = vld [vmem:[#allocation14] sm:$0xf]
        %v3018 = vld [vmem:[#allocation14 + $0x4] sm:$0xf]
        %v3019 = vld [vmem:[#allocation14 + $0x8] sm:$0xf]
        %v3020 = vld [vmem:[#allocation14 + $0xc] sm:$0xf]
        %v3021 = vld [vmem:[#allocation14 + $0x10] sm:$0xf]
        %v3022 = vld [vmem:[#allocation14 + $0x14] sm:$0xf]
        %v3023 = vld [vmem:[#allocation14 + $0x18] sm:$0xf]
        %v3024 = vld [vmem:[#allocation14 + $0x1c] sm:$0xf]
        %v3025 = vld [vmem:[#allocation14 + $0x20] sm:$0xf]
        %v3026 = vld [vmem:[#allocation14 + $0x24] sm:$0xf]
        %v3027 = vld [vmem:[#allocation14 + $0x28] sm:$0xf]
        %v3028 = vld [vmem:[#allocation14 + $0x2c] sm:$0xf]
        %v3029 = vld [vmem:[#allocation14 + $0x30] sm:$0xf]
        %v3030 = vld [vmem:[#allocation14 + $0x34] sm:$0xf]
        %v3031 = vld [vmem:[#allocation14 + $0x38] sm:$0xf]
        %v3032 = vld [vmem:[#allocation14 + $0x3c] sm:$0xf]
        %v3033 = vld [vmem:[%s9] sm:$0x1]
        %v3035 = vperm.slane %v3033, 0
        %v3053 = vunpack.c.l.b16 %v3001
        %v3054 = vunpack.c.l.b16 %v3002
        %v3055 = vunpack.c.l.b16 %v3003
        %v3056 = vunpack.c.l.b16 %v3004
        %v3057 = vunpack.c.l.b16 %v3005
        %v3058 = vunpack.c.l.b16 %v3006
        %v3059 = vunpack.c.l.b16 %v3007
        %v3060 = vunpack.c.l.b16 %v3008
        %v3061 = vunpack.c.l.b16 %v3009
        %v3062 = vunpack.c.l.b16 %v3010
        %v3063 = vunpack.c.l.b16 %v3011
        %v3064 = vunpack.c.l.b16 %v3012
        %v3065 = vunpack.c.l.b16 %v3013
        %v3066 = vunpack.c.l.b16 %v3014
        %v3067 = vunpack.c.l.b16 %v3015
        %v3068 = vunpack.c.l.b16 %v3016
        %v3069 = vpack.c.b16 %v3054, %v3053
        %v3070 = vpack.c.b16 %v3056, %v3055
        %v3071 = vpack.c.b16 %v3058, %v3057
        %v3072 = vpack.c.b16 %v3060, %v3059
        %v3073 = vpack.c.b16 %v3062, %v3061
        %v3074 = vpack.c.b16 %v3064, %v3063
        %v3075 = vpack.c.b16 %v3066, %v3065
        %v3076 = vpack.c.b16 %v3068, %v3067
        %v3101 = vunpack.c.l.b16 %v3017
        %v3102 = vunpack.c.l.b16 %v3018
        %v3103 = vunpack.c.l.b16 %v3019
        %v3104 = vunpack.c.l.b16 %v3020
        %v3105 = vunpack.c.l.b16 %v3021
        %v3106 = vunpack.c.l.b16 %v3022
        %v3107 = vunpack.c.l.b16 %v3023
        %v3108 = vunpack.c.l.b16 %v3024
        %v3109 = vunpack.c.l.b16 %v3025
        %v3110 = vunpack.c.l.b16 %v3026
        %v3111 = vunpack.c.l.b16 %v3027
        %v3112 = vunpack.c.l.b16 %v3028
        %v3113 = vunpack.c.l.b16 %v3029
        %v3114 = vunpack.c.l.b16 %v3030
        %v3115 = vunpack.c.l.b16 %v3031
        %v3116 = vunpack.c.l.b16 %v3032
        %v3117 = vpack.c.b16 %v3102, %v3101
        %v3118 = vpack.c.b16 %v3104, %v3103
        %v3119 = vpack.c.b16 %v3106, %v3105
        %v3120 = vpack.c.b16 %v3108, %v3107
        %v3121 = vpack.c.b16 %v3110, %v3109
        %v3122 = vpack.c.b16 %v3112, %v3111
        %v3123 = vpack.c.b16 %v3114, %v3113
        %v3124 = vpack.c.b16 %v3116, %v3115
        %3133 = vmatpush.bf16.msra.mxu0 %v3124
        %3134 = vmatpush.bf16.msra.mxu0 %v3123
        %3135 = vmatpush.bf16.msra.mxu0 %v3122
        %3136 = vmatpush.bf16.msra.mxu0 %v3121
        %3137 = vmatpush.bf16.msra.mxu0 %v3120
        %3138 = vmatpush.bf16.msra.mxu0 %v3119
        %3139 = vmatpush.bf16.msra.mxu0 %v3118
        %3140 = vmatpush.bf16.msra.mxu0 %v3117
        %3141 = vmatmul.bf16.gmra.mxu0 %v3069
        %v3142 = vpop.f32.mrf.mxu0
        %v3143 = vadd.f32 %v3035, %v3142
        %v3144 = vpop.f32.mrf.mxu0
        %v3145 = vadd.f32 %v3035, %v3144
        %3146 = vmatmul.bf16.gmra.mxu0 %v3070
        %v3147 = vpop.f32.mrf.mxu0
        %v3148 = vadd.f32 %v3035, %v3147
        %v3149 = vpop.f32.mrf.mxu0
        %v3150 = vadd.f32 %v3035, %v3149
        %3151 = vmatmul.bf16.gmra.mxu0 %v3071
        %v3152 = vpop.f32.mrf.mxu0
        %v3153 = vadd.f32 %v3035, %v3152
        %v3154 = vpop.f32.mrf.mxu0
        %v3155 = vadd.f32 %v3035, %v3154
        %3156 = vmatmul.bf16.gmra.mxu0 %v3072
        %v3157 = vpop.f32.mrf.mxu0
        %v3158 = vadd.f32 %v3035, %v3157
        %v3159 = vpop.f32.mrf.mxu0
        %v3160 = vadd.f32 %v3035, %v3159
        %3161 = vmatmul.bf16.gmra.mxu0 %v3073
        %v3162 = vpop.f32.mrf.mxu0
        %v3163 = vadd.f32 %v3035, %v3162
        %v3164 = vpop.f32.mrf.mxu0
        %v3165 = vadd.f32 %v3035, %v3164
        %3166 = vmatmul.bf16.gmra.mxu0 %v3074
        %v3167 = vpop.f32.mrf.mxu0
        %v3168 = vadd.f32 %v3035, %v3167
        %v3169 = vpop.f32.mrf.mxu0
        %v3170 = vadd.f32 %v3035, %v3169
        %3171 = vmatmul.bf16.gmra.mxu0 %v3075
        %v3172 = vpop.f32.mrf.mxu0
        %v3173 = vadd.f32 %v3035, %v3172
        %v3174 = vpop.f32.mrf.mxu0
        %v3175 = vadd.f32 %v3035, %v3174
        %3176 = vmatmul.bf16.gmra.mxu0 %v3076
        %v3177 = vpop.f32.mrf.mxu0
        %v3178 = vadd.f32 %v3035, %v3177
        %v3179 = vpop.f32.mrf.mxu0
        %v3180 = vadd.f32 %v3035, %v3179
        %3181 = vdwg.mxu0
        %v3182 = vadd.f32 %v611, %v3143
        %v3183 = vadd.f32 %v612, %v3145
        %v3184 = vadd.f32 %v613, %v3148
        %v3185 = vadd.f32 %v614, %v3150
        %v3186 = vadd.f32 %v615, %v3153
        %v3187 = vadd.f32 %v616, %v3155
        %v3188 = vadd.f32 %v617, %v3158
        %v3189 = vadd.f32 %v618, %v3160
        %v3190 = vadd.f32 %v619, %v3163
        %v3191 = vadd.f32 %v620, %v3165
        %v3192 = vadd.f32 %v621, %v3168
        %v3193 = vadd.f32 %v622, %v3170
        %v3194 = vadd.f32 %v623, %v3173
        %v3195 = vadd.f32 %v624, %v3175
        %v3196 = vadd.f32 %v625, %v3178
        %v3197 = vadd.f32 %v626, %v3180
        %v3198 = vpack.c.bf16 %v3182, %v3182
        %v3199 = vpack.c.bf16 %v3183, %v3183
        %v3200 = vpack.c.bf16 %v3184, %v3184
        %v3201 = vpack.c.bf16 %v3185, %v3185
        %v3202 = vpack.c.bf16 %v3186, %v3186
        %v3203 = vpack.c.bf16 %v3187, %v3187
        %v3204 = vpack.c.bf16 %v3188, %v3188
        %v3205 = vpack.c.bf16 %v3189, %v3189
        %v3206 = vpack.c.bf16 %v3190, %v3190
        %v3207 = vpack.c.bf16 %v3191, %v3191
        %v3208 = vpack.c.bf16 %v3192, %v3192
        %v3209 = vpack.c.bf16 %v3193, %v3193
        %v3210 = vpack.c.bf16 %v3194, %v3194
        %v3211 = vpack.c.bf16 %v3195, %v3195
        %v3212 = vpack.c.bf16 %v3196, %v3196
        %v3213 = vpack.c.bf16 %v3197, %v3197
        %3214 = vst [vmem:[%s589] sm:$0xf] %v3198
        %3215 = vst [vmem:[%s589 + $0x4] sm:$0xf] %v3199
        %3216 = vst [vmem:[%s589 + $0x8] sm:$0xf] %v3200
        %3217 = vst [vmem:[%s589 + $0xc] sm:$0xf] %v3201
        %3218 = vst [vmem:[%s589 + $0x10] sm:$0xf] %v3202
        %3219 = vst [vmem:[%s589 + $0x14] sm:$0xf] %v3203
        %3220 = vst [vmem:[%s589 + $0x18] sm:$0xf] %v3204
        %3221 = vst [vmem:[%s589 + $0x1c] sm:$0xf] %v3205
        %3222 = vst [vmem:[%s589 + $0x20] sm:$0xf] %v3206
        %3223 = vst [vmem:[%s589 + $0x24] sm:$0xf] %v3207
        %3224 = vst [vmem:[%s589 + $0x28] sm:$0xf] %v3208
        %3225 = vst [vmem:[%s589 + $0x2c] sm:$0xf] %v3209
        %3226 = vst [vmem:[%s589 + $0x30] sm:$0xf] %v3210
        %3227 = vst [vmem:[%s589 + $0x34] sm:$0xf] %v3211
        %3228 = vst [vmem:[%s589 + $0x38] sm:$0xf] %v3212
        %3229 = vst [vmem:[%s589 + $0x3c] sm:$0xf] %v3213
        %s3230 = sand.u32 %s298, 1
        %s3231 = scalar_lea.sflag [#allocation5], %s3230
        %s3232 = sand.u32 %s298, 1
        %s3233 = smul.addr %s3232, 64
        %s3234 = scalar_lea.vmem [#allocation15], %s3233
        // Predicated region
        $region89: #{tpu_custom_call.1} parent=59 // pred_check
          %p3235 = pneg %p308
        $region90: #{tpu_custom_call.1} parent=59 // pred_check_branch
          %3237 = sbr.rel (%p3235) target = $region92
        $region91: #{tpu_custom_call.1} parent=59 // pred_region
          %s3238 = smul.u32 16, %s39
          %3240 = vsyncadd %s3231, 0
          %s3241 = smul.addr %s38, 32
          %s3242 = sadd.s32 %s3238, %s3241
          %s3243 = smul.addr %s3242, 4
          %s3244 = scalar_lea.hbm %s10, %s3243
          %s3245 = sshll.u32 %s3234, 4
          %s3246 = int_to_ptr.vmem [resolvable:$true] %s3245
          %s3247 = sshll.u32 %s3244, 4
          %s3248 = int_to_ptr.hbm [resolvable:$true] %s3247
          %3253 = dma.vmem_to_hbm [thread:$0]  %s3246, 1024, %s3248, %s3231, 64, 64, 4
        $region92: #{tpu_custom_call.1} parent=59 // pred_fallthru
          _
      $region60: #{tpu_custom_call.1} parent=5 // pred_fallthru
        _
      %p3254 = scmp.le.s32.totalorder 2, %s29
      // Predicated region
      $region93: #{tpu_custom_call.1} parent=5 // pred_check
        %p3255 = pneg %p3254
      $region94: #{tpu_custom_call.1} parent=5 // pred_check_branch
        %3257 = sbr.rel (%p3255) target = $region96
      $region95: #{tpu_custom_call.1} parent=5 // pred_region
        %s3258 = ssub.s32 %s29, 2
        // Predicated region
        $region97: #{tpu_custom_call.1} parent=95 // pred_check
          %p3259 = pneg %p314
        $region98: #{tpu_custom_call.1} parent=95 // pred_check_branch
          %3261 = sbr.rel (%p3259) target = $region100
        $region99: #{tpu_custom_call.1} parent=95 // pred_region
          %s3262 = sand.u32 %s299, 1
          %s3263 = scalar_lea.sflag [#allocation5], %s3262
          %s3264 = sand.u32 %s299, 1
          %s3265 = smul.addr %s3264, 64
          %s3266 = scalar_lea.vmem [#allocation15], %s3265
          %3268 = dma.done %s3263, 1024
        $region100: #{tpu_custom_call.1} parent=95 // pred_fallthru
          _
      $region96: #{tpu_custom_call.1} parent=5 // pred_fallthru
        _
    $region6: #{tpu_custom_call.1} parent=1 // loop_footer
      %s33 = sadd.s32 1, %s29
    $region7: #{tpu_custom_call.1} parent=1 // loop_footer_branch
      %28 = sbr.rel target = $region3
    $region8: #{tpu_custom_call.1} parent=1 // loop_exit
      _
    %3269 = vsyncpa [#allocation4], 1
    %s3270 = scalar_lea.sflag [#allocation4], 1
    %3271 = vsyncpa %s3270, 1
    %3272 = vsyncpa [#allocation7], 1
    %s3273 = scalar_lea.sflag [#allocation7], 1
    %3274 = vsyncpa %s3273, 1
    %3275 = vsyncpa [#allocation10], 1
    %s3276 = scalar_lea.sflag [#allocation10], 1
    %3277 = vsyncpa %s3276, 1
    %3278 = vsyncpa [#allocation13], 1
    %3279 = vsyncpa [#allocation5], 1
    %s3280 = scalar_lea.sflag [#allocation5], 1
    %3281 = vsyncpa %s3280, 1

</llo_original>
